<compile_context>
chip_gen: v6e
topology: v6e:2x2x1
jax: 0.10.0
libtpu: 0.0.40
codegen_flags: <defaults>
</compile_context>

<pallas_src>
import functools

import jax
import jax.numpy as jnp
from jax.experimental import pallas as pl
from jax.experimental.pallas import tpu as pltpu


# ----------------------------------------------------------------------------
# Fused forward kernel (one grid step = one CMC branch: enc -> head -> jigsaw)
# ----------------------------------------------------------------------------
def _cmc_fused_kernel(flat_ref, enc_w_ref, enc_b_ref,
                      head_w_ref, head_b_ref,
                      fc1_w_ref, fc1_b_ref,
                      fc2_w_ref, fc2_b_ref,
                      perm_ref,
                      feat_ref, feat_jig_ref,
                      *, n_main, k):
    f32 = jnp.float32
    bf16 = jnp.bfloat16

    # --- encoder stand-in: ReLU(flat @ W_enc + b), all (B + B*k) rows at once.
    h = jnp.dot(flat_ref[...], enc_w_ref[...], preferred_element_type=f32)
    h = jnp.maximum(h + enc_b_ref[...], 0.0)          # f32 epilogue (v5e-safe)
    hb = h.astype(bf16)                                # bf16 for the MXU

    # --- projection head: Linear + row-wise L2 normalize (main rows only).
    ha = jnp.dot(hb, head_w_ref[...], preferred_element_type=f32) + head_b_ref[...]
    hm = ha[:n_main, :]
    feat_ref[...] = (hm * jax.lax.rsqrt(
        jnp.sum(hm * hm, axis=-1, keepdims=True))).astype(feat_ref.dtype)

    # --- jigsaw fc1 on all rows (the one-hot perm below selects the jig rows).
    y = jnp.dot(hb, fc1_w_ref[...], preferred_element_type=f32) + fc1_b_ref[...]
    yb = y.astype(bf16)

    # --- shuffle-gather + (n_img, k*feat_dim) reshape + fc2, fused as
    #       out = sum_j (P_j @ y) @ W_j + b
    #     P_j (n_img, R) one-hot row selectors, W_j = fc2_w[j*D:(j+1)*D, :].
    acc = jnp.zeros(feat_jig_ref.shape, f32)
    for j in range(k):                                  # k = 9, fully unrolled
        sel = jnp.dot(perm_ref[j], yb, preferred_element_type=f32).astype(bf16)
        acc = acc + jnp.dot(sel, fc2_w_ref[j], preferred_element_type=f32)
    acc = acc + fc2_b_ref[...]
    feat_jig_ref[...] = (acc * jax.lax.rsqrt(
        jnp.sum(acc * acc, axis=-1, keepdims=True))).astype(feat_jig_ref.dtype)


# ----------------------------------------------------------------------------
# Parameter construction (deterministic, PyTorch-default-like uniform init)
# ----------------------------------------------------------------------------
def _uniform(key, shape, fan_in):
    bound = 1.0 / jnp.sqrt(jnp.float32(fan_in))
    return jax.random.uniform(key, shape, jnp.float32, -bound, bound)


def init_params(key, h, w, dim_in=1024, feat_dim=128, k=9):
    ks = jax.random.split(key, 16)
    p = {}
    # stand-in encoders: encoder1 sees 1 channel, encoder2 sees 2 channels
    p["enc1_w"] = _uniform(ks[0], (1 * h * w, dim_in), 1 * h * w)
    p["enc1_b"] = _uniform(ks[1], (dim_in,), 1 * h * w)
    p["enc2_w"] = _uniform(ks[2], (2 * h * w, dim_in), 2 * h * w)
    p["enc2_b"] = _uniform(ks[3], (dim_in,), 2 * h * w)
    # linear heads (Linear(dim_in, feat_dim) + Normalize(2))
    p["head1_w"] = _uniform(ks[4], (dim_in, feat_dim), dim_in)
    p["head1_b"] = _uniform(ks[5], (feat_dim,), dim_in)
    p["head2_w"] = _uniform(ks[6], (dim_in, feat_dim), dim_in)
    p["head2_b"] = _uniform(ks[7], (feat_dim,), dim_in)
    # jigsaw heads: fc1 = Linear(dim_in, feat_dim); fc2 = Linear(feat_dim*k, feat_dim)
    p["h1j_fc1_w"] = _uniform(ks[8], (dim_in, feat_dim), dim_in)
    p["h1j_fc1_b"] = _uniform(ks[9], (feat_dim,), dim_in)
    p["h1j_fc2_w"] = _uniform(ks[10], (feat_dim * k, feat_dim), feat_dim * k)
    p["h1j_fc2_b"] = _uniform(ks[11], (feat_dim,), feat_dim * k)
    p["h2j_fc1_w"] = _uniform(ks[12], (dim_in, feat_dim), dim_in)
    p["h2j_fc1_b"] = _uniform(ks[13], (feat_dim,), dim_in)
    p["h2j_fc2_w"] = _uniform(ks[14], (feat_dim * k, feat_dim), feat_dim * k)
    p["h2j_fc2_b"] = _uniform(ks[15], (feat_dim,), feat_dim * k)
    return p


def make_shuffle_ids(key, bsz, k):
    """Deterministic stand-in for JigsawHead.get_shuffle_ids (torch.randperm)."""
    n_img = bsz // k
    keys = jax.random.split(key, n_img)
    perms = jnp.concatenate([jax.random.permutation(kk, k) for kk in keys])
    base = (jnp.arange(bsz) // k) * k
    return perms + base


# ----------------------------------------------------------------------------
# Forward pass (mode=0):  returns (feat, feat_jig) from a single pallas_call
# ----------------------------------------------------------------------------
def cmc_multiheads_forward(params, x, x_jig, shuffle_key, k=9):
    B = x.shape[0]
    Bj = x_jig.shape[0]
    n_img = Bj // k
    R = B + Bj
    dim_in = params["enc2_w"].shape[1]
    feat_dim = params["head1_w"].shape[1]
    bf16 = jnp.bfloat16

    # torch.split(x, [1, 2], dim=1) channel groups, flattened row-major like
    # torch; x and x_jig rows are stacked so each encoder is a single matmul.
    def _flat(a, lo, hi):
        return a[:, lo:hi].reshape(a.shape[0], -1)

    flat1 = jnp.concatenate([_flat(x, 0, 1), _flat(x_jig, 0, 1)], axis=0)   # (R, HW)
    flat2 = jnp.concatenate([_flat(x, 1, 3), _flat(x_jig, 1, 3)], axis=0)   # (R, 2HW)
    C1, C2 = flat1.shape[1], flat2.shape[1]

    # zero-pad branch-1 K (1*H*W -> 2*H*W) so both branches share block shapes
    flat1p = jnp.pad(flat1, ((0, 0), (0, C2 - C1)))
    enc1_wp = jnp.pad(params["enc1_w"], ((0, C2 - C1), (0, 0)))

    # stack per-branch operands along a leading 2-wide "parallel" grid axis
    flat_b = jnp.stack([flat1p, flat2], axis=0).astype(bf16)                # (2, R, C2)
    enc_w = jnp.stack([enc1_wp, params["enc2_w"]], 0).astype(bf16)          # (2, C2, dim_in)
    enc_b = jnp.stack([params["enc1_b"], params["enc2_b"]], 0).reshape(2, 1, dim_in)
    head_w = jnp.stack([params["head1_w"], params["head2_w"]], 0).astype(bf16)
    head_b = jnp.stack([params["head1_b"], params["head2_b"]], 0).reshape(2, 1, feat_dim)
    fc1_w = jnp.stack([params["h1j_fc1_w"], params["h2j_fc1_w"]], 0).astype(bf16)
    fc1_b = jnp.stack([params["h1j_fc1_b"], params["h2j_fc1_b"]], 0).reshape(2, 1, feat_dim)
    fc2_w = jnp.stack([params["h1j_fc2_w"].reshape(k, feat_dim, feat_dim),
                       params["h2j_fc2_w"].reshape(k, feat_dim, feat_dim)],
                      0).astype(bf16)                                       # (2, k, D, D)
    fc2_b = jnp.stack([params["h1j_fc2_b"], params["h2j_fc2_b"]], 0).reshape(2, 1, feat_dim)

    # jigsaw shuffle ids -> one-hot row-selector matrices (host-side, tiny);
    # indices are offset by B because fc1 runs on the combined [x; x_jig] rows.
    k1, k2 = jax.random.split(shuffle_key)
    ids1 = make_shuffle_ids(k1, Bj, k)
    ids2 = make_shuffle_ids(k2, Bj, k)

    def _perm(ids):
        oh = jax.nn.one_hot(ids.reshape(n_img, k) + B, R, dtype=bf16)       # (n_img, k, R)
        return jnp.transpose(oh, (1, 0, 2))                                 # (k, n_img, R)

    perm = jnp.stack([_perm(ids1), _perm(ids2)], axis=0)                    # (2, k, n_img, R)

    inputs = (flat_b, enc_w, enc_b, head_w, head_b,
              fc1_w, fc1_b, fc2_w, fc2_b, perm)

    # advisory cost estimate so XLA overlaps the host-side prep with the call
    per_branch_flops = (2 * R * C2 * dim_in
                        + 2 * 2 * R * dim_in * feat_dim
                        + k * (2 * n_img * R * feat_dim
                               + 2 * n_img * feat_dim * feat_dim))
    out_bytes = 4 * (B * 2 * feat_dim + n_img * 2 * feat_dim)
    cost = pl.CostEstimate(
        flops=2 * per_branch_flops,
        transcendentals=2 * (B + n_img),
        bytes_accessed=sum(int(a.size) * a.dtype.itemsize for a in inputs) + out_bytes)

    kernel = functools.partial(_cmc_fused_kernel, n_main=B, k=k)
    feat, feat_jig = pl.pallas_call(
        kernel,
        out_shape=(jax.ShapeDtypeStruct((B, 2 * feat_dim), jnp.float32),
                   jax.ShapeDtypeStruct((n_img, 2 * feat_dim), jnp.float32)),
        grid=(2,),
        in_specs=[
            pl.BlockSpec((None, R, C2), lambda b: (b, 0, 0)),
            pl.BlockSpec((None, C2, dim_in), lambda b: (b, 0, 0)),
            pl.BlockSpec((None, 1, dim_in), lambda b: (b, 0, 0)),
            pl.BlockSpec((None, dim_in, feat_dim), lambda b: (b, 0, 0)),
            pl.BlockSpec((None, 1, feat_dim), lambda b: (b, 0, 0)),
            pl.BlockSpec((None, dim_in, feat_dim), lambda b: (b, 0, 0)),
            pl.BlockSpec((None, 1, feat_dim), lambda b: (b, 0, 0)),
            pl.BlockSpec((None, k, feat_dim, feat_dim), lambda b: (b, 0, 0, 0)),
            pl.BlockSpec((None, 1, feat_dim), lambda b: (b, 0, 0)),
            pl.BlockSpec((None, k, n_img, R), lambda b: (b, 0, 0, 0)),
        ],
        out_specs=(
            pl.BlockSpec((B, feat_dim), lambda b: (0, b)),       # branch -> column half
            pl.BlockSpec((n_img, feat_dim), lambda b: (0, b)),
        ),
        compiler_params=pltpu.CompilerParams(
            dimension_semantics=("parallel",)),                  # both TCs on v7x
        cost_estimate=cost,
    )(*inputs)
    return feat, feat_jig


# ----------------------------------------------------------------------------
if __name__ == "__main__":
    B, H, W = 2, 16, 16          # x: NCHW with 3 channels (split into 1 + 2)
    K_JIG = 9                    # JigsawHead default k
    DIM_IN = int(2048 * 0.5)     # 'resnet50' -> width 0.5 -> 1024
    FEAT_DIM = 128

    root = jax.random.PRNGKey(0)
    k_param, k_x, k_xjig, k_shuf = jax.random.split(root, 4)

    params = init_params(k_param, H, W, dim_in=DIM_IN, feat_dim=FEAT_DIM, k=K_JIG)
    x = jax.random.normal(k_x, (B, 3, H, W), jnp.float32)
    x_jig = jax.random.normal(k_xjig, (B * K_JIG, 3, H, W), jnp.float32)

    fwd = jax.jit(functools.partial(cmc_multiheads_forward, k=K_JIG))
    feat, feat_jig = fwd(params, x, x_jig, k_shuf)
    jax.block_until_ready((feat, feat_jig))

    assert feat.shape == (B, 2 * FEAT_DIM)
    assert feat_jig.shape == (B, 2 * FEAT_DIM)
    # rows are L2-normalized per half
    assert jnp.allclose(jnp.linalg.norm(feat[:, :FEAT_DIM], axis=1), 1.0, atol=1e-4)
    assert jnp.allclose(jnp.linalg.norm(feat_jig[:, FEAT_DIM:], axis=1), 1.0, atol=1e-4)

    print("KERNEL_OK")
</pallas_src>

<mosaic_0001>
module attributes {stable_mosaic.version = 11 : i64} {
  func.func @_cmc_fused_kernel(%arg0: i32, %arg1: memref<1x20x512xbf16, #tpu.memory_space<vmem>>, %arg2: memref<1x512x1024xbf16, #tpu.memory_space<vmem>>, %arg3: memref<1x1x1024xf32, #tpu.memory_space<vmem>>, %arg4: memref<1x1024x128xbf16, #tpu.memory_space<vmem>>, %arg5: memref<1x1x128xf32, #tpu.memory_space<vmem>>, %arg6: memref<1x1024x128xbf16, #tpu.memory_space<vmem>>, %arg7: memref<1x1x128xf32, #tpu.memory_space<vmem>>, %arg8: memref<1x9x128x128xbf16, #tpu.memory_space<vmem>>, %arg9: memref<1x1x128xf32, #tpu.memory_space<vmem>>, %arg10: memref<1x9x2x20xbf16, #tpu.memory_space<vmem>>, %arg11: memref<2x128xf32, #tpu.memory_space<vmem>>, %arg12: memref<2x128xf32, #tpu.memory_space<vmem>>) attributes {dimension_semantics = [#tpu.dimension_semantics<parallel>], iteration_bounds = array<i64: 2>, scalar_prefetch = 0 : i64, scratch_operands = 0 : i64, tpu.core_type = #tpu.core_type<tc>, window_params = [{transform_indices = @transform_0, window_bounds = array<i64: 1, 20, 512>}, {transform_indices = @transform_1, window_bounds = array<i64: 1, 512, 1024>}, {transform_indices = @transform_2, window_bounds = array<i64: 1, 1, 1024>}, {transform_indices = @transform_3, window_bounds = array<i64: 1, 1024, 128>}, {transform_indices = @transform_4, window_bounds = array<i64: 1, 1, 128>}, {transform_indices = @transform_5, window_bounds = array<i64: 1, 1024, 128>}, {transform_indices = @transform_6, window_bounds = array<i64: 1, 1, 128>}, {transform_indices = @transform_7, window_bounds = array<i64: 1, 9, 128, 128>}, {transform_indices = @transform_8, window_bounds = array<i64: 1, 1, 128>}, {transform_indices = @transform_9, window_bounds = array<i64: 1, 9, 2, 20>}, {transform_indices = @transform_10, window_bounds = array<i64: 2, 128>}, {transform_indices = @transform_11, window_bounds = array<i64: 2, 128>}]} {
    %c0 = arith.constant 0 : index
    %c0_0 = arith.constant 0 : index
    %c0_1 = arith.constant 0 : index
    %0 = vector.load %arg1[%c0, %c0_0, %c0_1] : memref<1x20x512xbf16, #tpu.memory_space<vmem>>, vector<1x20x512xbf16>
    %1 = vector.shape_cast %0 : vector<1x20x512xbf16> to vector<20x512xbf16>
    %c0_2 = arith.constant 0 : index
    %c0_3 = arith.constant 0 : index
    %c0_4 = arith.constant 0 : index
    %2 = vector.load %arg2[%c0_2, %c0_3, %c0_4] : memref<1x512x1024xbf16, #tpu.memory_space<vmem>>, vector<1x512x1024xbf16>
    %3 = vector.shape_cast %2 : vector<1x512x1024xbf16> to vector<512x1024xbf16>
    %cst = arith.constant dense<0.000000e+00> : vector<20x1024xf32>
    %4 = tpu.matmul %1, %3, %cst {dimension_numbers = #tpu.dot_dimension_numbers<[1], [0], [0], [1], [0, 0, 1, 1], [], []>} : vector<20x512xbf16>, vector<512x1024xbf16>, vector<20x1024xf32> -> vector<20x1024xf32>
    %c0_5 = arith.constant 0 : index
    %c0_6 = arith.constant 0 : index
    %c0_7 = arith.constant 0 : index
    %5 = vector.load %arg3[%c0_5, %c0_6, %c0_7] : memref<1x1x1024xf32, #tpu.memory_space<vmem>>, vector<1x1x1024xf32>
    %6 = vector.shape_cast %5 : vector<1x1x1024xf32> to vector<1x1024xf32>
    %7 = vector.broadcast %6 : vector<1x1024xf32> to vector<20x1024xf32>
    %8 = arith.addf %4, %7 : vector<20x1024xf32>
    %cst_8 = arith.constant 0.000000e+00 : f32
    %9 = vector.broadcast %cst_8 : f32 to vector<20x1024xf32>
    %10 = arith.maximumf %8, %9 : vector<20x1024xf32>
    %11 = arith.truncf %10 : vector<20x1024xf32> to vector<20x1024xbf16>
    %c0_9 = arith.constant 0 : index
    %c0_10 = arith.constant 0 : index
    %c0_11 = arith.constant 0 : index
    %12 = vector.load %arg4[%c0_9, %c0_10, %c0_11] : memref<1x1024x128xbf16, #tpu.memory_space<vmem>>, vector<1x1024x128xbf16>
    %13 = vector.shape_cast %12 : vector<1x1024x128xbf16> to vector<1024x128xbf16>
    %cst_12 = arith.constant dense<0.000000e+00> : vector<20x128xf32>
    %14 = tpu.matmul %11, %13, %cst_12 {dimension_numbers = #tpu.dot_dimension_numbers<[1], [0], [0], [1], [0, 0, 1, 1], [], []>} : vector<20x1024xbf16>, vector<1024x128xbf16>, vector<20x128xf32> -> vector<20x128xf32>
    %c0_13 = arith.constant 0 : index
    %c0_14 = arith.constant 0 : index
    %c0_15 = arith.constant 0 : index
    %15 = vector.load %arg5[%c0_13, %c0_14, %c0_15] : memref<1x1x128xf32, #tpu.memory_space<vmem>>, vector<1x1x128xf32>
    %16 = vector.shape_cast %15 : vector<1x1x128xf32> to vector<1x128xf32>
    %17 = vector.broadcast %16 : vector<1x128xf32> to vector<20x128xf32>
    %18 = arith.addf %14, %17 : vector<20x128xf32>
    %19 = vector.extract_strided_slice %18 {offsets = [0, 0], sizes = [2, 128], strides = [1, 1]} : vector<20x128xf32> to vector<2x128xf32>
    %20 = arith.mulf %19, %19 : vector<2x128xf32>
    %cst_16 = arith.constant dense<0.000000e+00> : vector<2xf32>
    %21 = vector.multi_reduction <add>, %20, %cst_16 [1] : vector<2x128xf32> to vector<2xf32>
    %22 = vector.shape_cast %21 : vector<2xf32> to vector<2x1xf32>
    %23 = math.rsqrt %22 : vector<2x1xf32>
    %24 = vector.broadcast %23 : vector<2x1xf32> to vector<2x128xf32>
    %25 = arith.mulf %19, %24 : vector<2x128xf32>
    %c0_17 = arith.constant 0 : index
    %c0_18 = arith.constant 0 : index
    %26 = vector.load %arg11[%c0_17, %c0_18] : memref<2x128xf32, #tpu.memory_space<vmem>>, vector<2x128xf32>
    tpu.vector_store %arg11[%c0_17, %c0_18], %25 {strides = array<i32>} : memref<2x128xf32, #tpu.memory_space<vmem>>, vector<2x128xf32>,
    %c0_19 = arith.constant 0 : index
    %c0_20 = arith.constant 0 : index
    %c0_21 = arith.constant 0 : index
    %27 = vector.load %arg6[%c0_19, %c0_20, %c0_21] : memref<1x1024x128xbf16, #tpu.memory_space<vmem>>, vector<1x1024x128xbf16>
    %28 = vector.shape_cast %27 : vector<1x1024x128xbf16> to vector<1024x128xbf16>
    %cst_22 = arith.constant dense<0.000000e+00> : vector<20x128xf32>
    %29 = tpu.matmul %11, %28, %cst_22 {dimension_numbers = #tpu.dot_dimension_numbers<[1], [0], [0], [1], [0, 0, 1, 1], [], []>} : vector<20x1024xbf16>, vector<1024x128xbf16>, vector<20x128xf32> -> vector<20x128xf32>
    %c0_23 = arith.constant 0 : index
    %c0_24 = arith.constant 0 : index
    %c0_25 = arith.constant 0 : index
    %30 = vector.load %arg7[%c0_23, %c0_24, %c0_25] : memref<1x1x128xf32, #tpu.memory_space<vmem>>, vector<1x1x128xf32>
    %31 = vector.shape_cast %30 : vector<1x1x128xf32> to vector<1x128xf32>
    %32 = vector.broadcast %31 : vector<1x128xf32> to vector<20x128xf32>
    %33 = arith.addf %29, %32 : vector<20x128xf32>
    %34 = arith.truncf %33 : vector<20x128xf32> to vector<20x128xbf16>
    %cst_26 = arith.constant 0.000000e+00 : f32
    %35 = vector.broadcast %cst_26 : f32 to vector<2x128xf32>
    %c0_27 = arith.constant 0 : index
    %c0_28 = arith.constant 0 : index
    %c0_29 = arith.constant 0 : index
    %c0_30 = arith.constant 0 : index
    %36 = vector.load %arg10[%c0_27, %c0_28, %c0_29, %c0_30] : memref<1x9x2x20xbf16, #tpu.memory_space<vmem>>, vector<1x1x2x20xbf16>
    %37 = vector.shape_cast %36 : vector<1x1x2x20xbf16> to vector<2x20xbf16>
    %cst_31 = arith.constant dense<0.000000e+00> : vector<2x128xf32>
    %38 = tpu.matmul %37, %34, %cst_31 {dimension_numbers = #tpu.dot_dimension_numbers<[1], [0], [0], [1], [0, 0, 1, 1], [], []>} : vector<2x20xbf16>, vector<20x128xbf16>, vector<2x128xf32> -> vector<2x128xf32>
    %39 = arith.truncf %38 : vector<2x128xf32> to vector<2x128xbf16>
    %c0_32 = arith.constant 0 : index
    %c0_33 = arith.constant 0 : index
    %c0_34 = arith.constant 0 : index
    %c0_35 = arith.constant 0 : index
    %40 = vector.load %arg8[%c0_32, %c0_33, %c0_34, %c0_35] : memref<1x9x128x128xbf16, #tpu.memory_space<vmem>>, vector<1x1x128x128xbf16>
    %41 = vector.shape_cast %40 : vector<1x1x128x128xbf16> to vector<128x128xbf16>
    %cst_36 = arith.constant dense<0.000000e+00> : vector<2x128xf32>
    %42 = tpu.matmul %39, %41, %cst_36 {dimension_numbers = #tpu.dot_dimension_numbers<[1], [0], [0], [1], [0, 0, 1, 1], [], []>} : vector<2x128xbf16>, vector<128x128xbf16>, vector<2x128xf32> -> vector<2x128xf32>
    %43 = arith.addf %35, %42 : vector<2x128xf32>
    %c0_37 = arith.constant 0 : index
    %c1 = arith.constant 1 : index
    %c0_38 = arith.constant 0 : index
    %c0_39 = arith.constant 0 : index
    %44 = vector.load %arg10[%c0_37, %c1, %c0_38, %c0_39] : memref<1x9x2x20xbf16, #tpu.memory_space<vmem>>, vector<1x1x2x20xbf16>
    %45 = vector.shape_cast %44 : vector<1x1x2x20xbf16> to vector<2x20xbf16>
    %cst_40 = arith.constant dense<0.000000e+00> : vector<2x128xf32>
    %46 = tpu.matmul %45, %34, %cst_40 {dimension_numbers = #tpu.dot_dimension_numbers<[1], [0], [0], [1], [0, 0, 1, 1], [], []>} : vector<2x20xbf16>, vector<20x128xbf16>, vector<2x128xf32> -> vector<2x128xf32>
    %47 = arith.truncf %46 : vector<2x128xf32> to vector<2x128xbf16>
    %c0_41 = arith.constant 0 : index
    %c1_42 = arith.constant 1 : index
    %c0_43 = arith.constant 0 : index
    %c0_44 = arith.constant 0 : index
    %48 = vector.load %arg8[%c0_41, %c1_42, %c0_43, %c0_44] : memref<1x9x128x128xbf16, #tpu.memory_space<vmem>>, vector<1x1x128x128xbf16>
    %49 = vector.shape_cast %48 : vector<1x1x128x128xbf16> to vector<128x128xbf16>
    %cst_45 = arith.constant dense<0.000000e+00> : vector<2x128xf32>
    %50 = tpu.matmul %47, %49, %cst_45 {dimension_numbers = #tpu.dot_dimension_numbers<[1], [0], [0], [1], [0, 0, 1, 1], [], []>} : vector<2x128xbf16>, vector<128x128xbf16>, vector<2x128xf32> -> vector<2x128xf32>
    %51 = arith.addf %43, %50 : vector<2x128xf32>
    %c0_46 = arith.constant 0 : index
    %c2 = arith.constant 2 : index
    %c0_47 = arith.constant 0 : index
    %c0_48 = arith.constant 0 : index
    %52 = vector.load %arg10[%c0_46, %c2, %c0_47, %c0_48] : memref<1x9x2x20xbf16, #tpu.memory_space<vmem>>, vector<1x1x2x20xbf16>
    %53 = vector.shape_cast %52 : vector<1x1x2x20xbf16> to vector<2x20xbf16>
    %cst_49 = arith.constant dense<0.000000e+00> : vector<2x128xf32>
    %54 = tpu.matmul %53, %34, %cst_49 {dimension_numbers = #tpu.dot_dimension_numbers<[1], [0], [0], [1], [0, 0, 1, 1], [], []>} : vector<2x20xbf16>, vector<20x128xbf16>, vector<2x128xf32> -> vector<2x128xf32>
    %55 = arith.truncf %54 : vector<2x128xf32> to vector<2x128xbf16>
    %c0_50 = arith.constant 0 : index
    %c2_51 = arith.constant 2 : index
    %c0_52 = arith.constant 0 : index
    %c0_53 = arith.constant 0 : index
    %56 = vector.load %arg8[%c0_50, %c2_51, %c0_52, %c0_53] : memref<1x9x128x128xbf16, #tpu.memory_space<vmem>>, vector<1x1x128x128xbf16>
    %57 = vector.shape_cast %56 : vector<1x1x128x128xbf16> to vector<128x128xbf16>
    %cst_54 = arith.constant dense<0.000000e+00> : vector<2x128xf32>
    %58 = tpu.matmul %55, %57, %cst_54 {dimension_numbers = #tpu.dot_dimension_numbers<[1], [0], [0], [1], [0, 0, 1, 1], [], []>} : vector<2x128xbf16>, vector<128x128xbf16>, vector<2x128xf32> -> vector<2x128xf32>
    %59 = arith.addf %51, %58 : vector<2x128xf32>
    %c0_55 = arith.constant 0 : index
    %c3 = arith.constant 3 : index
    %c0_56 = arith.constant 0 : index
    %c0_57 = arith.constant 0 : index
    %60 = vector.load %arg10[%c0_55, %c3, %c0_56, %c0_57] : memref<1x9x2x20xbf16, #tpu.memory_space<vmem>>, vector<1x1x2x20xbf16>
    %61 = vector.shape_cast %60 : vector<1x1x2x20xbf16> to vector<2x20xbf16>
    %cst_58 = arith.constant dense<0.000000e+00> : vector<2x128xf32>
    %62 = tpu.matmul %61, %34, %cst_58 {dimension_numbers = #tpu.dot_dimension_numbers<[1], [0], [0], [1], [0, 0, 1, 1], [], []>} : vector<2x20xbf16>, vector<20x128xbf16>, vector<2x128xf32> -> vector<2x128xf32>
    %63 = arith.truncf %62 : vector<2x128xf32> to vector<2x128xbf16>
    %c0_59 = arith.constant 0 : index
    %c3_60 = arith.constant 3 : index
    %c0_61 = arith.constant 0 : index
    %c0_62 = arith.constant 0 : index
    %64 = vector.load %arg8[%c0_59, %c3_60, %c0_61, %c0_62] : memref<1x9x128x128xbf16, #tpu.memory_space<vmem>>, vector<1x1x128x128xbf16>
    %65 = vector.shape_cast %64 : vector<1x1x128x128xbf16> to vector<128x128xbf16>
    %cst_63 = arith.constant dense<0.000000e+00> : vector<2x128xf32>
    %66 = tpu.matmul %63, %65, %cst_63 {dimension_numbers = #tpu.dot_dimension_numbers<[1], [0], [0], [1], [0, 0, 1, 1], [], []>} : vector<2x128xbf16>, vector<128x128xbf16>, vector<2x128xf32> -> vector<2x128xf32>
    %67 = arith.addf %59, %66 : vector<2x128xf32>
    %c0_64 = arith.constant 0 : index
    %c4 = arith.constant 4 : index
    %c0_65 = arith.constant 0 : index
    %c0_66 = arith.constant 0 : index
    %68 = vector.load %arg10[%c0_64, %c4, %c0_65, %c0_66] : memref<1x9x2x20xbf16, #tpu.memory_space<vmem>>, vector<1x1x2x20xbf16>
    %69 = vector.shape_cast %68 : vector<1x1x2x20xbf16> to vector<2x20xbf16>
    %cst_67 = arith.constant dense<0.000000e+00> : vector<2x128xf32>
    %70 = tpu.matmul %69, %34, %cst_67 {dimension_numbers = #tpu.dot_dimension_numbers<[1], [0], [0], [1], [0, 0, 1, 1], [], []>} : vector<2x20xbf16>, vector<20x128xbf16>, vector<2x128xf32> -> vector<2x128xf32>
    %71 = arith.truncf %70 : vector<2x128xf32> to vector<2x128xbf16>
    %c0_68 = arith.constant 0 : index
    %c4_69 = arith.constant 4 : index
    %c0_70 = arith.constant 0 : index
    %c0_71 = arith.constant 0 : index
    %72 = vector.load %arg8[%c0_68, %c4_69, %c0_70, %c0_71] : memref<1x9x128x128xbf16, #tpu.memory_space<vmem>>, vector<1x1x128x128xbf16>
    %73 = vector.shape_cast %72 : vector<1x1x128x128xbf16> to vector<128x128xbf16>
    %cst_72 = arith.constant dense<0.000000e+00> : vector<2x128xf32>
    %74 = tpu.matmul %71, %73, %cst_72 {dimension_numbers = #tpu.dot_dimension_numbers<[1], [0], [0], [1], [0, 0, 1, 1], [], []>} : vector<2x128xbf16>, vector<128x128xbf16>, vector<2x128xf32> -> vector<2x128xf32>
    %75 = arith.addf %67, %74 : vector<2x128xf32>
    %c0_73 = arith.constant 0 : index
    %c5 = arith.constant 5 : index
    %c0_74 = arith.constant 0 : index
    %c0_75 = arith.constant 0 : index
    %76 = vector.load %arg10[%c0_73, %c5, %c0_74, %c0_75] : memref<1x9x2x20xbf16, #tpu.memory_space<vmem>>, vector<1x1x2x20xbf16>
    %77 = vector.shape_cast %76 : vector<1x1x2x20xbf16> to vector<2x20xbf16>
    %cst_76 = arith.constant dense<0.000000e+00> : vector<2x128xf32>
    %78 = tpu.matmul %77, %34, %cst_76 {dimension_numbers = #tpu.dot_dimension_numbers<[1], [0], [0], [1], [0, 0, 1, 1], [], []>} : vector<2x20xbf16>, vector<20x128xbf16>, vector<2x128xf32> -> vector<2x128xf32>
    %79 = arith.truncf %78 : vector<2x128xf32> to vector<2x128xbf16>
    %c0_77 = arith.constant 0 : index
    %c5_78 = arith.constant 5 : index
    %c0_79 = arith.constant 0 : index
    %c0_80 = arith.constant 0 : index
    %80 = vector.load %arg8[%c0_77, %c5_78, %c0_79, %c0_80] : memref<1x9x128x128xbf16, #tpu.memory_space<vmem>>, vector<1x1x128x128xbf16>
    %81 = vector.shape_cast %80 : vector<1x1x128x128xbf16> to vector<128x128xbf16>
    %cst_81 = arith.constant dense<0.000000e+00> : vector<2x128xf32>
    %82 = tpu.matmul %79, %81, %cst_81 {dimension_numbers = #tpu.dot_dimension_numbers<[1], [0], [0], [1], [0, 0, 1, 1], [], []>} : vector<2x128xbf16>, vector<128x128xbf16>, vector<2x128xf32> -> vector<2x128xf32>
    %83 = arith.addf %75, %82 : vector<2x128xf32>
    %c0_82 = arith.constant 0 : index
    %c6 = arith.constant 6 : index
    %c0_83 = arith.constant 0 : index
    %c0_84 = arith.constant 0 : index
    %84 = vector.load %arg10[%c0_82, %c6, %c0_83, %c0_84] : memref<1x9x2x20xbf16, #tpu.memory_space<vmem>>, vector<1x1x2x20xbf16>
    %85 = vector.shape_cast %84 : vector<1x1x2x20xbf16> to vector<2x20xbf16>
    %cst_85 = arith.constant dense<0.000000e+00> : vector<2x128xf32>
    %86 = tpu.matmul %85, %34, %cst_85 {dimension_numbers = #tpu.dot_dimension_numbers<[1], [0], [0], [1], [0, 0, 1, 1], [], []>} : vector<2x20xbf16>, vector<20x128xbf16>, vector<2x128xf32> -> vector<2x128xf32>
    %87 = arith.truncf %86 : vector<2x128xf32> to vector<2x128xbf16>
    %c0_86 = arith.constant 0 : index
    %c6_87 = arith.constant 6 : index
    %c0_88 = arith.constant 0 : index
    %c0_89 = arith.constant 0 : index
    %88 = vector.load %arg8[%c0_86, %c6_87, %c0_88, %c0_89] : memref<1x9x128x128xbf16, #tpu.memory_space<vmem>>, vector<1x1x128x128xbf16>
    %89 = vector.shape_cast %88 : vector<1x1x128x128xbf16> to vector<128x128xbf16>
    %cst_90 = arith.constant dense<0.000000e+00> : vector<2x128xf32>
    %90 = tpu.matmul %87, %89, %cst_90 {dimension_numbers = #tpu.dot_dimension_numbers<[1], [0], [0], [1], [0, 0, 1, 1], [], []>} : vector<2x128xbf16>, vector<128x128xbf16>, vector<2x128xf32> -> vector<2x128xf32>
    %91 = arith.addf %83, %90 : vector<2x128xf32>
    %c0_91 = arith.constant 0 : index
    %c7 = arith.constant 7 : index
    %c0_92 = arith.constant 0 : index
    %c0_93 = arith.constant 0 : index
    %92 = vector.load %arg10[%c0_91, %c7, %c0_92, %c0_93] : memref<1x9x2x20xbf16, #tpu.memory_space<vmem>>, vector<1x1x2x20xbf16>
    %93 = vector.shape_cast %92 : vector<1x1x2x20xbf16> to vector<2x20xbf16>
    %cst_94 = arith.constant dense<0.000000e+00> : vector<2x128xf32>
    %94 = tpu.matmul %93, %34, %cst_94 {dimension_numbers = #tpu.dot_dimension_numbers<[1], [0], [0], [1], [0, 0, 1, 1], [], []>} : vector<2x20xbf16>, vector<20x128xbf16>, vector<2x128xf32> -> vector<2x128xf32>
    %95 = arith.truncf %94 : vector<2x128xf32> to vector<2x128xbf16>
    %c0_95 = arith.constant 0 : index
    %c7_96 = arith.constant 7 : index
    %c0_97 = arith.constant 0 : index
    %c0_98 = arith.constant 0 : index
    %96 = vector.load %arg8[%c0_95, %c7_96, %c0_97, %c0_98] : memref<1x9x128x128xbf16, #tpu.memory_space<vmem>>, vector<1x1x128x128xbf16>
    %97 = vector.shape_cast %96 : vector<1x1x128x128xbf16> to vector<128x128xbf16>
    %cst_99 = arith.constant dense<0.000000e+00> : vector<2x128xf32>
    %98 = tpu.matmul %95, %97, %cst_99 {dimension_numbers = #tpu.dot_dimension_numbers<[1], [0], [0], [1], [0, 0, 1, 1], [], []>} : vector<2x128xbf16>, vector<128x128xbf16>, vector<2x128xf32> -> vector<2x128xf32>
    %99 = arith.addf %91, %98 : vector<2x128xf32>
    %c0_100 = arith.constant 0 : index
    %c8 = arith.constant 8 : index
    %c0_101 = arith.constant 0 : index
    %c0_102 = arith.constant 0 : index
    %100 = vector.load %arg10[%c0_100, %c8, %c0_101, %c0_102] : memref<1x9x2x20xbf16, #tpu.memory_space<vmem>>, vector<1x1x2x20xbf16>
    %101 = vector.shape_cast %100 : vector<1x1x2x20xbf16> to vector<2x20xbf16>
    %cst_103 = arith.constant dense<0.000000e+00> : vector<2x128xf32>
    %102 = tpu.matmul %101, %34, %cst_103 {dimension_numbers = #tpu.dot_dimension_numbers<[1], [0], [0], [1], [0, 0, 1, 1], [], []>} : vector<2x20xbf16>, vector<20x128xbf16>, vector<2x128xf32> -> vector<2x128xf32>
    %103 = arith.truncf %102 : vector<2x128xf32> to vector<2x128xbf16>
    %c0_104 = arith.constant 0 : index
    %c8_105 = arith.constant 8 : index
    %c0_106 = arith.constant 0 : index
    %c0_107 = arith.constant 0 : index
    %104 = vector.load %arg8[%c0_104, %c8_105, %c0_106, %c0_107] : memref<1x9x128x128xbf16, #tpu.memory_space<vmem>>, vector<1x1x128x128xbf16>
    %105 = vector.shape_cast %104 : vector<1x1x128x128xbf16> to vector<128x128xbf16>
    %cst_108 = arith.constant dense<0.000000e+00> : vector<2x128xf32>
    %106 = tpu.matmul %103, %105, %cst_108 {dimension_numbers = #tpu.dot_dimension_numbers<[1], [0], [0], [1], [0, 0, 1, 1], [], []>} : vector<2x128xbf16>, vector<128x128xbf16>, vector<2x128xf32> -> vector<2x128xf32>
    %107 = arith.addf %99, %106 : vector<2x128xf32>
    %c0_109 = arith.constant 0 : index
    %c0_110 = arith.constant 0 : index
    %c0_111 = arith.constant 0 : index
    %108 = vector.load %arg9[%c0_109, %c0_110, %c0_111] : memref<1x1x128xf32, #tpu.memory_space<vmem>>, vector<1x1x128xf32>
    %109 = vector.shape_cast %108 : vector<1x1x128xf32> to vector<1x128xf32>
    %110 = vector.broadcast %109 : vector<1x128xf32> to vector<2x128xf32>
    %111 = arith.addf %107, %110 : vector<2x128xf32>
    %112 = arith.mulf %111, %111 : vector<2x128xf32>
    %cst_112 = arith.constant dense<0.000000e+00> : vector<2xf32>
    %113 = vector.multi_reduction <add>, %112, %cst_112 [1] : vector<2x128xf32> to vector<2xf32>
    %114 = vector.shape_cast %113 : vector<2xf32> to vector<2x1xf32>
    %115 = math.rsqrt %114 : vector<2x1xf32>
    %116 = vector.broadcast %115 : vector<2x1xf32> to vector<2x128xf32>
    %117 = arith.mulf %111, %116 : vector<2x128xf32>
    %c0_113 = arith.constant 0 : index
    %c0_114 = arith.constant 0 : index
    %118 = vector.load %arg12[%c0_113, %c0_114] : memref<2x128xf32, #tpu.memory_space<vmem>>, vector<2x128xf32>
    tpu.vector_store %arg12[%c0_113, %c0_114], %117 {strides = array<i32>} : memref<2x128xf32, #tpu.memory_space<vmem>>, vector<2x128xf32>,
    return
  }
  func.func @transform_0(%arg0: i32) -> (i32, i32, i32) {
    %c0_i32 = arith.constant 0 : i32
    %c0_i32_0 = arith.constant 0 : i32
    %c0_i32_1 = arith.constant 0 : i32
    return %arg0, %c0_i32, %c0_i32_0 : i32, i32, i32
  }
  func.func @transform_1(%arg0: i32) -> (i32, i32, i32) {
    %c0_i32 = arith.constant 0 : i32
    %c0_i32_0 = arith.constant 0 : i32
    %c0_i32_1 = arith.constant 0 : i32
    return %arg0, %c0_i32, %c0_i32_0 : i32, i32, i32
  }
  func.func @transform_2(%arg0: i32) -> (i32, i32, i32) {
    %c0_i32 = arith.constant 0 : i32
    %c0_i32_0 = arith.constant 0 : i32
    %c0_i32_1 = arith.constant 0 : i32
    return %arg0, %c0_i32, %c0_i32_0 : i32, i32, i32
  }
  func.func @transform_3(%arg0: i32) -> (i32, i32, i32) {
    %c0_i32 = arith.constant 0 : i32
    %c0_i32_0 = arith.constant 0 : i32
    %c0_i32_1 = arith.constant 0 : i32
    return %arg0, %c0_i32, %c0_i32_0 : i32, i32, i32
  }
  func.func @transform_4(%arg0: i32) -> (i32, i32, i32) {
    %c0_i32 = arith.constant 0 : i32
    %c0_i32_0 = arith.constant 0 : i32
    %c0_i32_1 = arith.constant 0 : i32
    return %arg0, %c0_i32, %c0_i32_0 : i32, i32, i32
  }
  func.func @transform_5(%arg0: i32) -> (i32, i32, i32) {
    %c0_i32 = arith.constant 0 : i32
    %c0_i32_0 = arith.constant 0 : i32
    %c0_i32_1 = arith.constant 0 : i32
    return %arg0, %c0_i32, %c0_i32_0 : i32, i32, i32
  }
  func.func @transform_6(%arg0: i32) -> (i32, i32, i32) {
    %c0_i32 = arith.constant 0 : i32
    %c0_i32_0 = arith.constant 0 : i32
    %c0_i32_1 = arith.constant 0 : i32
    return %arg0, %c0_i32, %c0_i32_0 : i32, i32, i32
  }
  func.func @transform_7(%arg0: i32) -> (i32, i32, i32, i32) {
    %c0_i32 = arith.constant 0 : i32
    %c0_i32_0 = arith.constant 0 : i32
    %c0_i32_1 = arith.constant 0 : i32
    %c0_i32_2 = arith.constant 0 : i32
    return %arg0, %c0_i32, %c0_i32_0, %c0_i32_1 : i32, i32, i32, i32
  }
  func.func @transform_8(%arg0: i32) -> (i32, i32, i32) {
    %c0_i32 = arith.constant 0 : i32
    %c0_i32_0 = arith.constant 0 : i32
    %c0_i32_1 = arith.constant 0 : i32
    return %arg0, %c0_i32, %c0_i32_0 : i32, i32, i32
  }
  func.func @transform_9(%arg0: i32) -> (i32, i32, i32, i32) {
    %c0_i32 = arith.constant 0 : i32
    %c0_i32_0 = arith.constant 0 : i32
    %c0_i32_1 = arith.constant 0 : i32
    %c0_i32_2 = arith.constant 0 : i32
    return %arg0, %c0_i32, %c0_i32_0, %c0_i32_1 : i32, i32, i32, i32
  }
  func.func @transform_10(%arg0: i32) -> (i32, i32) {
    %c0_i32 = arith.constant 0 : i32
    %c0_i32_0 = arith.constant 0 : i32
    return %c0_i32, %arg0 : i32, i32
  }
  func.func @transform_11(%arg0: i32) -> (i32, i32) {
    %c0_i32 = arith.constant 0 : i32
    %c0_i32_0 = arith.constant 0 : i32
    return %c0_i32, %arg0 : i32, i32
  }
}

</mosaic_0001>

<llo_original>
// kernel: cmc_multiheads_forward.1
$region0: #{cmc_multiheads_forward.1}
  #allocation0 [shape = 'u32[]', space=smem, size = 0x4, offset = 0x4, fixed_abs, tag = 'smem constant byte address 0x4 - core index']
  #allocation1 [shape = 'u32[144,128]{1,0:T(1,128)}', space=vmem, size = 0x12000, scoped, tag = 'internal scratch']
  %s0 = inlined_call_operand.vmem [shape: bf16[2,20,512], index: 0, kind: input, shape index: {}]
  %s1 = inlined_call_operand.vmem [shape: bf16[2,512,1024], index: 1, kind: input, shape index: {}]
  %s2 = inlined_call_operand.vmem [shape: f32[2,1,1024], index: 2, kind: input, shape index: {}]
  %s3 = inlined_call_operand.vmem [shape: bf16[2,1024,128], index: 3, kind: input, shape index: {}]
  %s4 = inlined_call_operand.vmem [shape: f32[2,1,128], index: 4, kind: input, shape index: {}]
  %s5 = inlined_call_operand.vmem [shape: bf16[2,1024,128], index: 5, kind: input, shape index: {}]
  %s6 = inlined_call_operand.vmem [shape: f32[2,1,128], index: 6, kind: input, shape index: {}]
  %s7 = inlined_call_operand.vmem [shape: bf16[2,9,128,128], index: 7, kind: input, shape index: {}]
  %s8 = inlined_call_operand.vmem [shape: f32[2,1,128], index: 8, kind: input, shape index: {}]
  %s9 = inlined_call_operand.vmem [shape: bf16[2,9,2,20], index: 9, kind: input, shape index: {}]
  %s10 = inlined_call_operand.hbm [shape: f32[2,256], index: 10, kind: output, shape index: {0}]
  %s11 = inlined_call_operand.hbm [shape: f32[2,256], index: 11, kind: output, shape index: {1}]
  %12 = xla_tuple %s10, %s11
  %s13 = sld [smem:[#allocation0]]
  $region81: #{cmc_multiheads_forward.1} parent=0
    _
  %s15 = ssub.s32 1, %s13
  %s16 = scalar_select 0, %s15, %s13
  $region1: #{cmc_multiheads_forward.1} parent=0
    #allocation2 [shape = 'u8[2048]{0}', space=vmem, size = 0x800, scoped, tag = 'output window, operand 0']
    #allocation3 [shape = 's32[2]{0}', space=sflag, size = 0x8, scoped, tag = 'scoped memory for cmc_multiheads_forward.1']
    #allocation4 [shape = 'u8[2048]{0}', space=vmem, size = 0x800, scoped, tag = 'output window, operand 1']
    #allocation5 [shape = 's32[2]{0}', space=sflag, size = 0x8, scoped, tag = 'scoped memory for cmc_multiheads_forward.1']
    %17 = vsyncpa [#allocation3], 0
    %s18 = scalar_lea.sflag [#allocation3], 1
    %19 = vsyncpa %s18, 0
    %20 = vsyncpa [#allocation5], 0
    %s21 = scalar_lea.sflag [#allocation5], 1
    %22 = vsyncpa %s21, 0
    loop: start=0, step=1, limit=4
    $region2: #{cmc_multiheads_forward.1} parent=1 // loop_pre_header
      _
    $region3: #{cmc_multiheads_forward.1} parent=1 // loop_header
      %s24 = sphi 0, %s28
      %p25 = scmp.ge.s32.totalorder %s24, 4
      %s34 = sphi 0, %s36
      %s37 = sphi 0, %s34
      %s38 = sphi 0, %s37
      %s54 = sphi 0, %s38
      %s60 = sphi 0, %s62
      %s63 = sphi 0, %s60
      %s64 = sphi 0, %s63
      %s80 = sphi 0, %s64
      %s86 = sphi 0, %s88
      %s89 = sphi 0, %s86
      %s90 = sphi 0, %s89
      %s106 = sphi 0, %s90
      %s112 = sphi 0, %s114
      %s115 = sphi 0, %s112
      %s116 = sphi 0, %s115
      %s132 = sphi 0, %s116
      %s138 = sphi 0, %s140
      %s141 = sphi 0, %s138
      %s142 = sphi 0, %s141
      %s158 = sphi 0, %s142
      %s164 = sphi 0, %s166
      %s167 = sphi 0, %s164
      %s168 = sphi 0, %s167
      %s184 = sphi 0, %s168
      %s190 = sphi 0, %s192
      %s193 = sphi 0, %s190
      %s194 = sphi 0, %s193
      %s210 = sphi 0, %s194
      %s216 = sphi 0, %s218
      %s219 = sphi 0, %s216
      %s220 = sphi 0, %s219
      %s236 = sphi 0, %s220
      %s242 = sphi 0, %s244
      %s245 = sphi 0, %s242
      %s246 = sphi 0, %s245
      %s262 = sphi 0, %s246
      %s268 = sphi 0, %s270
      %s271 = sphi 0, %s268
      %s272 = sphi 0, %s271
      %s288 = sphi 0, %s272
      %s294 = sphi 0, %s296
      %s297 = sphi 0, %s294
      %s298 = sphi 0, %s297
      %s314 = sphi 0, %s298
      %s320 = sphi 0, %s322
      %s323 = sphi 0, %s320
      %s324 = sphi 0, %s323
      %s340 = sphi 0, %s324
    $region4: #{cmc_multiheads_forward.1} parent=1 // loop_header_branch
      %27 = sbr.rel (%p25) target = $region8
    $region5: #{cmc_multiheads_forward.1} parent=1 // loop_body
      %s29 = ssub.s32 %s24, 1
      %s30 = ssub.s32 %s24, 2
      %s31 = sadd.s32 %s24, 1
      %s32 = ssub.s32 %s24, %s31
      %p33 = scmp.eq.s32.totalorder %s32, 0
      %s35 = sadd.s32 %s34, 1
      %s36 = scalar_select %p33, %s34, %s35
      %p39 = pneg %p33
      %p40 = scmp.eq.s32.totalorder %s24, 1
      %p41 = por %p39, %p40
      %p42 = scmp.ne.s32.totalorder %s34, %s37
      %p43 = scmp.eq.s32.totalorder %s24, 0
      %p44 = por %p42, %p43
      %p45 = scmp.ne.s32.totalorder %s34, %s37
      %p46 = scmp.eq.s32.totalorder %s29, 1
      %p47 = por %p45, %p46
      %p48 = scmp.ne.s32.totalorder %s37, %s38
      %p49 = scmp.eq.s32.totalorder %s29, 0
      %p50 = por %p48, %p49
      %p51 = scmp.ne.s32.totalorder %s37, %s38
      %p52 = scmp.eq.s32.totalorder %s30, 1
      %p53 = por %p51, %p52
      %p55 = scmp.ne.s32.totalorder %s38, %s54
      %p56 = scmp.eq.s32.totalorder %s30, 0
      %p57 = por %p55, %p56
      %s58 = ssub.s32 %s24, %s31
      %p59 = scmp.eq.s32.totalorder %s58, 0
      %s61 = sadd.s32 %s60, 1
      %s62 = scalar_select %p59, %s60, %s61
      %p65 = pneg %p59
      %p66 = scmp.eq.s32.totalorder %s24, 1
      %p67 = por %p65, %p66
      %p68 = scmp.ne.s32.totalorder %s60, %s63
      %p69 = scmp.eq.s32.totalorder %s24, 0
      %p70 = por %p68, %p69
      %p71 = scmp.ne.s32.totalorder %s60, %s63
      %p72 = scmp.eq.s32.totalorder %s29, 1
      %p73 = por %p71, %p72
      %p74 = scmp.ne.s32.totalorder %s63, %s64
      %p75 = scmp.eq.s32.totalorder %s29, 0
      %p76 = por %p74, %p75
      %p77 = scmp.ne.s32.totalorder %s63, %s64
      %p78 = scmp.eq.s32.totalorder %s30, 1
      %p79 = por %p77, %p78
      %p81 = scmp.ne.s32.totalorder %s64, %s80
      %p82 = scmp.eq.s32.totalorder %s30, 0
      %p83 = por %p81, %p82
      %s84 = ssub.s32 %s24, %s31
      %p85 = scmp.eq.s32.totalorder %s84, 0
      %s87 = sadd.s32 %s86, 1
      %s88 = scalar_select %p85, %s86, %s87
      %p91 = pneg %p85
      %p92 = scmp.eq.s32.totalorder %s24, 1
      %p93 = por %p91, %p92
      %p94 = scmp.ne.s32.totalorder %s86, %s89
      %p95 = scmp.eq.s32.totalorder %s24, 0
      %p96 = por %p94, %p95
      %p97 = scmp.ne.s32.totalorder %s86, %s89
      %p98 = scmp.eq.s32.totalorder %s29, 1
      %p99 = por %p97, %p98
      %p100 = scmp.ne.s32.totalorder %s89, %s90
      %p101 = scmp.eq.s32.totalorder %s29, 0
      %p102 = por %p100, %p101
      %p103 = scmp.ne.s32.totalorder %s89, %s90
      %p104 = scmp.eq.s32.totalorder %s30, 1
      %p105 = por %p103, %p104
      %p107 = scmp.ne.s32.totalorder %s90, %s106
      %p108 = scmp.eq.s32.totalorder %s30, 0
      %p109 = por %p107, %p108
      %s110 = ssub.s32 %s24, %s31
      %p111 = scmp.eq.s32.totalorder %s110, 0
      %s113 = sadd.s32 %s112, 1
      %s114 = scalar_select %p111, %s112, %s113
      %p117 = pneg %p111
      %p118 = scmp.eq.s32.totalorder %s24, 1
      %p119 = por %p117, %p118
      %p120 = scmp.ne.s32.totalorder %s112, %s115
      %p121 = scmp.eq.s32.totalorder %s24, 0
      %p122 = por %p120, %p121
      %p123 = scmp.ne.s32.totalorder %s112, %s115
      %p124 = scmp.eq.s32.totalorder %s29, 1
      %p125 = por %p123, %p124
      %p126 = scmp.ne.s32.totalorder %s115, %s116
      %p127 = scmp.eq.s32.totalorder %s29, 0
      %p128 = por %p126, %p127
      %p129 = scmp.ne.s32.totalorder %s115, %s116
      %p130 = scmp.eq.s32.totalorder %s30, 1
      %p131 = por %p129, %p130
      %p133 = scmp.ne.s32.totalorder %s116, %s132
      %p134 = scmp.eq.s32.totalorder %s30, 0
      %p135 = por %p133, %p134
      %s136 = ssub.s32 %s24, %s31
      %p137 = scmp.eq.s32.totalorder %s136, 0
      %s139 = sadd.s32 %s138, 1
      %s140 = scalar_select %p137, %s138, %s139
      %p143 = pneg %p137
      %p144 = scmp.eq.s32.totalorder %s24, 1
      %p145 = por %p143, %p144
      %p146 = scmp.ne.s32.totalorder %s138, %s141
      %p147 = scmp.eq.s32.totalorder %s24, 0
      %p148 = por %p146, %p147
      %p149 = scmp.ne.s32.totalorder %s138, %s141
      %p150 = scmp.eq.s32.totalorder %s29, 1
      %p151 = por %p149, %p150
      %p152 = scmp.ne.s32.totalorder %s141, %s142
      %p153 = scmp.eq.s32.totalorder %s29, 0
      %p154 = por %p152, %p153
      %p155 = scmp.ne.s32.totalorder %s141, %s142
      %p156 = scmp.eq.s32.totalorder %s30, 1
      %p157 = por %p155, %p156
      %p159 = scmp.ne.s32.totalorder %s142, %s158
      %p160 = scmp.eq.s32.totalorder %s30, 0
      %p161 = por %p159, %p160
      %s162 = ssub.s32 %s24, %s31
      %p163 = scmp.eq.s32.totalorder %s162, 0
      %s165 = sadd.s32 %s164, 1
      %s166 = scalar_select %p163, %s164, %s165
      %p169 = pneg %p163
      %p170 = scmp.eq.s32.totalorder %s24, 1
      %p171 = por %p169, %p170
      %p172 = scmp.ne.s32.totalorder %s164, %s167
      %p173 = scmp.eq.s32.totalorder %s24, 0
      %p174 = por %p172, %p173
      %p175 = scmp.ne.s32.totalorder %s164, %s167
      %p176 = scmp.eq.s32.totalorder %s29, 1
      %p177 = por %p175, %p176
      %p178 = scmp.ne.s32.totalorder %s167, %s168
      %p179 = scmp.eq.s32.totalorder %s29, 0
      %p180 = por %p178, %p179
      %p181 = scmp.ne.s32.totalorder %s167, %s168
      %p182 = scmp.eq.s32.totalorder %s30, 1
      %p183 = por %p181, %p182
      %p185 = scmp.ne.s32.totalorder %s168, %s184
      %p186 = scmp.eq.s32.totalorder %s30, 0
      %p187 = por %p185, %p186
      %s188 = ssub.s32 %s24, %s31
      %p189 = scmp.eq.s32.totalorder %s188, 0
      %s191 = sadd.s32 %s190, 1
      %s192 = scalar_select %p189, %s190, %s191
      %p195 = pneg %p189
      %p196 = scmp.eq.s32.totalorder %s24, 1
      %p197 = por %p195, %p196
      %p198 = scmp.ne.s32.totalorder %s190, %s193
      %p199 = scmp.eq.s32.totalorder %s24, 0
      %p200 = por %p198, %p199
      %p201 = scmp.ne.s32.totalorder %s190, %s193
      %p202 = scmp.eq.s32.totalorder %s29, 1
      %p203 = por %p201, %p202
      %p204 = scmp.ne.s32.totalorder %s193, %s194
      %p205 = scmp.eq.s32.totalorder %s29, 0
      %p206 = por %p204, %p205
      %p207 = scmp.ne.s32.totalorder %s193, %s194
      %p208 = scmp.eq.s32.totalorder %s30, 1
      %p209 = por %p207, %p208
      %p211 = scmp.ne.s32.totalorder %s194, %s210
      %p212 = scmp.eq.s32.totalorder %s30, 0
      %p213 = por %p211, %p212
      %s214 = ssub.s32 %s24, %s31
      %p215 = scmp.eq.s32.totalorder %s214, 0
      %s217 = sadd.s32 %s216, 1
      %s218 = scalar_select %p215, %s216, %s217
      %p221 = pneg %p215
      %p222 = scmp.eq.s32.totalorder %s24, 1
      %p223 = por %p221, %p222
      %p224 = scmp.ne.s32.totalorder %s216, %s219
      %p225 = scmp.eq.s32.totalorder %s24, 0
      %p226 = por %p224, %p225
      %p227 = scmp.ne.s32.totalorder %s216, %s219
      %p228 = scmp.eq.s32.totalorder %s29, 1
      %p229 = por %p227, %p228
      %p230 = scmp.ne.s32.totalorder %s219, %s220
      %p231 = scmp.eq.s32.totalorder %s29, 0
      %p232 = por %p230, %p231
      %p233 = scmp.ne.s32.totalorder %s219, %s220
      %p234 = scmp.eq.s32.totalorder %s30, 1
      %p235 = por %p233, %p234
      %p237 = scmp.ne.s32.totalorder %s220, %s236
      %p238 = scmp.eq.s32.totalorder %s30, 0
      %p239 = por %p237, %p238
      %s240 = ssub.s32 %s24, %s31
      %p241 = scmp.eq.s32.totalorder %s240, 0
      %s243 = sadd.s32 %s242, 1
      %s244 = scalar_select %p241, %s242, %s243
      %p247 = pneg %p241
      %p248 = scmp.eq.s32.totalorder %s24, 1
      %p249 = por %p247, %p248
      %p250 = scmp.ne.s32.totalorder %s242, %s245
      %p251 = scmp.eq.s32.totalorder %s24, 0
      %p252 = por %p250, %p251
      %p253 = scmp.ne.s32.totalorder %s242, %s245
      %p254 = scmp.eq.s32.totalorder %s29, 1
      %p255 = por %p253, %p254
      %p256 = scmp.ne.s32.totalorder %s245, %s246
      %p257 = scmp.eq.s32.totalorder %s29, 0
      %p258 = por %p256, %p257
      %p259 = scmp.ne.s32.totalorder %s245, %s246
      %p260 = scmp.eq.s32.totalorder %s30, 1
      %p261 = por %p259, %p260
      %p263 = scmp.ne.s32.totalorder %s246, %s262
      %p264 = scmp.eq.s32.totalorder %s30, 0
      %p265 = por %p263, %p264
      %s266 = ssub.s32 %s24, %s31
      %p267 = scmp.eq.s32.totalorder %s266, 0
      %s269 = sadd.s32 %s268, 1
      %s270 = scalar_select %p267, %s268, %s269
      %p273 = pneg %p267
      %p274 = scmp.eq.s32.totalorder %s24, 1
      %p275 = por %p273, %p274
      %p276 = scmp.ne.s32.totalorder %s268, %s271
      %p277 = scmp.eq.s32.totalorder %s24, 0
      %p278 = por %p276, %p277
      %p279 = scmp.ne.s32.totalorder %s268, %s271
      %p280 = scmp.eq.s32.totalorder %s29, 1
      %p281 = por %p279, %p280
      %p282 = scmp.ne.s32.totalorder %s271, %s272
      %p283 = scmp.eq.s32.totalorder %s29, 0
      %p284 = por %p282, %p283
      %p285 = scmp.ne.s32.totalorder %s271, %s272
      %p286 = scmp.eq.s32.totalorder %s30, 1
      %p287 = por %p285, %p286
      %p289 = scmp.ne.s32.totalorder %s272, %s288
      %p290 = scmp.eq.s32.totalorder %s30, 0
      %p291 = por %p289, %p290
      %s292 = ssub.s32 %s24, %s31
      %p293 = scmp.eq.s32.totalorder %s292, 0
      %s295 = sadd.s32 %s294, 1
      %s296 = scalar_select %p293, %s294, %s295
      %p299 = pneg %p293
      %p300 = scmp.eq.s32.totalorder %s24, 1
      %p301 = por %p299, %p300
      %p302 = scmp.ne.s32.totalorder %s294, %s297
      %p303 = scmp.eq.s32.totalorder %s24, 0
      %p304 = por %p302, %p303
      %p305 = scmp.ne.s32.totalorder %s294, %s297
      %p306 = scmp.eq.s32.totalorder %s29, 1
      %p307 = por %p305, %p306
      %p308 = scmp.ne.s32.totalorder %s297, %s298
      %p309 = scmp.eq.s32.totalorder %s29, 0
      %p310 = por %p308, %p309
      %p311 = scmp.ne.s32.totalorder %s297, %s298
      %p312 = scmp.eq.s32.totalorder %s30, 1
      %p313 = por %p311, %p312
      %p315 = scmp.ne.s32.totalorder %s298, %s314
      %p316 = scmp.eq.s32.totalorder %s30, 0
      %p317 = por %p315, %p316
      %s318 = ssub.s32 %s24, %s31
      %p319 = scmp.eq.s32.totalorder %s318, 0
      %s321 = sadd.s32 %s320, 1
      %s322 = scalar_select %p319, %s320, %s321
      %p325 = pneg %p319
      %p326 = scmp.eq.s32.totalorder %s24, 1
      %p327 = por %p325, %p326
      %p328 = scmp.ne.s32.totalorder %s320, %s323
      %p329 = scmp.eq.s32.totalorder %s24, 0
      %p330 = por %p328, %p329
      %p331 = scmp.ne.s32.totalorder %s320, %s323
      %p332 = scmp.eq.s32.totalorder %s29, 1
      %p333 = por %p331, %p332
      %p334 = scmp.ne.s32.totalorder %s323, %s324
      %p335 = scmp.eq.s32.totalorder %s29, 0
      %p336 = por %p334, %p335
      %p337 = scmp.ne.s32.totalorder %s323, %s324
      %p338 = scmp.eq.s32.totalorder %s30, 1
      %p339 = por %p337, %p338
      %p341 = scmp.ne.s32.totalorder %s324, %s340
      %p342 = scmp.eq.s32.totalorder %s30, 0
      %p343 = por %p341, %p342
      %p344 = scmp.le.s32.totalorder 1, %s24
      %p345 = scmp.lt.s32.totalorder %s24, 3
      %p346 = pnand %p344, %p345
      %p347 = pneg %p346
      // Predicated region
      $region9: #{cmc_multiheads_forward.1} parent=5 // pred_check
        _
      $region10: #{cmc_multiheads_forward.1} parent=5 // pred_check_branch
        %349 = sbr.rel (%p346) target = $region12
      $region11: #{cmc_multiheads_forward.1} parent=5 // pred_region
        %s350 = ssub.s32 %s24, 1
      $region12: #{cmc_multiheads_forward.1} parent=5 // pred_fallthru
        _
      %p351 = scmp.lt.s32.totalorder %s24, 2
      // Predicated region
      $region13: #{cmc_multiheads_forward.1} parent=5 // pred_check
        %p352 = pneg %p351
      $region14: #{cmc_multiheads_forward.1} parent=5 // pred_check_branch
        %354 = sbr.rel (%p352) target = $region16
      $region15: #{cmc_multiheads_forward.1} parent=5 // pred_region
        // Predicated region
        $region17: #{cmc_multiheads_forward.1} parent=15 // pred_check
          %p355 = pneg %p44
        $region18: #{cmc_multiheads_forward.1} parent=15 // pred_check_branch
          %357 = sbr.rel (%p355) target = $region20
        $region19: #{cmc_multiheads_forward.1} parent=15 // pred_region
          %p358 = scmp.lt.s32.totalorder %s24, 1
          %s359 = scalar_select %p358, %s24, 1
          %s360 = smul.addr %s359, 12
          %s361 = smul.addr %s360, 4
          %s362 = scalar_lea.vmem %s0, %s361
        $region20: #{cmc_multiheads_forward.1} parent=15 // pred_fallthru
          _
        // Predicated region
        $region21: #{cmc_multiheads_forward.1} parent=15 // pred_check
          %p363 = pneg %p70
        $region22: #{cmc_multiheads_forward.1} parent=15 // pred_check_branch
          %365 = sbr.rel (%p363) target = $region24
        $region23: #{cmc_multiheads_forward.1} parent=15 // pred_region
          %p366 = scmp.lt.s32.totalorder %s24, 1
          %s367 = scalar_select %p366, %s24, 1
          %s368 = smul.addr %s367, 512
          %s369 = smul.addr %s368, 4
          %s370 = scalar_lea.vmem %s1, %s369
        $region24: #{cmc_multiheads_forward.1} parent=15 // pred_fallthru
          _
        // Predicated region
        $region25: #{cmc_multiheads_forward.1} parent=15 // pred_check
          %p371 = pneg %p96
        $region26: #{cmc_multiheads_forward.1} parent=15 // pred_check_branch
          %373 = sbr.rel (%p371) target = $region28
        $region27: #{cmc_multiheads_forward.1} parent=15 // pred_region
          %p374 = scmp.lt.s32.totalorder %s24, 1
          %s375 = scalar_select %p374, %s24, 1
          %s376 = smul.addr %s375, 8
          %s377 = scalar_lea.vmem %s2, %s376
        $region28: #{cmc_multiheads_forward.1} parent=15 // pred_fallthru
          _
        // Predicated region
        $region29: #{cmc_multiheads_forward.1} parent=15 // pred_check
          %p378 = pneg %p122
        $region30: #{cmc_multiheads_forward.1} parent=15 // pred_check_branch
          %380 = sbr.rel (%p378) target = $region32
        $region31: #{cmc_multiheads_forward.1} parent=15 // pred_region
          %p381 = scmp.lt.s32.totalorder %s24, 1
          %s382 = scalar_select %p381, %s24, 1
          %s383 = smul.addr %s382, 128
          %s384 = smul.addr %s383, 4
          %s385 = scalar_lea.vmem %s3, %s384
        $region32: #{cmc_multiheads_forward.1} parent=15 // pred_fallthru
          _
        // Predicated region
        $region33: #{cmc_multiheads_forward.1} parent=15 // pred_check
          %p386 = pneg %p148
        $region34: #{cmc_multiheads_forward.1} parent=15 // pred_check_branch
          %388 = sbr.rel (%p386) target = $region36
        $region35: #{cmc_multiheads_forward.1} parent=15 // pred_region
          %p389 = scmp.lt.s32.totalorder %s24, 1
          %s390 = scalar_select %p389, %s24, 1
          %s391 = scalar_lea.vmem %s4, %s390
        $region36: #{cmc_multiheads_forward.1} parent=15 // pred_fallthru
          _
        // Predicated region
        $region37: #{cmc_multiheads_forward.1} parent=15 // pred_check
          %p392 = pneg %p174
        $region38: #{cmc_multiheads_forward.1} parent=15 // pred_check_branch
          %394 = sbr.rel (%p392) target = $region40
        $region39: #{cmc_multiheads_forward.1} parent=15 // pred_region
          %p395 = scmp.lt.s32.totalorder %s24, 1
          %s396 = scalar_select %p395, %s24, 1
          %s397 = smul.addr %s396, 128
          %s398 = smul.addr %s397, 4
          %s399 = scalar_lea.vmem %s5, %s398
        $region40: #{cmc_multiheads_forward.1} parent=15 // pred_fallthru
          _
        // Predicated region
        $region41: #{cmc_multiheads_forward.1} parent=15 // pred_check
          %p400 = pneg %p200
        $region42: #{cmc_multiheads_forward.1} parent=15 // pred_check_branch
          %402 = sbr.rel (%p400) target = $region44
        $region43: #{cmc_multiheads_forward.1} parent=15 // pred_region
          %p403 = scmp.lt.s32.totalorder %s24, 1
          %s404 = scalar_select %p403, %s24, 1
          %s405 = scalar_lea.vmem %s6, %s404
        $region44: #{cmc_multiheads_forward.1} parent=15 // pred_fallthru
          _
        // Predicated region
        $region45: #{cmc_multiheads_forward.1} parent=15 // pred_check
          %p406 = pneg %p226
        $region46: #{cmc_multiheads_forward.1} parent=15 // pred_check_branch
          %408 = sbr.rel (%p406) target = $region48
        $region47: #{cmc_multiheads_forward.1} parent=15 // pred_region
          %p409 = scmp.lt.s32.totalorder %s24, 1
          %s410 = scalar_select %p409, %s24, 1
          %s411 = smul.addr %s410, 144
          %s412 = smul.addr %s411, 4
          %s413 = scalar_lea.vmem %s7, %s412
        $region48: #{cmc_multiheads_forward.1} parent=15 // pred_fallthru
          _
        // Predicated region
        $region49: #{cmc_multiheads_forward.1} parent=15 // pred_check
          %p414 = pneg %p252
        $region50: #{cmc_multiheads_forward.1} parent=15 // pred_check_branch
          %416 = sbr.rel (%p414) target = $region52
        $region51: #{cmc_multiheads_forward.1} parent=15 // pred_region
          %p417 = scmp.lt.s32.totalorder %s24, 1
          %s418 = scalar_select %p417, %s24, 1
          %s419 = scalar_lea.vmem %s8, %s418
        $region52: #{cmc_multiheads_forward.1} parent=15 // pred_fallthru
          _
        // Predicated region
        $region53: #{cmc_multiheads_forward.1} parent=15 // pred_check
          %p420 = pneg %p278
        $region54: #{cmc_multiheads_forward.1} parent=15 // pred_check_branch
          %422 = sbr.rel (%p420) target = $region56
        $region55: #{cmc_multiheads_forward.1} parent=15 // pred_region
          %p423 = scmp.lt.s32.totalorder %s24, 1
          %s424 = scalar_select %p423, %s24, 1
          %s425 = smul.addr %s424, 9
          %s426 = scalar_lea.vmem %s9, %s425
        $region56: #{cmc_multiheads_forward.1} parent=15 // pred_fallthru
          _
      $region16: #{cmc_multiheads_forward.1} parent=5 // pred_fallthru
        _
      %p427 = scmp.le.s32.totalorder 1, %s24
      %p428 = scmp.lt.s32.totalorder %s24, 3
      %p429 = pnand %p427, %p428
      %p430 = pneg %p429
      // Predicated region
      $region57: #{cmc_multiheads_forward.1} parent=5 // pred_check
        _
      $region58: #{cmc_multiheads_forward.1} parent=5 // pred_check_branch
        %432 = sbr.rel (%p429) target = $region60
      $region59: #{cmc_multiheads_forward.1} parent=5 // pred_region
        %s433 = ssub.s32 %s24, 1
        %p434 = scmp.lt.s32.totalorder %s29, 1
        %s435 = scalar_select %p434, %s29, 1
        %s436 = smul.addr %s435, 12
        %s437 = smul.addr %s436, 4
        %s438 = scalar_lea.vmem %s0, %s437
        %p439 = pneg %p50
        %p440 = pneg %p47
        %p441 = scmp.lt.s32.totalorder %s29, 1
        %s442 = scalar_select %p441, %s29, 1
        %s443 = smul.addr %s442, 512
        %s444 = smul.addr %s443, 4
        %s445 = scalar_lea.vmem %s1, %s444
        %p446 = pneg %p76
        %p447 = pneg %p73
        %p448 = scmp.lt.s32.totalorder %s29, 1
        %s449 = scalar_select %p448, %s29, 1
        %s450 = smul.addr %s449, 8
        %s451 = scalar_lea.vmem %s2, %s450
        %p452 = pneg %p102
        %p453 = pneg %p99
        %p454 = scmp.lt.s32.totalorder %s29, 1
        %s455 = scalar_select %p454, %s29, 1
        %s456 = smul.addr %s455, 128
        %s457 = smul.addr %s456, 4
        %s458 = scalar_lea.vmem %s3, %s457
        %p459 = pneg %p128
        %p460 = pneg %p125
        %p461 = scmp.lt.s32.totalorder %s29, 1
        %s462 = scalar_select %p461, %s29, 1
        %s463 = scalar_lea.vmem %s4, %s462
        %p464 = pneg %p154
        %p465 = pneg %p151
        %p466 = scmp.lt.s32.totalorder %s29, 1
        %s467 = scalar_select %p466, %s29, 1
        %s468 = smul.addr %s467, 128
        %s469 = smul.addr %s468, 4
        %s470 = scalar_lea.vmem %s5, %s469
        %p471 = pneg %p180
        %p472 = pneg %p177
        %p473 = scmp.lt.s32.totalorder %s29, 1
        %s474 = scalar_select %p473, %s29, 1
        %s475 = scalar_lea.vmem %s6, %s474
        %p476 = pneg %p206
        %p477 = pneg %p203
        %p478 = scmp.lt.s32.totalorder %s29, 1
        %s479 = scalar_select %p478, %s29, 1
        %s480 = smul.addr %s479, 144
        %s481 = smul.addr %s480, 4
        %s482 = scalar_lea.vmem %s7, %s481
        %p483 = pneg %p232
        %p484 = pneg %p229
        %p485 = scmp.lt.s32.totalorder %s29, 1
        %s486 = scalar_select %p485, %s29, 1
        %s487 = scalar_lea.vmem %s8, %s486
        %p488 = pneg %p258
        %p489 = pneg %p255
        %p490 = scmp.lt.s32.totalorder %s29, 1
        %s491 = scalar_select %p490, %s29, 1
        %s492 = smul.addr %s491, 9
        %s493 = scalar_lea.vmem %s9, %s492
        %p494 = pneg %p284
        %p495 = pneg %p281
        %p496 = pneg %p310
        %p497 = pneg %p307
        %s498 = sand.u32 %s297, 1
        %s499 = scalar_lea.sflag [#allocation3], %s498
        %s500 = sand.u32 %s297, 1
        %s501 = smul.addr %s500, 2
        %s502 = scalar_lea.vmem [#allocation2], %s501
        %p503 = pneg %p336
        %p504 = pneg %p333
        %s505 = sand.u32 %s323, 1
        %s506 = scalar_lea.sflag [#allocation5], %s505
        %s507 = sand.u32 %s323, 1
        %s508 = smul.addr %s507, 2
        %s509 = scalar_lea.vmem [#allocation4], %s508
        %p510 = scmp.lt.s32.totalorder %s29, 1
        %s511 = scalar_select %p510, %s29, 1
        %s512 = smul.addr %s511, 12
        %s513 = smul.addr %s512, 4
        %s514 = scalar_lea.vmem %s0, %s513
        %p515 = scmp.lt.s32.totalorder %s29, 1
        %s516 = scalar_select %p515, %s29, 1
        %s517 = smul.addr %s516, 512
        %s518 = smul.addr %s517, 4
        %s519 = scalar_lea.vmem %s1, %s518
        %p520 = scmp.lt.s32.totalorder %s29, 1
        %s521 = scalar_select %p520, %s29, 1
        %s522 = smul.addr %s521, 8
        %s523 = scalar_lea.vmem %s2, %s522
        %p524 = scmp.lt.s32.totalorder %s29, 1
        %s525 = scalar_select %p524, %s29, 1
        %s526 = smul.addr %s525, 128
        %s527 = smul.addr %s526, 4
        %s528 = scalar_lea.vmem %s3, %s527
        %p529 = scmp.lt.s32.totalorder %s29, 1
        %s530 = scalar_select %p529, %s29, 1
        %s531 = scalar_lea.vmem %s4, %s530
        %p532 = scmp.lt.s32.totalorder %s29, 1
        %s533 = scalar_select %p532, %s29, 1
        %s534 = smul.addr %s533, 128
        %s535 = smul.addr %s534, 4
        %s536 = scalar_lea.vmem %s5, %s535
        %p537 = scmp.lt.s32.totalorder %s29, 1
        %s538 = scalar_select %p537, %s29, 1
        %s539 = scalar_lea.vmem %s6, %s538
        %p540 = scmp.lt.s32.totalorder %s29, 1
        %s541 = scalar_select %p540, %s29, 1
        %s542 = smul.addr %s541, 144
        %s543 = smul.addr %s542, 4
        %s544 = scalar_lea.vmem %s7, %s543
        %p545 = scmp.lt.s32.totalorder %s29, 1
        %s546 = scalar_select %p545, %s29, 1
        %s547 = scalar_lea.vmem %s8, %s546
        %p548 = scmp.lt.s32.totalorder %s29, 1
        %s549 = scalar_select %p548, %s29, 1
        %s550 = smul.addr %s549, 9
        %s551 = scalar_lea.vmem %s9, %s550
        %v553 = vld [vmem:[%s514] sm:$0xff]
        %v554 = vld [vmem:[%s514 + $0x8] sm:$0xff]
        %v555 = vld [vmem:[%s514 + $0x10] sm:$0xff]
        %v556 = vld [vmem:[%s514 + $0x18] sm:$0xff]
        %v557 = vld [vmem:[%s514 + $0x20] sm:$0x33]
        %v558 = vld [vmem:[%s514 + $0x28] sm:$0x33]
        %v559 = vld [vmem:[%s519] sm:$0xff]
        %v560 = vld [vmem:[%s519 + $0x8] sm:$0xff]
        %v561 = vld [vmem:[%s519 + $0x10] sm:$0xff]
        %v562 = vld [vmem:[%s519 + $0x18] sm:$0xff]
        %v563 = vld [vmem:[%s519 + $0x20] sm:$0xff]
        %v564 = vld [vmem:[%s519 + $0x28] sm:$0xff]
        %v565 = vld [vmem:[%s519 + $0x30] sm:$0xff]
        %v566 = vld [vmem:[%s519 + $0x38] sm:$0xff]
        %v567 = vld [vmem:[%s519 + $0x40] sm:$0xff]
        %v568 = vld [vmem:[%s519 + $0x48] sm:$0xff]
        %v569 = vld [vmem:[%s519 + $0x50] sm:$0xff]
        %v570 = vld [vmem:[%s519 + $0x58] sm:$0xff]
        %v571 = vld [vmem:[%s519 + $0x60] sm:$0xff]
        %v572 = vld [vmem:[%s519 + $0x68] sm:$0xff]
        %v573 = vld [vmem:[%s519 + $0x70] sm:$0xff]
        %v574 = vld [vmem:[%s519 + $0x78] sm:$0xff]
        %v575 = vld [vmem:[%s519 + $0x80] sm:$0xff]
        %v576 = vld [vmem:[%s519 + $0x88] sm:$0xff]
        %v577 = vld [vmem:[%s519 + $0x90] sm:$0xff]
        %v578 = vld [vmem:[%s519 + $0x98] sm:$0xff]
        %v579 = vld [vmem:[%s519 + $0xa0] sm:$0xff]
        %v580 = vld [vmem:[%s519 + $0xa8] sm:$0xff]
        %v581 = vld [vmem:[%s519 + $0xb0] sm:$0xff]
        %v582 = vld [vmem:[%s519 + $0xb8] sm:$0xff]
        %v583 = vld [vmem:[%s519 + $0xc0] sm:$0xff]
        %v584 = vld [vmem:[%s519 + $0xc8] sm:$0xff]
        %v585 = vld [vmem:[%s519 + $0xd0] sm:$0xff]
        %v586 = vld [vmem:[%s519 + $0xd8] sm:$0xff]
        %v587 = vld [vmem:[%s519 + $0xe0] sm:$0xff]
        %v588 = vld [vmem:[%s519 + $0xe8] sm:$0xff]
        %v589 = vld [vmem:[%s519 + $0xf0] sm:$0xff]
        %v590 = vld [vmem:[%s519 + $0xf8] sm:$0xff]
        %v591 = vld [vmem:[%s519 + $0x100] sm:$0xff]
        %v592 = vld [vmem:[%s519 + $0x108] sm:$0xff]
        %v593 = vld [vmem:[%s519 + $0x110] sm:$0xff]
        %v594 = vld [vmem:[%s519 + $0x118] sm:$0xff]
        %v595 = vld [vmem:[%s519 + $0x120] sm:$0xff]
        %v596 = vld [vmem:[%s519 + $0x128] sm:$0xff]
        %v597 = vld [vmem:[%s519 + $0x130] sm:$0xff]
        %v598 = vld [vmem:[%s519 + $0x138] sm:$0xff]
        %v599 = vld [vmem:[%s519 + $0x140] sm:$0xff]
        %v600 = vld [vmem:[%s519 + $0x148] sm:$0xff]
        %v601 = vld [vmem:[%s519 + $0x150] sm:$0xff]
        %v602 = vld [vmem:[%s519 + $0x158] sm:$0xff]
        %v603 = vld [vmem:[%s519 + $0x160] sm:$0xff]
        %v604 = vld [vmem:[%s519 + $0x168] sm:$0xff]
        %v605 = vld [vmem:[%s519 + $0x170] sm:$0xff]
        %v606 = vld [vmem:[%s519 + $0x178] sm:$0xff]
        %v607 = vld [vmem:[%s519 + $0x180] sm:$0xff]
        %v608 = vld [vmem:[%s519 + $0x188] sm:$0xff]
        %v609 = vld [vmem:[%s519 + $0x190] sm:$0xff]
        %v610 = vld [vmem:[%s519 + $0x198] sm:$0xff]
        %v611 = vld [vmem:[%s519 + $0x1a0] sm:$0xff]
        %v612 = vld [vmem:[%s519 + $0x1a8] sm:$0xff]
        %v613 = vld [vmem:[%s519 + $0x1b0] sm:$0xff]
        %v614 = vld [vmem:[%s519 + $0x1b8] sm:$0xff]
        %v615 = vld [vmem:[%s519 + $0x1c0] sm:$0xff]
        %v616 = vld [vmem:[%s519 + $0x1c8] sm:$0xff]
        %v617 = vld [vmem:[%s519 + $0x1d0] sm:$0xff]
        %v618 = vld [vmem:[%s519 + $0x1d8] sm:$0xff]
        %v619 = vld [vmem:[%s519 + $0x1e0] sm:$0xff]
        %v620 = vld [vmem:[%s519 + $0x1e8] sm:$0xff]
        %v621 = vld [vmem:[%s519 + $0x1f0] sm:$0xff]
        %v622 = vld [vmem:[%s519 + $0x1f8] sm:$0xff]
        %v623 = vld [vmem:[%s519 + $0x200] sm:$0xff]
        %v624 = vld [vmem:[%s519 + $0x208] sm:$0xff]
        %v625 = vld [vmem:[%s519 + $0x210] sm:$0xff]
        %v626 = vld [vmem:[%s519 + $0x218] sm:$0xff]
        %v627 = vld [vmem:[%s519 + $0x220] sm:$0xff]
        %v628 = vld [vmem:[%s519 + $0x228] sm:$0xff]
        %v629 = vld [vmem:[%s519 + $0x230] sm:$0xff]
        %v630 = vld [vmem:[%s519 + $0x238] sm:$0xff]
        %v631 = vld [vmem:[%s519 + $0x240] sm:$0xff]
        %v632 = vld [vmem:[%s519 + $0x248] sm:$0xff]
        %v633 = vld [vmem:[%s519 + $0x250] sm:$0xff]
        %v634 = vld [vmem:[%s519 + $0x258] sm:$0xff]
        %v635 = vld [vmem:[%s519 + $0x260] sm:$0xff]
        %v636 = vld [vmem:[%s519 + $0x268] sm:$0xff]
        %v637 = vld [vmem:[%s519 + $0x270] sm:$0xff]
        %v638 = vld [vmem:[%s519 + $0x278] sm:$0xff]
        %v639 = vld [vmem:[%s519 + $0x280] sm:$0xff]
        %v640 = vld [vmem:[%s519 + $0x288] sm:$0xff]
        %v641 = vld [vmem:[%s519 + $0x290] sm:$0xff]
        %v642 = vld [vmem:[%s519 + $0x298] sm:$0xff]
        %v643 = vld [vmem:[%s519 + $0x2a0] sm:$0xff]
        %v644 = vld [vmem:[%s519 + $0x2a8] sm:$0xff]
        %v645 = vld [vmem:[%s519 + $0x2b0] sm:$0xff]
        %v646 = vld [vmem:[%s519 + $0x2b8] sm:$0xff]
        %v647 = vld [vmem:[%s519 + $0x2c0] sm:$0xff]
        %v648 = vld [vmem:[%s519 + $0x2c8] sm:$0xff]
        %v649 = vld [vmem:[%s519 + $0x2d0] sm:$0xff]
        %v650 = vld [vmem:[%s519 + $0x2d8] sm:$0xff]
        %v651 = vld [vmem:[%s519 + $0x2e0] sm:$0xff]
        %v652 = vld [vmem:[%s519 + $0x2e8] sm:$0xff]
        %v653 = vld [vmem:[%s519 + $0x2f0] sm:$0xff]
        %v654 = vld [vmem:[%s519 + $0x2f8] sm:$0xff]
        %v655 = vld [vmem:[%s519 + $0x300] sm:$0xff]
        %v656 = vld [vmem:[%s519 + $0x308] sm:$0xff]
        %v657 = vld [vmem:[%s519 + $0x310] sm:$0xff]
        %v658 = vld [vmem:[%s519 + $0x318] sm:$0xff]
        %v659 = vld [vmem:[%s519 + $0x320] sm:$0xff]
        %v660 = vld [vmem:[%s519 + $0x328] sm:$0xff]
        %v661 = vld [vmem:[%s519 + $0x330] sm:$0xff]
        %v662 = vld [vmem:[%s519 + $0x338] sm:$0xff]
        %v663 = vld [vmem:[%s519 + $0x340] sm:$0xff]
        %v664 = vld [vmem:[%s519 + $0x348] sm:$0xff]
        %v665 = vld [vmem:[%s519 + $0x350] sm:$0xff]
        %v666 = vld [vmem:[%s519 + $0x358] sm:$0xff]
        %v667 = vld [vmem:[%s519 + $0x360] sm:$0xff]
        %v668 = vld [vmem:[%s519 + $0x368] sm:$0xff]
        %v669 = vld [vmem:[%s519 + $0x370] sm:$0xff]
        %v670 = vld [vmem:[%s519 + $0x378] sm:$0xff]
        %v671 = vld [vmem:[%s519 + $0x380] sm:$0xff]
        %v672 = vld [vmem:[%s519 + $0x388] sm:$0xff]
        %v673 = vld [vmem:[%s519 + $0x390] sm:$0xff]
        %v674 = vld [vmem:[%s519 + $0x398] sm:$0xff]
        %v675 = vld [vmem:[%s519 + $0x3a0] sm:$0xff]
        %v676 = vld [vmem:[%s519 + $0x3a8] sm:$0xff]
        %v677 = vld [vmem:[%s519 + $0x3b0] sm:$0xff]
        %v678 = vld [vmem:[%s519 + $0x3b8] sm:$0xff]
        %v679 = vld [vmem:[%s519 + $0x3c0] sm:$0xff]
        %v680 = vld [vmem:[%s519 + $0x3c8] sm:$0xff]
        %v681 = vld [vmem:[%s519 + $0x3d0] sm:$0xff]
        %v682 = vld [vmem:[%s519 + $0x3d8] sm:$0xff]
        %v683 = vld [vmem:[%s519 + $0x3e0] sm:$0xff]
        %v684 = vld [vmem:[%s519 + $0x3e8] sm:$0xff]
        %v685 = vld [vmem:[%s519 + $0x3f0] sm:$0xff]
        %v686 = vld [vmem:[%s519 + $0x3f8] sm:$0xff]
        %v687 = vld [vmem:[%s519 + $0x400] sm:$0xff]
        %v688 = vld [vmem:[%s519 + $0x408] sm:$0xff]
        %v689 = vld [vmem:[%s519 + $0x410] sm:$0xff]
        %v690 = vld [vmem:[%s519 + $0x418] sm:$0xff]
        %v691 = vld [vmem:[%s519 + $0x420] sm:$0xff]
        %v692 = vld [vmem:[%s519 + $0x428] sm:$0xff]
        %v693 = vld [vmem:[%s519 + $0x430] sm:$0xff]
        %v694 = vld [vmem:[%s519 + $0x438] sm:$0xff]
        %v695 = vld [vmem:[%s519 + $0x440] sm:$0xff]
        %v696 = vld [vmem:[%s519 + $0x448] sm:$0xff]
        %v697 = vld [vmem:[%s519 + $0x450] sm:$0xff]
        %v698 = vld [vmem:[%s519 + $0x458] sm:$0xff]
        %v699 = vld [vmem:[%s519 + $0x460] sm:$0xff]
        %v700 = vld [vmem:[%s519 + $0x468] sm:$0xff]
        %v701 = vld [vmem:[%s519 + $0x470] sm:$0xff]
        %v702 = vld [vmem:[%s519 + $0x478] sm:$0xff]
        %v703 = vld [vmem:[%s519 + $0x480] sm:$0xff]
        %v704 = vld [vmem:[%s519 + $0x488] sm:$0xff]
        %v705 = vld [vmem:[%s519 + $0x490] sm:$0xff]
        %v706 = vld [vmem:[%s519 + $0x498] sm:$0xff]
        %v707 = vld [vmem:[%s519 + $0x4a0] sm:$0xff]
        %v708 = vld [vmem:[%s519 + $0x4a8] sm:$0xff]
        %v709 = vld [vmem:[%s519 + $0x4b0] sm:$0xff]
        %v710 = vld [vmem:[%s519 + $0x4b8] sm:$0xff]
        %v711 = vld [vmem:[%s519 + $0x4c0] sm:$0xff]
        %v712 = vld [vmem:[%s519 + $0x4c8] sm:$0xff]
        %v713 = vld [vmem:[%s519 + $0x4d0] sm:$0xff]
        %v714 = vld [vmem:[%s519 + $0x4d8] sm:$0xff]
        %v715 = vld [vmem:[%s519 + $0x4e0] sm:$0xff]
        %v716 = vld [vmem:[%s519 + $0x4e8] sm:$0xff]
        %v717 = vld [vmem:[%s519 + $0x4f0] sm:$0xff]
        %v718 = vld [vmem:[%s519 + $0x4f8] sm:$0xff]
        %v719 = vld [vmem:[%s519 + $0x500] sm:$0xff]
        %v720 = vld [vmem:[%s519 + $0x508] sm:$0xff]
        %v721 = vld [vmem:[%s519 + $0x510] sm:$0xff]
        %v722 = vld [vmem:[%s519 + $0x518] sm:$0xff]
        %v723 = vld [vmem:[%s519 + $0x520] sm:$0xff]
        %v724 = vld [vmem:[%s519 + $0x528] sm:$0xff]
        %v725 = vld [vmem:[%s519 + $0x530] sm:$0xff]
        %v726 = vld [vmem:[%s519 + $0x538] sm:$0xff]
        %v727 = vld [vmem:[%s519 + $0x540] sm:$0xff]
        %v728 = vld [vmem:[%s519 + $0x548] sm:$0xff]
        %v729 = vld [vmem:[%s519 + $0x550] sm:$0xff]
        %v730 = vld [vmem:[%s519 + $0x558] sm:$0xff]
        %v731 = vld [vmem:[%s519 + $0x560] sm:$0xff]
        %v732 = vld [vmem:[%s519 + $0x568] sm:$0xff]
        %v733 = vld [vmem:[%s519 + $0x570] sm:$0xff]
        %v734 = vld [vmem:[%s519 + $0x578] sm:$0xff]
        %v735 = vld [vmem:[%s519 + $0x580] sm:$0xff]
        %v736 = vld [vmem:[%s519 + $0x588] sm:$0xff]
        %v737 = vld [vmem:[%s519 + $0x590] sm:$0xff]
        %v738 = vld [vmem:[%s519 + $0x598] sm:$0xff]
        %v739 = vld [vmem:[%s519 + $0x5a0] sm:$0xff]
        %v740 = vld [vmem:[%s519 + $0x5a8] sm:$0xff]
        %v741 = vld [vmem:[%s519 + $0x5b0] sm:$0xff]
        %v742 = vld [vmem:[%s519 + $0x5b8] sm:$0xff]
        %v743 = vld [vmem:[%s519 + $0x5c0] sm:$0xff]
        %v744 = vld [vmem:[%s519 + $0x5c8] sm:$0xff]
        %v745 = vld [vmem:[%s519 + $0x5d0] sm:$0xff]
        %v746 = vld [vmem:[%s519 + $0x5d8] sm:$0xff]
        %v747 = vld [vmem:[%s519 + $0x5e0] sm:$0xff]
        %v748 = vld [vmem:[%s519 + $0x5e8] sm:$0xff]
        %v749 = vld [vmem:[%s519 + $0x5f0] sm:$0xff]
        %v750 = vld [vmem:[%s519 + $0x5f8] sm:$0xff]
        %v751 = vld [vmem:[%s519 + $0x600] sm:$0xff]
        %v752 = vld [vmem:[%s519 + $0x608] sm:$0xff]
        %v753 = vld [vmem:[%s519 + $0x610] sm:$0xff]
        %v754 = vld [vmem:[%s519 + $0x618] sm:$0xff]
        %v755 = vld [vmem:[%s519 + $0x620] sm:$0xff]
        %v756 = vld [vmem:[%s519 + $0x628] sm:$0xff]
        %v757 = vld [vmem:[%s519 + $0x630] sm:$0xff]
        %v758 = vld [vmem:[%s519 + $0x638] sm:$0xff]
        %v759 = vld [vmem:[%s519 + $0x640] sm:$0xff]
        %v760 = vld [vmem:[%s519 + $0x648] sm:$0xff]
        %v761 = vld [vmem:[%s519 + $0x650] sm:$0xff]
        %v762 = vld [vmem:[%s519 + $0x658] sm:$0xff]
        %v763 = vld [vmem:[%s519 + $0x660] sm:$0xff]
        %v764 = vld [vmem:[%s519 + $0x668] sm:$0xff]
        %v765 = vld [vmem:[%s519 + $0x670] sm:$0xff]
        %v766 = vld [vmem:[%s519 + $0x678] sm:$0xff]
        %v767 = vld [vmem:[%s519 + $0x680] sm:$0xff]
        %v768 = vld [vmem:[%s519 + $0x688] sm:$0xff]
        %v769 = vld [vmem:[%s519 + $0x690] sm:$0xff]
        %v770 = vld [vmem:[%s519 + $0x698] sm:$0xff]
        %v771 = vld [vmem:[%s519 + $0x6a0] sm:$0xff]
        %v772 = vld [vmem:[%s519 + $0x6a8] sm:$0xff]
        %v773 = vld [vmem:[%s519 + $0x6b0] sm:$0xff]
        %v774 = vld [vmem:[%s519 + $0x6b8] sm:$0xff]
        %v775 = vld [vmem:[%s519 + $0x6c0] sm:$0xff]
        %v776 = vld [vmem:[%s519 + $0x6c8] sm:$0xff]
        %v777 = vld [vmem:[%s519 + $0x6d0] sm:$0xff]
        %v778 = vld [vmem:[%s519 + $0x6d8] sm:$0xff]
        %v779 = vld [vmem:[%s519 + $0x6e0] sm:$0xff]
        %v780 = vld [vmem:[%s519 + $0x6e8] sm:$0xff]
        %v781 = vld [vmem:[%s519 + $0x6f0] sm:$0xff]
        %v782 = vld [vmem:[%s519 + $0x6f8] sm:$0xff]
        %v783 = vld [vmem:[%s519 + $0x700] sm:$0xff]
        %v784 = vld [vmem:[%s519 + $0x708] sm:$0xff]
        %v785 = vld [vmem:[%s519 + $0x710] sm:$0xff]
        %v786 = vld [vmem:[%s519 + $0x718] sm:$0xff]
        %v787 = vld [vmem:[%s519 + $0x720] sm:$0xff]
        %v788 = vld [vmem:[%s519 + $0x728] sm:$0xff]
        %v789 = vld [vmem:[%s519 + $0x730] sm:$0xff]
        %v790 = vld [vmem:[%s519 + $0x738] sm:$0xff]
        %v791 = vld [vmem:[%s519 + $0x740] sm:$0xff]
        %v792 = vld [vmem:[%s519 + $0x748] sm:$0xff]
        %v793 = vld [vmem:[%s519 + $0x750] sm:$0xff]
        %v794 = vld [vmem:[%s519 + $0x758] sm:$0xff]
        %v795 = vld [vmem:[%s519 + $0x760] sm:$0xff]
        %v796 = vld [vmem:[%s519 + $0x768] sm:$0xff]
        %v797 = vld [vmem:[%s519 + $0x770] sm:$0xff]
        %v798 = vld [vmem:[%s519 + $0x778] sm:$0xff]
        %v799 = vld [vmem:[%s519 + $0x780] sm:$0xff]
        %v800 = vld [vmem:[%s519 + $0x788] sm:$0xff]
        %v801 = vld [vmem:[%s519 + $0x790] sm:$0xff]
        %v802 = vld [vmem:[%s519 + $0x798] sm:$0xff]
        %v803 = vld [vmem:[%s519 + $0x7a0] sm:$0xff]
        %v804 = vld [vmem:[%s519 + $0x7a8] sm:$0xff]
        %v805 = vld [vmem:[%s519 + $0x7b0] sm:$0xff]
        %v806 = vld [vmem:[%s519 + $0x7b8] sm:$0xff]
        %v807 = vld [vmem:[%s519 + $0x7c0] sm:$0xff]
        %v808 = vld [vmem:[%s519 + $0x7c8] sm:$0xff]
        %v809 = vld [vmem:[%s519 + $0x7d0] sm:$0xff]
        %v810 = vld [vmem:[%s519 + $0x7d8] sm:$0xff]
        %v811 = vld [vmem:[%s519 + $0x7e0] sm:$0xff]
        %v812 = vld [vmem:[%s519 + $0x7e8] sm:$0xff]
        %v813 = vld [vmem:[%s519 + $0x7f0] sm:$0xff]
        %v814 = vld [vmem:[%s519 + $0x7f8] sm:$0xff]
        %v815 = vld [vmem:[%s523] sm:$0xff]
        %v817 = vlaneseq
        %v818 = vshrl.u32 %v817, 7
        %v819 = vsub.s32 0, %v818
        %v820 = vrot.slane %v815, %v819
        %v821 = vlaneseq
        %v822 = vshrl.u32 %v821, 7
        %v823 = vsub.s32 1, %v822
        %v824 = vrot.slane %v815, %v823
        %v825 = vlaneseq
        %v826 = vshrl.u32 %v825, 7
        %v827 = vsub.s32 2, %v826
        %v828 = vrot.slane %v815, %v827
        %v829 = vlaneseq
        %v830 = vshrl.u32 %v829, 7
        %v831 = vsub.s32 3, %v830
        %v832 = vrot.slane %v815, %v831
        %v833 = vlaneseq
        %v834 = vshrl.u32 %v833, 7
        %v835 = vsub.s32 4, %v834
        %v836 = vrot.slane %v815, %v835
        %v837 = vlaneseq
        %v838 = vshrl.u32 %v837, 7
        %v839 = vsub.s32 5, %v838
        %v840 = vrot.slane %v815, %v839
        %v841 = vlaneseq
        %v842 = vshrl.u32 %v841, 7
        %v843 = vsub.s32 6, %v842
        %v844 = vrot.slane %v815, %v843
        %v845 = vlaneseq
        %v846 = vshrl.u32 %v845, 7
        %v847 = vsub.s32 7, %v846
        %v848 = vrot.slane %v815, %v847
        %v863 = vunpack.c.l.b16 %v553
        %v864 = vunpack.c.h.b16 %v553
        %v865 = vunpack.c.l.b16 %v554
        %v866 = vunpack.c.h.b16 %v554
        %v867 = vunpack.c.l.b16 %v555
        %v868 = vunpack.c.h.b16 %v555
        %v869 = vunpack.c.l.b16 %v556
        %v870 = vunpack.c.h.b16 %v556
        %v871 = vunpack.c.l.b16 %v557
        %v872 = vunpack.c.h.b16 %v557
        %v873 = vunpack.c.l.b16 %v558
        %v874 = vunpack.c.h.b16 %v558
        %v875 = vpack.c.b16 %v867, %v863
        %v876 = vpack.c.b16 %v868, %v864
        %v877 = vpack.c.b16 %v869, %v865
        %v878 = vpack.c.b16 %v870, %v866
        %v879 = vpack.c.b16 %v871, %v871
        %v880 = vpack.c.b16 %v872, %v872
        %v881 = vpack.c.b16 %v873, %v873
        %v882 = vpack.c.b16 %v874, %v874
        %v1147 = vunpack.c.l.b16 %v559
        %v1148 = vunpack.c.h.b16 %v559
        %v1149 = vunpack.c.l.b16 %v560
        %v1150 = vunpack.c.h.b16 %v560
        %v1151 = vunpack.c.l.b16 %v561
        %v1152 = vunpack.c.h.b16 %v561
        %v1153 = vunpack.c.l.b16 %v562
        %v1154 = vunpack.c.h.b16 %v562
        %v1155 = vunpack.c.l.b16 %v563
        %v1156 = vunpack.c.h.b16 %v563
        %v1157 = vunpack.c.l.b16 %v564
        %v1158 = vunpack.c.h.b16 %v564
        %v1159 = vunpack.c.l.b16 %v565
        %v1160 = vunpack.c.h.b16 %v565
        %v1161 = vunpack.c.l.b16 %v566
        %v1162 = vunpack.c.h.b16 %v566
        %v1163 = vunpack.c.l.b16 %v567
        %v1164 = vunpack.c.h.b16 %v567
        %v1165 = vunpack.c.l.b16 %v568
        %v1166 = vunpack.c.h.b16 %v568
        %v1167 = vunpack.c.l.b16 %v569
        %v1168 = vunpack.c.h.b16 %v569
        %v1169 = vunpack.c.l.b16 %v570
        %v1170 = vunpack.c.h.b16 %v570
        %v1171 = vunpack.c.l.b16 %v571
        %v1172 = vunpack.c.h.b16 %v571
        %v1173 = vunpack.c.l.b16 %v572
        %v1174 = vunpack.c.h.b16 %v572
        %v1175 = vunpack.c.l.b16 %v573
        %v1176 = vunpack.c.h.b16 %v573
        %v1177 = vunpack.c.l.b16 %v574
        %v1178 = vunpack.c.h.b16 %v574
        %v1179 = vunpack.c.l.b16 %v575
        %v1180 = vunpack.c.h.b16 %v575
        %v1181 = vunpack.c.l.b16 %v576
        %v1182 = vunpack.c.h.b16 %v576
        %v1183 = vunpack.c.l.b16 %v577
        %v1184 = vunpack.c.h.b16 %v577
        %v1185 = vunpack.c.l.b16 %v578
        %v1186 = vunpack.c.h.b16 %v578
        %v1187 = vunpack.c.l.b16 %v579
        %v1188 = vunpack.c.h.b16 %v579
        %v1189 = vunpack.c.l.b16 %v580
        %v1190 = vunpack.c.h.b16 %v580
        %v1191 = vunpack.c.l.b16 %v581
        %v1192 = vunpack.c.h.b16 %v581
        %v1193 = vunpack.c.l.b16 %v582
        %v1194 = vunpack.c.h.b16 %v582
        %v1195 = vunpack.c.l.b16 %v583
        %v1196 = vunpack.c.h.b16 %v583
        %v1197 = vunpack.c.l.b16 %v584
        %v1198 = vunpack.c.h.b16 %v584
        %v1199 = vunpack.c.l.b16 %v585
        %v1200 = vunpack.c.h.b16 %v585
        %v1201 = vunpack.c.l.b16 %v586
        %v1202 = vunpack.c.h.b16 %v586
        %v1203 = vunpack.c.l.b16 %v587
        %v1204 = vunpack.c.h.b16 %v587
        %v1205 = vunpack.c.l.b16 %v588
        %v1206 = vunpack.c.h.b16 %v588
        %v1207 = vunpack.c.l.b16 %v589
        %v1208 = vunpack.c.h.b16 %v589
        %v1209 = vunpack.c.l.b16 %v590
        %v1210 = vunpack.c.h.b16 %v590
        %v1211 = vunpack.c.l.b16 %v591
        %v1212 = vunpack.c.h.b16 %v591
        %v1213 = vunpack.c.l.b16 %v592
        %v1214 = vunpack.c.h.b16 %v592
        %v1215 = vunpack.c.l.b16 %v593
        %v1216 = vunpack.c.h.b16 %v593
        %v1217 = vunpack.c.l.b16 %v594
        %v1218 = vunpack.c.h.b16 %v594
        %v1219 = vunpack.c.l.b16 %v595
        %v1220 = vunpack.c.h.b16 %v595
        %v1221 = vunpack.c.l.b16 %v596
        %v1222 = vunpack.c.h.b16 %v596
        %v1223 = vunpack.c.l.b16 %v597
        %v1224 = vunpack.c.h.b16 %v597
        %v1225 = vunpack.c.l.b16 %v598
        %v1226 = vunpack.c.h.b16 %v598
        %v1227 = vunpack.c.l.b16 %v599
        %v1228 = vunpack.c.h.b16 %v599
        %v1229 = vunpack.c.l.b16 %v600
        %v1230 = vunpack.c.h.b16 %v600
        %v1231 = vunpack.c.l.b16 %v601
        %v1232 = vunpack.c.h.b16 %v601
        %v1233 = vunpack.c.l.b16 %v602
        %v1234 = vunpack.c.h.b16 %v602
        %v1235 = vunpack.c.l.b16 %v603
        %v1236 = vunpack.c.h.b16 %v603
        %v1237 = vunpack.c.l.b16 %v604
        %v1238 = vunpack.c.h.b16 %v604
        %v1239 = vunpack.c.l.b16 %v605
        %v1240 = vunpack.c.h.b16 %v605
        %v1241 = vunpack.c.l.b16 %v606
        %v1242 = vunpack.c.h.b16 %v606
        %v1243 = vunpack.c.l.b16 %v607
        %v1244 = vunpack.c.h.b16 %v607
        %v1245 = vunpack.c.l.b16 %v608
        %v1246 = vunpack.c.h.b16 %v608
        %v1247 = vunpack.c.l.b16 %v609
        %v1248 = vunpack.c.h.b16 %v609
        %v1249 = vunpack.c.l.b16 %v610
        %v1250 = vunpack.c.h.b16 %v610
        %v1251 = vunpack.c.l.b16 %v611
        %v1252 = vunpack.c.h.b16 %v611
        %v1253 = vunpack.c.l.b16 %v612
        %v1254 = vunpack.c.h.b16 %v612
        %v1255 = vunpack.c.l.b16 %v613
        %v1256 = vunpack.c.h.b16 %v613
        %v1257 = vunpack.c.l.b16 %v614
        %v1258 = vunpack.c.h.b16 %v614
        %v1259 = vunpack.c.l.b16 %v615
        %v1260 = vunpack.c.h.b16 %v615
        %v1261 = vunpack.c.l.b16 %v616
        %v1262 = vunpack.c.h.b16 %v616
        %v1263 = vunpack.c.l.b16 %v617
        %v1264 = vunpack.c.h.b16 %v617
        %v1265 = vunpack.c.l.b16 %v618
        %v1266 = vunpack.c.h.b16 %v618
        %v1267 = vunpack.c.l.b16 %v619
        %v1268 = vunpack.c.h.b16 %v619
        %v1269 = vunpack.c.l.b16 %v620
        %v1270 = vunpack.c.h.b16 %v620
        %v1271 = vunpack.c.l.b16 %v621
        %v1272 = vunpack.c.h.b16 %v621
        %v1273 = vunpack.c.l.b16 %v622
        %v1274 = vunpack.c.h.b16 %v622
        %v1275 = vunpack.c.l.b16 %v623
        %v1276 = vunpack.c.h.b16 %v623
        %v1277 = vunpack.c.l.b16 %v624
        %v1278 = vunpack.c.h.b16 %v624
        %v1279 = vunpack.c.l.b16 %v625
        %v1280 = vunpack.c.h.b16 %v625
        %v1281 = vunpack.c.l.b16 %v626
        %v1282 = vunpack.c.h.b16 %v626
        %v1283 = vunpack.c.l.b16 %v627
        %v1284 = vunpack.c.h.b16 %v627
        %v1285 = vunpack.c.l.b16 %v628
        %v1286 = vunpack.c.h.b16 %v628
        %v1287 = vunpack.c.l.b16 %v629
        %v1288 = vunpack.c.h.b16 %v629
        %v1289 = vunpack.c.l.b16 %v630
        %v1290 = vunpack.c.h.b16 %v630
        %v1291 = vunpack.c.l.b16 %v631
        %v1292 = vunpack.c.h.b16 %v631
        %v1293 = vunpack.c.l.b16 %v632
        %v1294 = vunpack.c.h.b16 %v632
        %v1295 = vunpack.c.l.b16 %v633
        %v1296 = vunpack.c.h.b16 %v633
        %v1297 = vunpack.c.l.b16 %v634
        %v1298 = vunpack.c.h.b16 %v634
        %v1299 = vunpack.c.l.b16 %v635
        %v1300 = vunpack.c.h.b16 %v635
        %v1301 = vunpack.c.l.b16 %v636
        %v1302 = vunpack.c.h.b16 %v636
        %v1303 = vunpack.c.l.b16 %v637
        %v1304 = vunpack.c.h.b16 %v637
        %v1305 = vunpack.c.l.b16 %v638
        %v1306 = vunpack.c.h.b16 %v638
        %v1307 = vunpack.c.l.b16 %v639
        %v1308 = vunpack.c.h.b16 %v639
        %v1309 = vunpack.c.l.b16 %v640
        %v1310 = vunpack.c.h.b16 %v640
        %v1311 = vunpack.c.l.b16 %v641
        %v1312 = vunpack.c.h.b16 %v641
        %v1313 = vunpack.c.l.b16 %v642
        %v1314 = vunpack.c.h.b16 %v642
        %v1315 = vunpack.c.l.b16 %v643
        %v1316 = vunpack.c.h.b16 %v643
        %v1317 = vunpack.c.l.b16 %v644
        %v1318 = vunpack.c.h.b16 %v644
        %v1319 = vunpack.c.l.b16 %v645
        %v1320 = vunpack.c.h.b16 %v645
        %v1321 = vunpack.c.l.b16 %v646
        %v1322 = vunpack.c.h.b16 %v646
        %v1323 = vunpack.c.l.b16 %v647
        %v1324 = vunpack.c.h.b16 %v647
        %v1325 = vunpack.c.l.b16 %v648
        %v1326 = vunpack.c.h.b16 %v648
        %v1327 = vunpack.c.l.b16 %v649
        %v1328 = vunpack.c.h.b16 %v649
        %v1329 = vunpack.c.l.b16 %v650
        %v1330 = vunpack.c.h.b16 %v650
        %v1331 = vunpack.c.l.b16 %v651
        %v1332 = vunpack.c.h.b16 %v651
        %v1333 = vunpack.c.l.b16 %v652
        %v1334 = vunpack.c.h.b16 %v652
        %v1335 = vunpack.c.l.b16 %v653
        %v1336 = vunpack.c.h.b16 %v653
        %v1337 = vunpack.c.l.b16 %v654
        %v1338 = vunpack.c.h.b16 %v654
        %v1339 = vunpack.c.l.b16 %v655
        %v1340 = vunpack.c.h.b16 %v655
        %v1341 = vunpack.c.l.b16 %v656
        %v1342 = vunpack.c.h.b16 %v656
        %v1343 = vunpack.c.l.b16 %v657
        %v1344 = vunpack.c.h.b16 %v657
        %v1345 = vunpack.c.l.b16 %v658
        %v1346 = vunpack.c.h.b16 %v658
        %v1347 = vunpack.c.l.b16 %v659
        %v1348 = vunpack.c.h.b16 %v659
        %v1349 = vunpack.c.l.b16 %v660
        %v1350 = vunpack.c.h.b16 %v660
        %v1351 = vunpack.c.l.b16 %v661
        %v1352 = vunpack.c.h.b16 %v661
        %v1353 = vunpack.c.l.b16 %v662
        %v1354 = vunpack.c.h.b16 %v662
        %v1355 = vunpack.c.l.b16 %v663
        %v1356 = vunpack.c.h.b16 %v663
        %v1357 = vunpack.c.l.b16 %v664
        %v1358 = vunpack.c.h.b16 %v664
        %v1359 = vunpack.c.l.b16 %v665
        %v1360 = vunpack.c.h.b16 %v665
        %v1361 = vunpack.c.l.b16 %v666
        %v1362 = vunpack.c.h.b16 %v666
        %v1363 = vunpack.c.l.b16 %v667
        %v1364 = vunpack.c.h.b16 %v667
        %v1365 = vunpack.c.l.b16 %v668
        %v1366 = vunpack.c.h.b16 %v668
        %v1367 = vunpack.c.l.b16 %v669
        %v1368 = vunpack.c.h.b16 %v669
        %v1369 = vunpack.c.l.b16 %v670
        %v1370 = vunpack.c.h.b16 %v670
        %v1371 = vunpack.c.l.b16 %v671
        %v1372 = vunpack.c.h.b16 %v671
        %v1373 = vunpack.c.l.b16 %v672
        %v1374 = vunpack.c.h.b16 %v672
        %v1375 = vunpack.c.l.b16 %v673
        %v1376 = vunpack.c.h.b16 %v673
        %v1377 = vunpack.c.l.b16 %v674
        %v1378 = vunpack.c.h.b16 %v674
        %v1379 = vunpack.c.l.b16 %v675
        %v1380 = vunpack.c.h.b16 %v675
        %v1381 = vunpack.c.l.b16 %v676
        %v1382 = vunpack.c.h.b16 %v676
        %v1383 = vunpack.c.l.b16 %v677
        %v1384 = vunpack.c.h.b16 %v677
        %v1385 = vunpack.c.l.b16 %v678
        %v1386 = vunpack.c.h.b16 %v678
        %v1387 = vunpack.c.l.b16 %v679
        %v1388 = vunpack.c.h.b16 %v679
        %v1389 = vunpack.c.l.b16 %v680
        %v1390 = vunpack.c.h.b16 %v680
        %v1391 = vunpack.c.l.b16 %v681
        %v1392 = vunpack.c.h.b16 %v681
        %v1393 = vunpack.c.l.b16 %v682
        %v1394 = vunpack.c.h.b16 %v682
        %v1395 = vunpack.c.l.b16 %v683
        %v1396 = vunpack.c.h.b16 %v683
        %v1397 = vunpack.c.l.b16 %v684
        %v1398 = vunpack.c.h.b16 %v684
        %v1399 = vunpack.c.l.b16 %v685
        %v1400 = vunpack.c.h.b16 %v685
        %v1401 = vunpack.c.l.b16 %v686
        %v1402 = vunpack.c.h.b16 %v686
        %v1403 = vunpack.c.l.b16 %v687
        %v1404 = vunpack.c.h.b16 %v687
        %v1405 = vunpack.c.l.b16 %v688
        %v1406 = vunpack.c.h.b16 %v688
        %v1407 = vunpack.c.l.b16 %v689
        %v1408 = vunpack.c.h.b16 %v689
        %v1409 = vunpack.c.l.b16 %v690
        %v1410 = vunpack.c.h.b16 %v690
        %v1411 = vunpack.c.l.b16 %v691
        %v1412 = vunpack.c.h.b16 %v691
        %v1413 = vunpack.c.l.b16 %v692
        %v1414 = vunpack.c.h.b16 %v692
        %v1415 = vunpack.c.l.b16 %v693
        %v1416 = vunpack.c.h.b16 %v693
        %v1417 = vunpack.c.l.b16 %v694
        %v1418 = vunpack.c.h.b16 %v694
        %v1419 = vunpack.c.l.b16 %v695
        %v1420 = vunpack.c.h.b16 %v695
        %v1421 = vunpack.c.l.b16 %v696
        %v1422 = vunpack.c.h.b16 %v696
        %v1423 = vunpack.c.l.b16 %v697
        %v1424 = vunpack.c.h.b16 %v697
        %v1425 = vunpack.c.l.b16 %v698
        %v1426 = vunpack.c.h.b16 %v698
        %v1427 = vunpack.c.l.b16 %v699
        %v1428 = vunpack.c.h.b16 %v699
        %v1429 = vunpack.c.l.b16 %v700
        %v1430 = vunpack.c.h.b16 %v700
        %v1431 = vunpack.c.l.b16 %v701
        %v1432 = vunpack.c.h.b16 %v701
        %v1433 = vunpack.c.l.b16 %v702
        %v1434 = vunpack.c.h.b16 %v702
        %v1435 = vunpack.c.l.b16 %v703
        %v1436 = vunpack.c.h.b16 %v703
        %v1437 = vunpack.c.l.b16 %v704
        %v1438 = vunpack.c.h.b16 %v704
        %v1439 = vunpack.c.l.b16 %v705
        %v1440 = vunpack.c.h.b16 %v705
        %v1441 = vunpack.c.l.b16 %v706
        %v1442 = vunpack.c.h.b16 %v706
        %v1443 = vunpack.c.l.b16 %v707
        %v1444 = vunpack.c.h.b16 %v707
        %v1445 = vunpack.c.l.b16 %v708
        %v1446 = vunpack.c.h.b16 %v708
        %v1447 = vunpack.c.l.b16 %v709
        %v1448 = vunpack.c.h.b16 %v709
        %v1449 = vunpack.c.l.b16 %v710
        %v1450 = vunpack.c.h.b16 %v710
        %v1451 = vunpack.c.l.b16 %v711
        %v1452 = vunpack.c.h.b16 %v711
        %v1453 = vunpack.c.l.b16 %v712
        %v1454 = vunpack.c.h.b16 %v712
        %v1455 = vunpack.c.l.b16 %v713
        %v1456 = vunpack.c.h.b16 %v713
        %v1457 = vunpack.c.l.b16 %v714
        %v1458 = vunpack.c.h.b16 %v714
        %v1459 = vunpack.c.l.b16 %v715
        %v1460 = vunpack.c.h.b16 %v715
        %v1461 = vunpack.c.l.b16 %v716
        %v1462 = vunpack.c.h.b16 %v716
        %v1463 = vunpack.c.l.b16 %v717
        %v1464 = vunpack.c.h.b16 %v717
        %v1465 = vunpack.c.l.b16 %v718
        %v1466 = vunpack.c.h.b16 %v718
        %v1467 = vunpack.c.l.b16 %v719
        %v1468 = vunpack.c.h.b16 %v719
        %v1469 = vunpack.c.l.b16 %v720
        %v1470 = vunpack.c.h.b16 %v720
        %v1471 = vunpack.c.l.b16 %v721
        %v1472 = vunpack.c.h.b16 %v721
        %v1473 = vunpack.c.l.b16 %v722
        %v1474 = vunpack.c.h.b16 %v722
        %v1475 = vunpack.c.l.b16 %v723
        %v1476 = vunpack.c.h.b16 %v723
        %v1477 = vunpack.c.l.b16 %v724
        %v1478 = vunpack.c.h.b16 %v724
        %v1479 = vunpack.c.l.b16 %v725
        %v1480 = vunpack.c.h.b16 %v725
        %v1481 = vunpack.c.l.b16 %v726
        %v1482 = vunpack.c.h.b16 %v726
        %v1483 = vunpack.c.l.b16 %v727
        %v1484 = vunpack.c.h.b16 %v727
        %v1485 = vunpack.c.l.b16 %v728
        %v1486 = vunpack.c.h.b16 %v728
        %v1487 = vunpack.c.l.b16 %v729
        %v1488 = vunpack.c.h.b16 %v729
        %v1489 = vunpack.c.l.b16 %v730
        %v1490 = vunpack.c.h.b16 %v730
        %v1491 = vunpack.c.l.b16 %v731
        %v1492 = vunpack.c.h.b16 %v731
        %v1493 = vunpack.c.l.b16 %v732
        %v1494 = vunpack.c.h.b16 %v732
        %v1495 = vunpack.c.l.b16 %v733
        %v1496 = vunpack.c.h.b16 %v733
        %v1497 = vunpack.c.l.b16 %v734
        %v1498 = vunpack.c.h.b16 %v734
        %v1499 = vunpack.c.l.b16 %v735
        %v1500 = vunpack.c.h.b16 %v735
        %v1501 = vunpack.c.l.b16 %v736
        %v1502 = vunpack.c.h.b16 %v736
        %v1503 = vunpack.c.l.b16 %v737
        %v1504 = vunpack.c.h.b16 %v737
        %v1505 = vunpack.c.l.b16 %v738
        %v1506 = vunpack.c.h.b16 %v738
        %v1507 = vunpack.c.l.b16 %v739
        %v1508 = vunpack.c.h.b16 %v739
        %v1509 = vunpack.c.l.b16 %v740
        %v1510 = vunpack.c.h.b16 %v740
        %v1511 = vunpack.c.l.b16 %v741
        %v1512 = vunpack.c.h.b16 %v741
        %v1513 = vunpack.c.l.b16 %v742
        %v1514 = vunpack.c.h.b16 %v742
        %v1515 = vunpack.c.l.b16 %v743
        %v1516 = vunpack.c.h.b16 %v743
        %v1517 = vunpack.c.l.b16 %v744
        %v1518 = vunpack.c.h.b16 %v744
        %v1519 = vunpack.c.l.b16 %v745
        %v1520 = vunpack.c.h.b16 %v745
        %v1521 = vunpack.c.l.b16 %v746
        %v1522 = vunpack.c.h.b16 %v746
        %v1523 = vunpack.c.l.b16 %v747
        %v1524 = vunpack.c.h.b16 %v747
        %v1525 = vunpack.c.l.b16 %v748
        %v1526 = vunpack.c.h.b16 %v748
        %v1527 = vunpack.c.l.b16 %v749
        %v1528 = vunpack.c.h.b16 %v749
        %v1529 = vunpack.c.l.b16 %v750
        %v1530 = vunpack.c.h.b16 %v750
        %v1531 = vunpack.c.l.b16 %v751
        %v1532 = vunpack.c.h.b16 %v751
        %v1533 = vunpack.c.l.b16 %v752
        %v1534 = vunpack.c.h.b16 %v752
        %v1535 = vunpack.c.l.b16 %v753
        %v1536 = vunpack.c.h.b16 %v753
        %v1537 = vunpack.c.l.b16 %v754
        %v1538 = vunpack.c.h.b16 %v754
        %v1539 = vunpack.c.l.b16 %v755
        %v1540 = vunpack.c.h.b16 %v755
        %v1541 = vunpack.c.l.b16 %v756
        %v1542 = vunpack.c.h.b16 %v756
        %v1543 = vunpack.c.l.b16 %v757
        %v1544 = vunpack.c.h.b16 %v757
        %v1545 = vunpack.c.l.b16 %v758
        %v1546 = vunpack.c.h.b16 %v758
        %v1547 = vunpack.c.l.b16 %v759
        %v1548 = vunpack.c.h.b16 %v759
        %v1549 = vunpack.c.l.b16 %v760
        %v1550 = vunpack.c.h.b16 %v760
        %v1551 = vunpack.c.l.b16 %v761
        %v1552 = vunpack.c.h.b16 %v761
        %v1553 = vunpack.c.l.b16 %v762
        %v1554 = vunpack.c.h.b16 %v762
        %v1555 = vunpack.c.l.b16 %v763
        %v1556 = vunpack.c.h.b16 %v763
        %v1557 = vunpack.c.l.b16 %v764
        %v1558 = vunpack.c.h.b16 %v764
        %v1559 = vunpack.c.l.b16 %v765
        %v1560 = vunpack.c.h.b16 %v765
        %v1561 = vunpack.c.l.b16 %v766
        %v1562 = vunpack.c.h.b16 %v766
        %v1563 = vunpack.c.l.b16 %v767
        %v1564 = vunpack.c.h.b16 %v767
        %v1565 = vunpack.c.l.b16 %v768
        %v1566 = vunpack.c.h.b16 %v768
        %v1567 = vunpack.c.l.b16 %v769
        %v1568 = vunpack.c.h.b16 %v769
        %v1569 = vunpack.c.l.b16 %v770
        %v1570 = vunpack.c.h.b16 %v770
        %v1571 = vunpack.c.l.b16 %v771
        %v1572 = vunpack.c.h.b16 %v771
        %v1573 = vunpack.c.l.b16 %v772
        %v1574 = vunpack.c.h.b16 %v772
        %v1575 = vunpack.c.l.b16 %v773
        %v1576 = vunpack.c.h.b16 %v773
        %v1577 = vunpack.c.l.b16 %v774
        %v1578 = vunpack.c.h.b16 %v774
        %v1579 = vunpack.c.l.b16 %v775
        %v1580 = vunpack.c.h.b16 %v775
        %v1581 = vunpack.c.l.b16 %v776
        %v1582 = vunpack.c.h.b16 %v776
        %v1583 = vunpack.c.l.b16 %v777
        %v1584 = vunpack.c.h.b16 %v777
        %v1585 = vunpack.c.l.b16 %v778
        %v1586 = vunpack.c.h.b16 %v778
        %v1587 = vunpack.c.l.b16 %v779
        %v1588 = vunpack.c.h.b16 %v779
        %v1589 = vunpack.c.l.b16 %v780
        %v1590 = vunpack.c.h.b16 %v780
        %v1591 = vunpack.c.l.b16 %v781
        %v1592 = vunpack.c.h.b16 %v781
        %v1593 = vunpack.c.l.b16 %v782
        %v1594 = vunpack.c.h.b16 %v782
        %v1595 = vunpack.c.l.b16 %v783
        %v1596 = vunpack.c.h.b16 %v783
        %v1597 = vunpack.c.l.b16 %v784
        %v1598 = vunpack.c.h.b16 %v784
        %v1599 = vunpack.c.l.b16 %v785
        %v1600 = vunpack.c.h.b16 %v785
        %v1601 = vunpack.c.l.b16 %v786
        %v1602 = vunpack.c.h.b16 %v786
        %v1603 = vunpack.c.l.b16 %v787
        %v1604 = vunpack.c.h.b16 %v787
        %v1605 = vunpack.c.l.b16 %v788
        %v1606 = vunpack.c.h.b16 %v788
        %v1607 = vunpack.c.l.b16 %v789
        %v1608 = vunpack.c.h.b16 %v789
        %v1609 = vunpack.c.l.b16 %v790
        %v1610 = vunpack.c.h.b16 %v790
        %v1611 = vunpack.c.l.b16 %v791
        %v1612 = vunpack.c.h.b16 %v791
        %v1613 = vunpack.c.l.b16 %v792
        %v1614 = vunpack.c.h.b16 %v792
        %v1615 = vunpack.c.l.b16 %v793
        %v1616 = vunpack.c.h.b16 %v793
        %v1617 = vunpack.c.l.b16 %v794
        %v1618 = vunpack.c.h.b16 %v794
        %v1619 = vunpack.c.l.b16 %v795
        %v1620 = vunpack.c.h.b16 %v795
        %v1621 = vunpack.c.l.b16 %v796
        %v1622 = vunpack.c.h.b16 %v796
        %v1623 = vunpack.c.l.b16 %v797
        %v1624 = vunpack.c.h.b16 %v797
        %v1625 = vunpack.c.l.b16 %v798
        %v1626 = vunpack.c.h.b16 %v798
        %v1627 = vunpack.c.l.b16 %v799
        %v1628 = vunpack.c.h.b16 %v799
        %v1629 = vunpack.c.l.b16 %v800
        %v1630 = vunpack.c.h.b16 %v800
        %v1631 = vunpack.c.l.b16 %v801
        %v1632 = vunpack.c.h.b16 %v801
        %v1633 = vunpack.c.l.b16 %v802
        %v1634 = vunpack.c.h.b16 %v802
        %v1635 = vunpack.c.l.b16 %v803
        %v1636 = vunpack.c.h.b16 %v803
        %v1637 = vunpack.c.l.b16 %v804
        %v1638 = vunpack.c.h.b16 %v804
        %v1639 = vunpack.c.l.b16 %v805
        %v1640 = vunpack.c.h.b16 %v805
        %v1641 = vunpack.c.l.b16 %v806
        %v1642 = vunpack.c.h.b16 %v806
        %v1643 = vunpack.c.l.b16 %v807
        %v1644 = vunpack.c.h.b16 %v807
        %v1645 = vunpack.c.l.b16 %v808
        %v1646 = vunpack.c.h.b16 %v808
        %v1647 = vunpack.c.l.b16 %v809
        %v1648 = vunpack.c.h.b16 %v809
        %v1649 = vunpack.c.l.b16 %v810
        %v1650 = vunpack.c.h.b16 %v810
        %v1651 = vunpack.c.l.b16 %v811
        %v1652 = vunpack.c.h.b16 %v811
        %v1653 = vunpack.c.l.b16 %v812
        %v1654 = vunpack.c.h.b16 %v812
        %v1655 = vunpack.c.l.b16 %v813
        %v1656 = vunpack.c.h.b16 %v813
        %v1657 = vunpack.c.l.b16 %v814
        %v1658 = vunpack.c.h.b16 %v814
        %v1659 = vpack.c.b16 %v1155, %v1147
        %v1660 = vpack.c.b16 %v1156, %v1148
        %v1661 = vpack.c.b16 %v1157, %v1149
        %v1662 = vpack.c.b16 %v1158, %v1150
        %v1663 = vpack.c.b16 %v1159, %v1151
        %v1664 = vpack.c.b16 %v1160, %v1152
        %v1665 = vpack.c.b16 %v1161, %v1153
        %v1666 = vpack.c.b16 %v1162, %v1154
        %v1667 = vpack.c.b16 %v1171, %v1163
        %v1668 = vpack.c.b16 %v1172, %v1164
        %v1669 = vpack.c.b16 %v1173, %v1165
        %v1670 = vpack.c.b16 %v1174, %v1166
        %v1671 = vpack.c.b16 %v1175, %v1167
        %v1672 = vpack.c.b16 %v1176, %v1168
        %v1673 = vpack.c.b16 %v1177, %v1169
        %v1674 = vpack.c.b16 %v1178, %v1170
        %v1675 = vpack.c.b16 %v1187, %v1179
        %v1676 = vpack.c.b16 %v1188, %v1180
        %v1677 = vpack.c.b16 %v1189, %v1181
        %v1678 = vpack.c.b16 %v1190, %v1182
        %v1679 = vpack.c.b16 %v1191, %v1183
        %v1680 = vpack.c.b16 %v1192, %v1184
        %v1681 = vpack.c.b16 %v1193, %v1185
        %v1682 = vpack.c.b16 %v1194, %v1186
        %v1683 = vpack.c.b16 %v1203, %v1195
        %v1684 = vpack.c.b16 %v1204, %v1196
        %v1685 = vpack.c.b16 %v1205, %v1197
        %v1686 = vpack.c.b16 %v1206, %v1198
        %v1687 = vpack.c.b16 %v1207, %v1199
        %v1688 = vpack.c.b16 %v1208, %v1200
        %v1689 = vpack.c.b16 %v1209, %v1201
        %v1690 = vpack.c.b16 %v1210, %v1202
        %v1691 = vpack.c.b16 %v1219, %v1211
        %v1692 = vpack.c.b16 %v1220, %v1212
        %v1693 = vpack.c.b16 %v1221, %v1213
        %v1694 = vpack.c.b16 %v1222, %v1214
        %v1695 = vpack.c.b16 %v1223, %v1215
        %v1696 = vpack.c.b16 %v1224, %v1216
        %v1697 = vpack.c.b16 %v1225, %v1217
        %v1698 = vpack.c.b16 %v1226, %v1218
        %v1699 = vpack.c.b16 %v1235, %v1227
        %v1700 = vpack.c.b16 %v1236, %v1228
        %v1701 = vpack.c.b16 %v1237, %v1229
        %v1702 = vpack.c.b16 %v1238, %v1230
        %v1703 = vpack.c.b16 %v1239, %v1231
        %v1704 = vpack.c.b16 %v1240, %v1232
        %v1705 = vpack.c.b16 %v1241, %v1233
        %v1706 = vpack.c.b16 %v1242, %v1234
        %v1707 = vpack.c.b16 %v1251, %v1243
        %v1708 = vpack.c.b16 %v1252, %v1244
        %v1709 = vpack.c.b16 %v1253, %v1245
        %v1710 = vpack.c.b16 %v1254, %v1246
        %v1711 = vpack.c.b16 %v1255, %v1247
        %v1712 = vpack.c.b16 %v1256, %v1248
        %v1713 = vpack.c.b16 %v1257, %v1249
        %v1714 = vpack.c.b16 %v1258, %v1250
        %v1715 = vpack.c.b16 %v1267, %v1259
        %v1716 = vpack.c.b16 %v1268, %v1260
        %v1717 = vpack.c.b16 %v1269, %v1261
        %v1718 = vpack.c.b16 %v1270, %v1262
        %v1719 = vpack.c.b16 %v1271, %v1263
        %v1720 = vpack.c.b16 %v1272, %v1264
        %v1721 = vpack.c.b16 %v1273, %v1265
        %v1722 = vpack.c.b16 %v1274, %v1266
        %v1723 = vpack.c.b16 %v1283, %v1275
        %v1724 = vpack.c.b16 %v1284, %v1276
        %v1725 = vpack.c.b16 %v1285, %v1277
        %v1726 = vpack.c.b16 %v1286, %v1278
        %v1727 = vpack.c.b16 %v1287, %v1279
        %v1728 = vpack.c.b16 %v1288, %v1280
        %v1729 = vpack.c.b16 %v1289, %v1281
        %v1730 = vpack.c.b16 %v1290, %v1282
        %v1731 = vpack.c.b16 %v1299, %v1291
        %v1732 = vpack.c.b16 %v1300, %v1292
        %v1733 = vpack.c.b16 %v1301, %v1293
        %v1734 = vpack.c.b16 %v1302, %v1294
        %v1735 = vpack.c.b16 %v1303, %v1295
        %v1736 = vpack.c.b16 %v1304, %v1296
        %v1737 = vpack.c.b16 %v1305, %v1297
        %v1738 = vpack.c.b16 %v1306, %v1298
        %v1739 = vpack.c.b16 %v1315, %v1307
        %v1740 = vpack.c.b16 %v1316, %v1308
        %v1741 = vpack.c.b16 %v1317, %v1309
        %v1742 = vpack.c.b16 %v1318, %v1310
        %v1743 = vpack.c.b16 %v1319, %v1311
        %v1744 = vpack.c.b16 %v1320, %v1312
        %v1745 = vpack.c.b16 %v1321, %v1313
        %v1746 = vpack.c.b16 %v1322, %v1314
        %v1747 = vpack.c.b16 %v1331, %v1323
        %v1748 = vpack.c.b16 %v1332, %v1324
        %v1749 = vpack.c.b16 %v1333, %v1325
        %v1750 = vpack.c.b16 %v1334, %v1326
        %v1751 = vpack.c.b16 %v1335, %v1327
        %v1752 = vpack.c.b16 %v1336, %v1328
        %v1753 = vpack.c.b16 %v1337, %v1329
        %v1754 = vpack.c.b16 %v1338, %v1330
        %v1755 = vpack.c.b16 %v1347, %v1339
        %v1756 = vpack.c.b16 %v1348, %v1340
        %v1757 = vpack.c.b16 %v1349, %v1341
        %v1758 = vpack.c.b16 %v1350, %v1342
        %v1759 = vpack.c.b16 %v1351, %v1343
        %v1760 = vpack.c.b16 %v1352, %v1344
        %v1761 = vpack.c.b16 %v1353, %v1345
        %v1762 = vpack.c.b16 %v1354, %v1346
        %v1763 = vpack.c.b16 %v1363, %v1355
        %v1764 = vpack.c.b16 %v1364, %v1356
        %v1765 = vpack.c.b16 %v1365, %v1357
        %v1766 = vpack.c.b16 %v1366, %v1358
        %v1767 = vpack.c.b16 %v1367, %v1359
        %v1768 = vpack.c.b16 %v1368, %v1360
        %v1769 = vpack.c.b16 %v1369, %v1361
        %v1770 = vpack.c.b16 %v1370, %v1362
        %v1771 = vpack.c.b16 %v1379, %v1371
        %v1772 = vpack.c.b16 %v1380, %v1372
        %v1773 = vpack.c.b16 %v1381, %v1373
        %v1774 = vpack.c.b16 %v1382, %v1374
        %v1775 = vpack.c.b16 %v1383, %v1375
        %v1776 = vpack.c.b16 %v1384, %v1376
        %v1777 = vpack.c.b16 %v1385, %v1377
        %v1778 = vpack.c.b16 %v1386, %v1378
        %v1779 = vpack.c.b16 %v1395, %v1387
        %v1780 = vpack.c.b16 %v1396, %v1388
        %v1781 = vpack.c.b16 %v1397, %v1389
        %v1782 = vpack.c.b16 %v1398, %v1390
        %v1783 = vpack.c.b16 %v1399, %v1391
        %v1784 = vpack.c.b16 %v1400, %v1392
        %v1785 = vpack.c.b16 %v1401, %v1393
        %v1786 = vpack.c.b16 %v1402, %v1394
        %v1787 = vpack.c.b16 %v1411, %v1403
        %v1788 = vpack.c.b16 %v1412, %v1404
        %v1789 = vpack.c.b16 %v1413, %v1405
        %v1790 = vpack.c.b16 %v1414, %v1406
        %v1791 = vpack.c.b16 %v1415, %v1407
        %v1792 = vpack.c.b16 %v1416, %v1408
        %v1793 = vpack.c.b16 %v1417, %v1409
        %v1794 = vpack.c.b16 %v1418, %v1410
        %v1795 = vpack.c.b16 %v1427, %v1419
        %v1796 = vpack.c.b16 %v1428, %v1420
        %v1797 = vpack.c.b16 %v1429, %v1421
        %v1798 = vpack.c.b16 %v1430, %v1422
        %v1799 = vpack.c.b16 %v1431, %v1423
        %v1800 = vpack.c.b16 %v1432, %v1424
        %v1801 = vpack.c.b16 %v1433, %v1425
        %v1802 = vpack.c.b16 %v1434, %v1426
        %v1803 = vpack.c.b16 %v1443, %v1435
        %v1804 = vpack.c.b16 %v1444, %v1436
        %v1805 = vpack.c.b16 %v1445, %v1437
        %v1806 = vpack.c.b16 %v1446, %v1438
        %v1807 = vpack.c.b16 %v1447, %v1439
        %v1808 = vpack.c.b16 %v1448, %v1440
        %v1809 = vpack.c.b16 %v1449, %v1441
        %v1810 = vpack.c.b16 %v1450, %v1442
        %v1811 = vpack.c.b16 %v1459, %v1451
        %v1812 = vpack.c.b16 %v1460, %v1452
        %v1813 = vpack.c.b16 %v1461, %v1453
        %v1814 = vpack.c.b16 %v1462, %v1454
        %v1815 = vpack.c.b16 %v1463, %v1455
        %v1816 = vpack.c.b16 %v1464, %v1456
        %v1817 = vpack.c.b16 %v1465, %v1457
        %v1818 = vpack.c.b16 %v1466, %v1458
        %v1819 = vpack.c.b16 %v1475, %v1467
        %v1820 = vpack.c.b16 %v1476, %v1468
        %v1821 = vpack.c.b16 %v1477, %v1469
        %v1822 = vpack.c.b16 %v1478, %v1470
        %v1823 = vpack.c.b16 %v1479, %v1471
        %v1824 = vpack.c.b16 %v1480, %v1472
        %v1825 = vpack.c.b16 %v1481, %v1473
        %v1826 = vpack.c.b16 %v1482, %v1474
        %v1827 = vpack.c.b16 %v1491, %v1483
        %v1828 = vpack.c.b16 %v1492, %v1484
        %v1829 = vpack.c.b16 %v1493, %v1485
        %v1830 = vpack.c.b16 %v1494, %v1486
        %v1831 = vpack.c.b16 %v1495, %v1487
        %v1832 = vpack.c.b16 %v1496, %v1488
        %v1833 = vpack.c.b16 %v1497, %v1489
        %v1834 = vpack.c.b16 %v1498, %v1490
        %v1835 = vpack.c.b16 %v1507, %v1499
        %v1836 = vpack.c.b16 %v1508, %v1500
        %v1837 = vpack.c.b16 %v1509, %v1501
        %v1838 = vpack.c.b16 %v1510, %v1502
        %v1839 = vpack.c.b16 %v1511, %v1503
        %v1840 = vpack.c.b16 %v1512, %v1504
        %v1841 = vpack.c.b16 %v1513, %v1505
        %v1842 = vpack.c.b16 %v1514, %v1506
        %v1843 = vpack.c.b16 %v1523, %v1515
        %v1844 = vpack.c.b16 %v1524, %v1516
        %v1845 = vpack.c.b16 %v1525, %v1517
        %v1846 = vpack.c.b16 %v1526, %v1518
        %v1847 = vpack.c.b16 %v1527, %v1519
        %v1848 = vpack.c.b16 %v1528, %v1520
        %v1849 = vpack.c.b16 %v1529, %v1521
        %v1850 = vpack.c.b16 %v1530, %v1522
        %v1851 = vpack.c.b16 %v1539, %v1531
        %v1852 = vpack.c.b16 %v1540, %v1532
        %v1853 = vpack.c.b16 %v1541, %v1533
        %v1854 = vpack.c.b16 %v1542, %v1534
        %v1855 = vpack.c.b16 %v1543, %v1535
        %v1856 = vpack.c.b16 %v1544, %v1536
        %v1857 = vpack.c.b16 %v1545, %v1537
        %v1858 = vpack.c.b16 %v1546, %v1538
        %v1859 = vpack.c.b16 %v1555, %v1547
        %v1860 = vpack.c.b16 %v1556, %v1548
        %v1861 = vpack.c.b16 %v1557, %v1549
        %v1862 = vpack.c.b16 %v1558, %v1550
        %v1863 = vpack.c.b16 %v1559, %v1551
        %v1864 = vpack.c.b16 %v1560, %v1552
        %v1865 = vpack.c.b16 %v1561, %v1553
        %v1866 = vpack.c.b16 %v1562, %v1554
        %v1867 = vpack.c.b16 %v1571, %v1563
        %v1868 = vpack.c.b16 %v1572, %v1564
        %v1869 = vpack.c.b16 %v1573, %v1565
        %v1870 = vpack.c.b16 %v1574, %v1566
        %v1871 = vpack.c.b16 %v1575, %v1567
        %v1872 = vpack.c.b16 %v1576, %v1568
        %v1873 = vpack.c.b16 %v1577, %v1569
        %v1874 = vpack.c.b16 %v1578, %v1570
        %v1875 = vpack.c.b16 %v1587, %v1579
        %v1876 = vpack.c.b16 %v1588, %v1580
        %v1877 = vpack.c.b16 %v1589, %v1581
        %v1878 = vpack.c.b16 %v1590, %v1582
        %v1879 = vpack.c.b16 %v1591, %v1583
        %v1880 = vpack.c.b16 %v1592, %v1584
        %v1881 = vpack.c.b16 %v1593, %v1585
        %v1882 = vpack.c.b16 %v1594, %v1586
        %v1883 = vpack.c.b16 %v1603, %v1595
        %v1884 = vpack.c.b16 %v1604, %v1596
        %v1885 = vpack.c.b16 %v1605, %v1597
        %v1886 = vpack.c.b16 %v1606, %v1598
        %v1887 = vpack.c.b16 %v1607, %v1599
        %v1888 = vpack.c.b16 %v1608, %v1600
        %v1889 = vpack.c.b16 %v1609, %v1601
        %v1890 = vpack.c.b16 %v1610, %v1602
        %v1891 = vpack.c.b16 %v1619, %v1611
        %v1892 = vpack.c.b16 %v1620, %v1612
        %v1893 = vpack.c.b16 %v1621, %v1613
        %v1894 = vpack.c.b16 %v1622, %v1614
        %v1895 = vpack.c.b16 %v1623, %v1615
        %v1896 = vpack.c.b16 %v1624, %v1616
        %v1897 = vpack.c.b16 %v1625, %v1617
        %v1898 = vpack.c.b16 %v1626, %v1618
        %v1899 = vpack.c.b16 %v1635, %v1627
        %v1900 = vpack.c.b16 %v1636, %v1628
        %v1901 = vpack.c.b16 %v1637, %v1629
        %v1902 = vpack.c.b16 %v1638, %v1630
        %v1903 = vpack.c.b16 %v1639, %v1631
        %v1904 = vpack.c.b16 %v1640, %v1632
        %v1905 = vpack.c.b16 %v1641, %v1633
        %v1906 = vpack.c.b16 %v1642, %v1634
        %v1907 = vpack.c.b16 %v1651, %v1643
        %v1908 = vpack.c.b16 %v1652, %v1644
        %v1909 = vpack.c.b16 %v1653, %v1645
        %v1910 = vpack.c.b16 %v1654, %v1646
        %v1911 = vpack.c.b16 %v1655, %v1647
        %v1912 = vpack.c.b16 %v1656, %v1648
        %v1913 = vpack.c.b16 %v1657, %v1649
        %v1914 = vpack.c.b16 %v1658, %v1650
        %2171 = vmatprep.subr.bf16.mxu0 %v1716
        %2172 = vmatpush1.bf16.msra.mxu0 %v1715
        %2173 = vmatprep.subr.bf16.mxu0 %v1708
        %2174 = vmatpush1.bf16.msra.mxu0 %v1707
        %2175 = vmatprep.subr.bf16.mxu0 %v1700
        %2176 = vmatpush1.bf16.msra.mxu0 %v1699
        %2177 = vmatprep.subr.bf16.mxu0 %v1692
        %2178 = vmatpush1.bf16.msra.mxu0 %v1691
        %2179 = vmatprep.subr.bf16.mxu0 %v1684
        %2180 = vmatpush1.bf16.msra.mxu0 %v1683
        %2181 = vmatprep.subr.bf16.mxu0 %v1676
        %2182 = vmatpush1.bf16.msra.mxu0 %v1675
        %2183 = vmatprep.subr.bf16.mxu0 %v1668
        %2184 = vmatpush1.bf16.msra.mxu0 %v1667
        %2185 = vmatprep.subr.bf16.mxu0 %v1660
        %2186 = vmatpush1.bf16.msra.mxu0 %v1659
        %2187 = vmatprep.subr.bf16.mxu0 %v1780
        %2188 = vmatpush2.bf16.msra.mxu0 %v1779
        %2189 = vmatprep.subr.bf16.mxu0 %v1772
        %2190 = vmatpush2.bf16.msra.mxu0 %v1771
        %2191 = vmatprep.subr.bf16.mxu0 %v1764
        %2192 = vmatpush2.bf16.msra.mxu0 %v1763
        %2193 = vmatprep.subr.bf16.mxu0 %v1756
        %2194 = vmatpush2.bf16.msra.mxu0 %v1755
        %2195 = vmatprep.subr.bf16.mxu0 %v1748
        %2196 = vmatpush2.bf16.msra.mxu0 %v1747
        %2197 = vmatprep.subr.bf16.mxu0 %v1740
        %2198 = vmatpush2.bf16.msra.mxu0 %v1739
        %2199 = vmatprep.subr.bf16.mxu0 %v1732
        %2200 = vmatpush2.bf16.msra.mxu0 %v1731
        %2201 = vmatprep.subr.bf16.mxu0 %v1724
        %2202 = vmatpush2.bf16.msra.mxu0 %v1723
        %2203 = vmatprep.mubr.bf16.mxu0 %v876
        %2204 = vmatmul.mubr.bf16.gmra.mxu0 %v875
        %v2205 = vpop.f32.mrf.mxu0
        %v2206 = vadd.f32 %v820, %v2205
        %v2207 = vpop.f32.mrf.mxu0
        %v2208 = vadd.f32 %v824, %v2207
        %v2209 = vpop.f32.mrf.mxu0
        %v2210 = vadd.f32 %v820, %v2209
        %v2211 = vpop.f32.mrf.mxu0
        %v2212 = vadd.f32 %v824, %v2211
        %2213 = vmatprep.mubr.bf16.mxu0 %v880
        %2214 = vmatmul.mubr.bf16.gmra.mxu0 %v879
        %v2215 = vpop.f32.mrf.mxu0
        %v2216 = vadd.f32 %v820, %v2215
        %v2217 = vpop.f32.mrf.mxu0
        %v2218 = vadd.f32 %v824, %v2217
        %v2219 = vpop.f32.mrf.mxu0
        %v2220 = vpop.f32.mrf.mxu0
        %2221 = vdwg.mxu0
        %2222 = vmatprep.subr.bf16.mxu0 %v1844
        %2223 = vmatpush1.bf16.msra.mxu0 %v1843
        %2224 = vmatprep.subr.bf16.mxu0 %v1836
        %2225 = vmatpush1.bf16.msra.mxu0 %v1835
        %2226 = vmatprep.subr.bf16.mxu0 %v1828
        %2227 = vmatpush1.bf16.msra.mxu0 %v1827
        %2228 = vmatprep.subr.bf16.mxu0 %v1820
        %2229 = vmatpush1.bf16.msra.mxu0 %v1819
        %2230 = vmatprep.subr.bf16.mxu0 %v1812
        %2231 = vmatpush1.bf16.msra.mxu0 %v1811
        %2232 = vmatprep.subr.bf16.mxu0 %v1804
        %2233 = vmatpush1.bf16.msra.mxu0 %v1803
        %2234 = vmatprep.subr.bf16.mxu0 %v1796
        %2235 = vmatpush1.bf16.msra.mxu0 %v1795
        %2236 = vmatprep.subr.bf16.mxu0 %v1788
        %2237 = vmatpush1.bf16.msra.mxu0 %v1787
        %2238 = vmatprep.subr.bf16.mxu0 %v1908
        %2239 = vmatpush2.bf16.msra.mxu0 %v1907
        %2240 = vmatprep.subr.bf16.mxu0 %v1900
        %2241 = vmatpush2.bf16.msra.mxu0 %v1899
        %2242 = vmatprep.subr.bf16.mxu0 %v1892
        %2243 = vmatpush2.bf16.msra.mxu0 %v1891
        %2244 = vmatprep.subr.bf16.mxu0 %v1884
        %2245 = vmatpush2.bf16.msra.mxu0 %v1883
        %2246 = vmatprep.subr.bf16.mxu0 %v1876
        %2247 = vmatpush2.bf16.msra.mxu0 %v1875
        %2248 = vmatprep.subr.bf16.mxu0 %v1868
        %2249 = vmatpush2.bf16.msra.mxu0 %v1867
        %2250 = vmatprep.subr.bf16.mxu0 %v1860
        %2251 = vmatpush2.bf16.msra.mxu0 %v1859
        %2252 = vmatprep.subr.bf16.mxu0 %v1852
        %2253 = vmatpush2.bf16.msra.mxu0 %v1851
        %2254 = vmatprep.mubr.bf16.mxu0 %v878
        %2255 = vmatmul.mubr.bf16.gmra.mxu0 %v877
        %v2256 = vpop.f32.mrf.mxu0
        %v2257 = vadd.f32 %v2206, %v2256
        %v2258 = vpop.f32.mrf.mxu0
        %v2259 = vadd.f32 %v2208, %v2258
        %v2260 = vpop.f32.mrf.mxu0
        %v2261 = vadd.f32 %v2210, %v2260
        %v2262 = vpop.f32.mrf.mxu0
        %v2263 = vadd.f32 %v2212, %v2262
        %2264 = vmatprep.mubr.bf16.mxu0 %v882
        %2265 = vmatmul.mubr.bf16.gmra.mxu0 %v881
        %v2266 = vpop.f32.mrf.mxu0
        %v2267 = vadd.f32 %v2216, %v2266
        %v2268 = vpop.f32.mrf.mxu0
        %v2269 = vadd.f32 %v2218, %v2268
        %v2270 = vpop.f32.mrf.mxu0
        %v2271 = vpop.f32.mrf.mxu0
        %2272 = vdwg.mxu0
        %2273 = vmatprep.subr.bf16.mxu0 %v1718
        %2274 = vmatpush1.bf16.msra.mxu0 %v1717
        %2275 = vmatprep.subr.bf16.mxu0 %v1710
        %2276 = vmatpush1.bf16.msra.mxu0 %v1709
        %2277 = vmatprep.subr.bf16.mxu0 %v1702
        %2278 = vmatpush1.bf16.msra.mxu0 %v1701
        %2279 = vmatprep.subr.bf16.mxu0 %v1694
        %2280 = vmatpush1.bf16.msra.mxu0 %v1693
        %2281 = vmatprep.subr.bf16.mxu0 %v1686
        %2282 = vmatpush1.bf16.msra.mxu0 %v1685
        %2283 = vmatprep.subr.bf16.mxu0 %v1678
        %2284 = vmatpush1.bf16.msra.mxu0 %v1677
        %2285 = vmatprep.subr.bf16.mxu0 %v1670
        %2286 = vmatpush1.bf16.msra.mxu0 %v1669
        %2287 = vmatprep.subr.bf16.mxu0 %v1662
        %2288 = vmatpush1.bf16.msra.mxu0 %v1661
        %2289 = vmatprep.subr.bf16.mxu0 %v1782
        %2290 = vmatpush2.bf16.msra.mxu0 %v1781
        %2291 = vmatprep.subr.bf16.mxu0 %v1774
        %2292 = vmatpush2.bf16.msra.mxu0 %v1773
        %2293 = vmatprep.subr.bf16.mxu0 %v1766
        %2294 = vmatpush2.bf16.msra.mxu0 %v1765
        %2295 = vmatprep.subr.bf16.mxu0 %v1758
        %2296 = vmatpush2.bf16.msra.mxu0 %v1757
        %2297 = vmatprep.subr.bf16.mxu0 %v1750
        %2298 = vmatpush2.bf16.msra.mxu0 %v1749
        %2299 = vmatprep.subr.bf16.mxu0 %v1742
        %2300 = vmatpush2.bf16.msra.mxu0 %v1741
        %2301 = vmatprep.subr.bf16.mxu0 %v1734
        %2302 = vmatpush2.bf16.msra.mxu0 %v1733
        %2303 = vmatprep.subr.bf16.mxu0 %v1726
        %2304 = vmatpush2.bf16.msra.mxu0 %v1725
        %2305 = vmatprep.mubr.bf16.mxu0 %v876
        %2306 = vmatmul.mubr.bf16.gmra.mxu0 %v875
        %v2307 = vpop.f32.mrf.mxu0
        %v2308 = vadd.f32 %v828, %v2307
        %v2309 = vpop.f32.mrf.mxu0
        %v2310 = vadd.f32 %v832, %v2309
        %v2311 = vpop.f32.mrf.mxu0
        %v2312 = vadd.f32 %v828, %v2311
        %v2313 = vpop.f32.mrf.mxu0
        %v2314 = vadd.f32 %v832, %v2313
        %2315 = vmatprep.mubr.bf16.mxu0 %v880
        %2316 = vmatmul.mubr.bf16.gmra.mxu0 %v879
        %v2317 = vpop.f32.mrf.mxu0
        %v2318 = vadd.f32 %v828, %v2317
        %v2319 = vpop.f32.mrf.mxu0
        %v2320 = vadd.f32 %v832, %v2319
        %v2321 = vpop.f32.mrf.mxu0
        %v2322 = vpop.f32.mrf.mxu0
        %2323 = vdwg.mxu0
        %2324 = vmatprep.subr.bf16.mxu0 %v1846
        %2325 = vmatpush1.bf16.msra.mxu0 %v1845
        %2326 = vmatprep.subr.bf16.mxu0 %v1838
        %2327 = vmatpush1.bf16.msra.mxu0 %v1837
        %2328 = vmatprep.subr.bf16.mxu0 %v1830
        %2329 = vmatpush1.bf16.msra.mxu0 %v1829
        %2330 = vmatprep.subr.bf16.mxu0 %v1822
        %2331 = vmatpush1.bf16.msra.mxu0 %v1821
        %2332 = vmatprep.subr.bf16.mxu0 %v1814
        %2333 = vmatpush1.bf16.msra.mxu0 %v1813
        %2334 = vmatprep.subr.bf16.mxu0 %v1806
        %2335 = vmatpush1.bf16.msra.mxu0 %v1805
        %2336 = vmatprep.subr.bf16.mxu0 %v1798
        %2337 = vmatpush1.bf16.msra.mxu0 %v1797
        %2338 = vmatprep.subr.bf16.mxu0 %v1790
        %2339 = vmatpush1.bf16.msra.mxu0 %v1789
        %2340 = vmatprep.subr.bf16.mxu0 %v1910
        %2341 = vmatpush2.bf16.msra.mxu0 %v1909
        %2342 = vmatprep.subr.bf16.mxu0 %v1902
        %2343 = vmatpush2.bf16.msra.mxu0 %v1901
        %2344 = vmatprep.subr.bf16.mxu0 %v1894
        %2345 = vmatpush2.bf16.msra.mxu0 %v1893
        %2346 = vmatprep.subr.bf16.mxu0 %v1886
        %2347 = vmatpush2.bf16.msra.mxu0 %v1885
        %2348 = vmatprep.subr.bf16.mxu0 %v1878
        %2349 = vmatpush2.bf16.msra.mxu0 %v1877
        %2350 = vmatprep.subr.bf16.mxu0 %v1870
        %2351 = vmatpush2.bf16.msra.mxu0 %v1869
        %2352 = vmatprep.subr.bf16.mxu0 %v1862
        %2353 = vmatpush2.bf16.msra.mxu0 %v1861
        %2354 = vmatprep.subr.bf16.mxu0 %v1854
        %2355 = vmatpush2.bf16.msra.mxu0 %v1853
        %2356 = vmatprep.mubr.bf16.mxu0 %v878
        %2357 = vmatmul.mubr.bf16.gmra.mxu0 %v877
        %v2358 = vpop.f32.mrf.mxu0
        %v2359 = vadd.f32 %v2308, %v2358
        %v2360 = vpop.f32.mrf.mxu0
        %v2361 = vadd.f32 %v2310, %v2360
        %v2362 = vpop.f32.mrf.mxu0
        %v2363 = vadd.f32 %v2312, %v2362
        %v2364 = vpop.f32.mrf.mxu0
        %v2365 = vadd.f32 %v2314, %v2364
        %2366 = vmatprep.mubr.bf16.mxu0 %v882
        %2367 = vmatmul.mubr.bf16.gmra.mxu0 %v881
        %v2368 = vpop.f32.mrf.mxu0
        %v2369 = vadd.f32 %v2318, %v2368
        %v2370 = vpop.f32.mrf.mxu0
        %v2371 = vadd.f32 %v2320, %v2370
        %v2372 = vpop.f32.mrf.mxu0
        %v2373 = vpop.f32.mrf.mxu0
        %2374 = vdwg.mxu0
        %2375 = vmatprep.subr.bf16.mxu0 %v1720
        %2376 = vmatpush1.bf16.msra.mxu0 %v1719
        %2377 = vmatprep.subr.bf16.mxu0 %v1712
        %2378 = vmatpush1.bf16.msra.mxu0 %v1711
        %2379 = vmatprep.subr.bf16.mxu0 %v1704
        %2380 = vmatpush1.bf16.msra.mxu0 %v1703
        %2381 = vmatprep.subr.bf16.mxu0 %v1696
        %2382 = vmatpush1.bf16.msra.mxu0 %v1695
        %2383 = vmatprep.subr.bf16.mxu0 %v1688
        %2384 = vmatpush1.bf16.msra.mxu0 %v1687
        %2385 = vmatprep.subr.bf16.mxu0 %v1680
        %2386 = vmatpush1.bf16.msra.mxu0 %v1679
        %2387 = vmatprep.subr.bf16.mxu0 %v1672
        %2388 = vmatpush1.bf16.msra.mxu0 %v1671
        %2389 = vmatprep.subr.bf16.mxu0 %v1664
        %2390 = vmatpush1.bf16.msra.mxu0 %v1663
        %2391 = vmatprep.subr.bf16.mxu0 %v1784
        %2392 = vmatpush2.bf16.msra.mxu0 %v1783
        %2393 = vmatprep.subr.bf16.mxu0 %v1776
        %2394 = vmatpush2.bf16.msra.mxu0 %v1775
        %2395 = vmatprep.subr.bf16.mxu0 %v1768
        %2396 = vmatpush2.bf16.msra.mxu0 %v1767
        %2397 = vmatprep.subr.bf16.mxu0 %v1760
        %2398 = vmatpush2.bf16.msra.mxu0 %v1759
        %2399 = vmatprep.subr.bf16.mxu0 %v1752
        %2400 = vmatpush2.bf16.msra.mxu0 %v1751
        %2401 = vmatprep.subr.bf16.mxu0 %v1744
        %2402 = vmatpush2.bf16.msra.mxu0 %v1743
        %2403 = vmatprep.subr.bf16.mxu0 %v1736
        %2404 = vmatpush2.bf16.msra.mxu0 %v1735
        %2405 = vmatprep.subr.bf16.mxu0 %v1728
        %2406 = vmatpush2.bf16.msra.mxu0 %v1727
        %2407 = vmatprep.mubr.bf16.mxu0 %v876
        %2408 = vmatmul.mubr.bf16.gmra.mxu0 %v875
        %v2409 = vpop.f32.mrf.mxu0
        %v2410 = vadd.f32 %v836, %v2409
        %v2411 = vpop.f32.mrf.mxu0
        %v2412 = vadd.f32 %v840, %v2411
        %v2413 = vpop.f32.mrf.mxu0
        %v2414 = vadd.f32 %v836, %v2413
        %v2415 = vpop.f32.mrf.mxu0
        %v2416 = vadd.f32 %v840, %v2415
        %2417 = vmatprep.mubr.bf16.mxu0 %v880
        %2418 = vmatmul.mubr.bf16.gmra.mxu0 %v879
        %v2419 = vpop.f32.mrf.mxu0
        %v2420 = vadd.f32 %v836, %v2419
        %v2421 = vpop.f32.mrf.mxu0
        %v2422 = vadd.f32 %v840, %v2421
        %v2423 = vpop.f32.mrf.mxu0
        %v2424 = vpop.f32.mrf.mxu0
        %2425 = vdwg.mxu0
        %2426 = vmatprep.subr.bf16.mxu0 %v1848
        %2427 = vmatpush1.bf16.msra.mxu0 %v1847
        %2428 = vmatprep.subr.bf16.mxu0 %v1840
        %2429 = vmatpush1.bf16.msra.mxu0 %v1839
        %2430 = vmatprep.subr.bf16.mxu0 %v1832
        %2431 = vmatpush1.bf16.msra.mxu0 %v1831
        %2432 = vmatprep.subr.bf16.mxu0 %v1824
        %2433 = vmatpush1.bf16.msra.mxu0 %v1823
        %2434 = vmatprep.subr.bf16.mxu0 %v1816
        %2435 = vmatpush1.bf16.msra.mxu0 %v1815
        %2436 = vmatprep.subr.bf16.mxu0 %v1808
        %2437 = vmatpush1.bf16.msra.mxu0 %v1807
        %2438 = vmatprep.subr.bf16.mxu0 %v1800
        %2439 = vmatpush1.bf16.msra.mxu0 %v1799
        %2440 = vmatprep.subr.bf16.mxu0 %v1792
        %2441 = vmatpush1.bf16.msra.mxu0 %v1791
        %2442 = vmatprep.subr.bf16.mxu0 %v1912
        %2443 = vmatpush2.bf16.msra.mxu0 %v1911
        %2444 = vmatprep.subr.bf16.mxu0 %v1904
        %2445 = vmatpush2.bf16.msra.mxu0 %v1903
        %2446 = vmatprep.subr.bf16.mxu0 %v1896
        %2447 = vmatpush2.bf16.msra.mxu0 %v1895
        %2448 = vmatprep.subr.bf16.mxu0 %v1888
        %2449 = vmatpush2.bf16.msra.mxu0 %v1887
        %2450 = vmatprep.subr.bf16.mxu0 %v1880
        %2451 = vmatpush2.bf16.msra.mxu0 %v1879
        %2452 = vmatprep.subr.bf16.mxu0 %v1872
        %2453 = vmatpush2.bf16.msra.mxu0 %v1871
        %2454 = vmatprep.subr.bf16.mxu0 %v1864
        %2455 = vmatpush2.bf16.msra.mxu0 %v1863
        %2456 = vmatprep.subr.bf16.mxu0 %v1856
        %2457 = vmatpush2.bf16.msra.mxu0 %v1855
        %2458 = vmatprep.mubr.bf16.mxu0 %v878
        %2459 = vmatmul.mubr.bf16.gmra.mxu0 %v877
        %v2460 = vpop.f32.mrf.mxu0
        %v2461 = vadd.f32 %v2410, %v2460
        %v2462 = vpop.f32.mrf.mxu0
        %v2463 = vadd.f32 %v2412, %v2462
        %v2464 = vpop.f32.mrf.mxu0
        %v2465 = vadd.f32 %v2414, %v2464
        %v2466 = vpop.f32.mrf.mxu0
        %v2467 = vadd.f32 %v2416, %v2466
        %2468 = vmatprep.mubr.bf16.mxu0 %v882
        %2469 = vmatmul.mubr.bf16.gmra.mxu0 %v881
        %v2470 = vpop.f32.mrf.mxu0
        %v2471 = vadd.f32 %v2420, %v2470
        %v2472 = vpop.f32.mrf.mxu0
        %v2473 = vadd.f32 %v2422, %v2472
        %v2474 = vpop.f32.mrf.mxu0
        %v2475 = vpop.f32.mrf.mxu0
        %2476 = vdwg.mxu0
        %2477 = vmatprep.subr.bf16.mxu0 %v1722
        %2478 = vmatpush1.bf16.msra.mxu0 %v1721
        %2479 = vmatprep.subr.bf16.mxu0 %v1714
        %2480 = vmatpush1.bf16.msra.mxu0 %v1713
        %2481 = vmatprep.subr.bf16.mxu0 %v1706
        %2482 = vmatpush1.bf16.msra.mxu0 %v1705
        %2483 = vmatprep.subr.bf16.mxu0 %v1698
        %2484 = vmatpush1.bf16.msra.mxu0 %v1697
        %2485 = vmatprep.subr.bf16.mxu0 %v1690
        %2486 = vmatpush1.bf16.msra.mxu0 %v1689
        %2487 = vmatprep.subr.bf16.mxu0 %v1682
        %2488 = vmatpush1.bf16.msra.mxu0 %v1681
        %2489 = vmatprep.subr.bf16.mxu0 %v1674
        %2490 = vmatpush1.bf16.msra.mxu0 %v1673
        %2491 = vmatprep.subr.bf16.mxu0 %v1666
        %2492 = vmatpush1.bf16.msra.mxu0 %v1665
        %2493 = vmatprep.subr.bf16.mxu0 %v1786
        %2494 = vmatpush2.bf16.msra.mxu0 %v1785
        %2495 = vmatprep.subr.bf16.mxu0 %v1778
        %2496 = vmatpush2.bf16.msra.mxu0 %v1777
        %2497 = vmatprep.subr.bf16.mxu0 %v1770
        %2498 = vmatpush2.bf16.msra.mxu0 %v1769
        %2499 = vmatprep.subr.bf16.mxu0 %v1762
        %2500 = vmatpush2.bf16.msra.mxu0 %v1761
        %2501 = vmatprep.subr.bf16.mxu0 %v1754
        %2502 = vmatpush2.bf16.msra.mxu0 %v1753
        %2503 = vmatprep.subr.bf16.mxu0 %v1746
        %2504 = vmatpush2.bf16.msra.mxu0 %v1745
        %2505 = vmatprep.subr.bf16.mxu0 %v1738
        %2506 = vmatpush2.bf16.msra.mxu0 %v1737
        %2507 = vmatprep.subr.bf16.mxu0 %v1730
        %2508 = vmatpush2.bf16.msra.mxu0 %v1729
        %2509 = vmatprep.mubr.bf16.mxu0 %v876
        %2510 = vmatmul.mubr.bf16.gmra.mxu0 %v875
        %v2511 = vpop.f32.mrf.mxu0
        %v2512 = vadd.f32 %v844, %v2511
        %v2513 = vpop.f32.mrf.mxu0
        %v2514 = vadd.f32 %v848, %v2513
        %v2515 = vpop.f32.mrf.mxu0
        %v2516 = vadd.f32 %v844, %v2515
        %v2517 = vpop.f32.mrf.mxu0
        %v2518 = vadd.f32 %v848, %v2517
        %2519 = vmatprep.mubr.bf16.mxu0 %v880
        %2520 = vmatmul.mubr.bf16.gmra.mxu0 %v879
        %v2521 = vpop.f32.mrf.mxu0
        %v2522 = vadd.f32 %v844, %v2521
        %v2523 = vpop.f32.mrf.mxu0
        %v2524 = vadd.f32 %v848, %v2523
        %v2525 = vpop.f32.mrf.mxu0
        %v2526 = vpop.f32.mrf.mxu0
        %2527 = vdwg.mxu0
        %2528 = vmatprep.subr.bf16.mxu0 %v1850
        %2529 = vmatpush1.bf16.msra.mxu0 %v1849
        %2530 = vmatprep.subr.bf16.mxu0 %v1842
        %2531 = vmatpush1.bf16.msra.mxu0 %v1841
        %2532 = vmatprep.subr.bf16.mxu0 %v1834
        %2533 = vmatpush1.bf16.msra.mxu0 %v1833
        %2534 = vmatprep.subr.bf16.mxu0 %v1826
        %2535 = vmatpush1.bf16.msra.mxu0 %v1825
        %2536 = vmatprep.subr.bf16.mxu0 %v1818
        %2537 = vmatpush1.bf16.msra.mxu0 %v1817
        %2538 = vmatprep.subr.bf16.mxu0 %v1810
        %2539 = vmatpush1.bf16.msra.mxu0 %v1809
        %2540 = vmatprep.subr.bf16.mxu0 %v1802
        %2541 = vmatpush1.bf16.msra.mxu0 %v1801
        %2542 = vmatprep.subr.bf16.mxu0 %v1794
        %2543 = vmatpush1.bf16.msra.mxu0 %v1793
        %2544 = vmatprep.subr.bf16.mxu0 %v1914
        %2545 = vmatpush2.bf16.msra.mxu0 %v1913
        %2546 = vmatprep.subr.bf16.mxu0 %v1906
        %2547 = vmatpush2.bf16.msra.mxu0 %v1905
        %2548 = vmatprep.subr.bf16.mxu0 %v1898
        %2549 = vmatpush2.bf16.msra.mxu0 %v1897
        %2550 = vmatprep.subr.bf16.mxu0 %v1890
        %2551 = vmatpush2.bf16.msra.mxu0 %v1889
        %2552 = vmatprep.subr.bf16.mxu0 %v1882
        %2553 = vmatpush2.bf16.msra.mxu0 %v1881
        %2554 = vmatprep.subr.bf16.mxu0 %v1874
        %2555 = vmatpush2.bf16.msra.mxu0 %v1873
        %2556 = vmatprep.subr.bf16.mxu0 %v1866
        %2557 = vmatpush2.bf16.msra.mxu0 %v1865
        %2558 = vmatprep.subr.bf16.mxu0 %v1858
        %2559 = vmatpush2.bf16.msra.mxu0 %v1857
        %2560 = vmatprep.mubr.bf16.mxu0 %v878
        %2561 = vmatmul.mubr.bf16.gmra.mxu0 %v877
        %v2562 = vpop.f32.mrf.mxu0
        %v2563 = vadd.f32 %v2512, %v2562
        %v2564 = vpop.f32.mrf.mxu0
        %v2565 = vadd.f32 %v2514, %v2564
        %v2566 = vpop.f32.mrf.mxu0
        %v2567 = vadd.f32 %v2516, %v2566
        %v2568 = vpop.f32.mrf.mxu0
        %v2569 = vadd.f32 %v2518, %v2568
        %2570 = vmatprep.mubr.bf16.mxu0 %v882
        %2571 = vmatmul.mubr.bf16.gmra.mxu0 %v881
        %v2572 = vpop.f32.mrf.mxu0
        %v2573 = vadd.f32 %v2522, %v2572
        %v2574 = vpop.f32.mrf.mxu0
        %v2575 = vadd.f32 %v2524, %v2574
        %v2576 = vpop.f32.mrf.mxu0
        %v2577 = vpop.f32.mrf.mxu0
        %2578 = vdwg.mxu0
        %v2579 = vmax.f32 %v2257, 0.0
        %v2580 = vmax.f32 %v2259, 0.0
        %v2581 = vmax.f32 %v2359, 0.0
        %v2582 = vmax.f32 %v2361, 0.0
        %v2583 = vmax.f32 %v2461, 0.0
        %v2584 = vmax.f32 %v2463, 0.0
        %v2585 = vmax.f32 %v2563, 0.0
        %v2586 = vmax.f32 %v2565, 0.0
        %v2587 = vmax.f32 %v2261, 0.0
        %v2588 = vmax.f32 %v2263, 0.0
        %v2589 = vmax.f32 %v2363, 0.0
        %v2590 = vmax.f32 %v2365, 0.0
        %v2591 = vmax.f32 %v2465, 0.0
        %v2592 = vmax.f32 %v2467, 0.0
        %v2593 = vmax.f32 %v2567, 0.0
        %v2594 = vmax.f32 %v2569, 0.0
        %v2595 = vmax.f32 %v2267, 0.0
        %v2596 = vmax.f32 %v2269, 0.0
        %v2597 = vmax.f32 %v2369, 0.0
        %v2598 = vmax.f32 %v2371, 0.0
        %v2599 = vmax.f32 %v2471, 0.0
        %v2600 = vmax.f32 %v2473, 0.0
        %v2601 = vmax.f32 %v2573, 0.0
        %v2602 = vmax.f32 %v2575, 0.0
        %v2603 = vpack.c.bf16 %v2587, %v2579
        %v2604 = vpack.c.bf16 %v2588, %v2580
        %v2605 = vpack.c.bf16 %v2589, %v2581
        %v2606 = vpack.c.bf16 %v2590, %v2582
        %v2607 = vpack.c.bf16 %v2591, %v2583
        %v2608 = vpack.c.bf16 %v2592, %v2584
        %v2609 = vpack.c.bf16 %v2593, %v2585
        %v2610 = vpack.c.bf16 %v2594, %v2586
        %v2611 = vpack.c.bf16 %v2595, %v2595
        %v2612 = vpack.c.bf16 %v2596, %v2596
        %v2613 = vpack.c.bf16 %v2597, %v2597
        %v2614 = vpack.c.bf16 %v2598, %v2598
        %v2615 = vpack.c.bf16 %v2599, %v2599
        %v2616 = vpack.c.bf16 %v2600, %v2600
        %v2617 = vpack.c.bf16 %v2601, %v2601
        %v2618 = vpack.c.bf16 %v2602, %v2602
        %v2619 = vld [vmem:[%s528] sm:$0xf]
        %v2620 = vld [vmem:[%s528 + $0x4] sm:$0xf]
        %v2621 = vld [vmem:[%s528 + $0x8] sm:$0xf]
        %v2622 = vld [vmem:[%s528 + $0xc] sm:$0xf]
        %v2623 = vld [vmem:[%s528 + $0x10] sm:$0xf]
        %v2624 = vld [vmem:[%s528 + $0x14] sm:$0xf]
        %v2625 = vld [vmem:[%s528 + $0x18] sm:$0xf]
        %v2626 = vld [vmem:[%s528 + $0x1c] sm:$0xf]
        %v2627 = vld [vmem:[%s528 + $0x20] sm:$0xf]
        %v2628 = vld [vmem:[%s528 + $0x24] sm:$0xf]
        %v2629 = vld [vmem:[%s528 + $0x28] sm:$0xf]
        %v2630 = vld [vmem:[%s528 + $0x2c] sm:$0xf]
        %v2631 = vld [vmem:[%s528 + $0x30] sm:$0xf]
        %v2632 = vld [vmem:[%s528 + $0x34] sm:$0xf]
        %v2633 = vld [vmem:[%s528 + $0x38] sm:$0xf]
        %v2634 = vld [vmem:[%s528 + $0x3c] sm:$0xf]
        %v2635 = vld [vmem:[%s528 + $0x40] sm:$0xf]
        %v2636 = vld [vmem:[%s528 + $0x44] sm:$0xf]
        %v2637 = vld [vmem:[%s528 + $0x48] sm:$0xf]
        %v2638 = vld [vmem:[%s528 + $0x4c] sm:$0xf]
        %v2639 = vld [vmem:[%s528 + $0x50] sm:$0xf]
        %v2640 = vld [vmem:[%s528 + $0x54] sm:$0xf]
        %v2641 = vld [vmem:[%s528 + $0x58] sm:$0xf]
        %v2642 = vld [vmem:[%s528 + $0x5c] sm:$0xf]
        %v2643 = vld [vmem:[%s528 + $0x60] sm:$0xf]
        %v2644 = vld [vmem:[%s528 + $0x64] sm:$0xf]
        %v2645 = vld [vmem:[%s528 + $0x68] sm:$0xf]
        %v2646 = vld [vmem:[%s528 + $0x6c] sm:$0xf]
        %v2647 = vld [vmem:[%s528 + $0x70] sm:$0xf]
        %v2648 = vld [vmem:[%s528 + $0x74] sm:$0xf]
        %v2649 = vld [vmem:[%s528 + $0x78] sm:$0xf]
        %v2650 = vld [vmem:[%s528 + $0x7c] sm:$0xf]
        %v2651 = vld [vmem:[%s528 + $0x80] sm:$0xf]
        %v2652 = vld [vmem:[%s528 + $0x84] sm:$0xf]
        %v2653 = vld [vmem:[%s528 + $0x88] sm:$0xf]
        %v2654 = vld [vmem:[%s528 + $0x8c] sm:$0xf]
        %v2655 = vld [vmem:[%s528 + $0x90] sm:$0xf]
        %v2656 = vld [vmem:[%s528 + $0x94] sm:$0xf]
        %v2657 = vld [vmem:[%s528 + $0x98] sm:$0xf]
        %v2658 = vld [vmem:[%s528 + $0x9c] sm:$0xf]
        %v2659 = vld [vmem:[%s528 + $0xa0] sm:$0xf]
        %v2660 = vld [vmem:[%s528 + $0xa4] sm:$0xf]
        %v2661 = vld [vmem:[%s528 + $0xa8] sm:$0xf]
        %v2662 = vld [vmem:[%s528 + $0xac] sm:$0xf]
        %v2663 = vld [vmem:[%s528 + $0xb0] sm:$0xf]
        %v2664 = vld [vmem:[%s528 + $0xb4] sm:$0xf]
        %v2665 = vld [vmem:[%s528 + $0xb8] sm:$0xf]
        %v2666 = vld [vmem:[%s528 + $0xbc] sm:$0xf]
        %v2667 = vld [vmem:[%s528 + $0xc0] sm:$0xf]
        %v2668 = vld [vmem:[%s528 + $0xc4] sm:$0xf]
        %v2669 = vld [vmem:[%s528 + $0xc8] sm:$0xf]
        %v2670 = vld [vmem:[%s528 + $0xcc] sm:$0xf]
        %v2671 = vld [vmem:[%s528 + $0xd0] sm:$0xf]
        %v2672 = vld [vmem:[%s528 + $0xd4] sm:$0xf]
        %v2673 = vld [vmem:[%s528 + $0xd8] sm:$0xf]
        %v2674 = vld [vmem:[%s528 + $0xdc] sm:$0xf]
        %v2675 = vld [vmem:[%s528 + $0xe0] sm:$0xf]
        %v2676 = vld [vmem:[%s528 + $0xe4] sm:$0xf]
        %v2677 = vld [vmem:[%s528 + $0xe8] sm:$0xf]
        %v2678 = vld [vmem:[%s528 + $0xec] sm:$0xf]
        %v2679 = vld [vmem:[%s528 + $0xf0] sm:$0xf]
        %v2680 = vld [vmem:[%s528 + $0xf4] sm:$0xf]
        %v2681 = vld [vmem:[%s528 + $0xf8] sm:$0xf]
        %v2682 = vld [vmem:[%s528 + $0xfc] sm:$0xf]
        %v2683 = vld [vmem:[%s528 + $0x100] sm:$0xf]
        %v2684 = vld [vmem:[%s528 + $0x104] sm:$0xf]
        %v2685 = vld [vmem:[%s528 + $0x108] sm:$0xf]
        %v2686 = vld [vmem:[%s528 + $0x10c] sm:$0xf]
        %v2687 = vld [vmem:[%s528 + $0x110] sm:$0xf]
        %v2688 = vld [vmem:[%s528 + $0x114] sm:$0xf]
        %v2689 = vld [vmem:[%s528 + $0x118] sm:$0xf]
        %v2690 = vld [vmem:[%s528 + $0x11c] sm:$0xf]
        %v2691 = vld [vmem:[%s528 + $0x120] sm:$0xf]
        %v2692 = vld [vmem:[%s528 + $0x124] sm:$0xf]
        %v2693 = vld [vmem:[%s528 + $0x128] sm:$0xf]
        %v2694 = vld [vmem:[%s528 + $0x12c] sm:$0xf]
        %v2695 = vld [vmem:[%s528 + $0x130] sm:$0xf]
        %v2696 = vld [vmem:[%s528 + $0x134] sm:$0xf]
        %v2697 = vld [vmem:[%s528 + $0x138] sm:$0xf]
        %v2698 = vld [vmem:[%s528 + $0x13c] sm:$0xf]
        %v2699 = vld [vmem:[%s528 + $0x140] sm:$0xf]
        %v2700 = vld [vmem:[%s528 + $0x144] sm:$0xf]
        %v2701 = vld [vmem:[%s528 + $0x148] sm:$0xf]
        %v2702 = vld [vmem:[%s528 + $0x14c] sm:$0xf]
        %v2703 = vld [vmem:[%s528 + $0x150] sm:$0xf]
        %v2704 = vld [vmem:[%s528 + $0x154] sm:$0xf]
        %v2705 = vld [vmem:[%s528 + $0x158] sm:$0xf]
        %v2706 = vld [vmem:[%s528 + $0x15c] sm:$0xf]
        %v2707 = vld [vmem:[%s528 + $0x160] sm:$0xf]
        %v2708 = vld [vmem:[%s528 + $0x164] sm:$0xf]
        %v2709 = vld [vmem:[%s528 + $0x168] sm:$0xf]
        %v2710 = vld [vmem:[%s528 + $0x16c] sm:$0xf]
        %v2711 = vld [vmem:[%s528 + $0x170] sm:$0xf]
        %v2712 = vld [vmem:[%s528 + $0x174] sm:$0xf]
        %v2713 = vld [vmem:[%s528 + $0x178] sm:$0xf]
        %v2714 = vld [vmem:[%s528 + $0x17c] sm:$0xf]
        %v2715 = vld [vmem:[%s528 + $0x180] sm:$0xf]
        %v2716 = vld [vmem:[%s528 + $0x184] sm:$0xf]
        %v2717 = vld [vmem:[%s528 + $0x188] sm:$0xf]
        %v2718 = vld [vmem:[%s528 + $0x18c] sm:$0xf]
        %v2719 = vld [vmem:[%s528 + $0x190] sm:$0xf]
        %v2720 = vld [vmem:[%s528 + $0x194] sm:$0xf]
        %v2721 = vld [vmem:[%s528 + $0x198] sm:$0xf]
        %v2722 = vld [vmem:[%s528 + $0x19c] sm:$0xf]
        %v2723 = vld [vmem:[%s528 + $0x1a0] sm:$0xf]
        %v2724 = vld [vmem:[%s528 + $0x1a4] sm:$0xf]
        %v2725 = vld [vmem:[%s528 + $0x1a8] sm:$0xf]
        %v2726 = vld [vmem:[%s528 + $0x1ac] sm:$0xf]
        %v2727 = vld [vmem:[%s528 + $0x1b0] sm:$0xf]
        %v2728 = vld [vmem:[%s528 + $0x1b4] sm:$0xf]
        %v2729 = vld [vmem:[%s528 + $0x1b8] sm:$0xf]
        %v2730 = vld [vmem:[%s528 + $0x1bc] sm:$0xf]
        %v2731 = vld [vmem:[%s528 + $0x1c0] sm:$0xf]
        %v2732 = vld [vmem:[%s528 + $0x1c4] sm:$0xf]
        %v2733 = vld [vmem:[%s528 + $0x1c8] sm:$0xf]
        %v2734 = vld [vmem:[%s528 + $0x1cc] sm:$0xf]
        %v2735 = vld [vmem:[%s528 + $0x1d0] sm:$0xf]
        %v2736 = vld [vmem:[%s528 + $0x1d4] sm:$0xf]
        %v2737 = vld [vmem:[%s528 + $0x1d8] sm:$0xf]
        %v2738 = vld [vmem:[%s528 + $0x1dc] sm:$0xf]
        %v2739 = vld [vmem:[%s528 + $0x1e0] sm:$0xf]
        %v2740 = vld [vmem:[%s528 + $0x1e4] sm:$0xf]
        %v2741 = vld [vmem:[%s528 + $0x1e8] sm:$0xf]
        %v2742 = vld [vmem:[%s528 + $0x1ec] sm:$0xf]
        %v2743 = vld [vmem:[%s528 + $0x1f0] sm:$0xf]
        %v2744 = vld [vmem:[%s528 + $0x1f4] sm:$0xf]
        %v2745 = vld [vmem:[%s528 + $0x1f8] sm:$0xf]
        %v2746 = vld [vmem:[%s528 + $0x1fc] sm:$0xf]
        %v2747 = vld [vmem:[%s531] sm:$0x1]
        %v2749 = vlaneseq
        %v2750 = vshrl.u32 %v2749, 7
        %v2751 = vsub.s32 0, %v2750
        %v2752 = vrot.slane %v2747, %v2751
        %v2882 = vunpack.c.l.b16 %v2619
        %v2883 = vunpack.c.l.b16 %v2620
        %v2884 = vunpack.c.l.b16 %v2621
        %v2885 = vunpack.c.l.b16 %v2622
        %v2886 = vunpack.c.l.b16 %v2623
        %v2887 = vunpack.c.l.b16 %v2624
        %v2888 = vunpack.c.l.b16 %v2625
        %v2889 = vunpack.c.l.b16 %v2626
        %v2890 = vunpack.c.l.b16 %v2627
        %v2891 = vunpack.c.l.b16 %v2628
        %v2892 = vunpack.c.l.b16 %v2629
        %v2893 = vunpack.c.l.b16 %v2630
        %v2894 = vunpack.c.l.b16 %v2631
        %v2895 = vunpack.c.l.b16 %v2632
        %v2896 = vunpack.c.l.b16 %v2633
        %v2897 = vunpack.c.l.b16 %v2634
        %v2898 = vunpack.c.l.b16 %v2635
        %v2899 = vunpack.c.l.b16 %v2636
        %v2900 = vunpack.c.l.b16 %v2637
        %v2901 = vunpack.c.l.b16 %v2638
        %v2902 = vunpack.c.l.b16 %v2639
        %v2903 = vunpack.c.l.b16 %v2640
        %v2904 = vunpack.c.l.b16 %v2641
        %v2905 = vunpack.c.l.b16 %v2642
        %v2906 = vunpack.c.l.b16 %v2643
        %v2907 = vunpack.c.l.b16 %v2644
        %v2908 = vunpack.c.l.b16 %v2645
        %v2909 = vunpack.c.l.b16 %v2646
        %v2910 = vunpack.c.l.b16 %v2647
        %v2911 = vunpack.c.l.b16 %v2648
        %v2912 = vunpack.c.l.b16 %v2649
        %v2913 = vunpack.c.l.b16 %v2650
        %v2914 = vunpack.c.l.b16 %v2651
        %v2915 = vunpack.c.l.b16 %v2652
        %v2916 = vunpack.c.l.b16 %v2653
        %v2917 = vunpack.c.l.b16 %v2654
        %v2918 = vunpack.c.l.b16 %v2655
        %v2919 = vunpack.c.l.b16 %v2656
        %v2920 = vunpack.c.l.b16 %v2657
        %v2921 = vunpack.c.l.b16 %v2658
        %v2922 = vunpack.c.l.b16 %v2659
        %v2923 = vunpack.c.l.b16 %v2660
        %v2924 = vunpack.c.l.b16 %v2661
        %v2925 = vunpack.c.l.b16 %v2662
        %v2926 = vunpack.c.l.b16 %v2663
        %v2927 = vunpack.c.l.b16 %v2664
        %v2928 = vunpack.c.l.b16 %v2665
        %v2929 = vunpack.c.l.b16 %v2666
        %v2930 = vunpack.c.l.b16 %v2667
        %v2931 = vunpack.c.l.b16 %v2668
        %v2932 = vunpack.c.l.b16 %v2669
        %v2933 = vunpack.c.l.b16 %v2670
        %v2934 = vunpack.c.l.b16 %v2671
        %v2935 = vunpack.c.l.b16 %v2672
        %v2936 = vunpack.c.l.b16 %v2673
        %v2937 = vunpack.c.l.b16 %v2674
        %v2938 = vunpack.c.l.b16 %v2675
        %v2939 = vunpack.c.l.b16 %v2676
        %v2940 = vunpack.c.l.b16 %v2677
        %v2941 = vunpack.c.l.b16 %v2678
        %v2942 = vunpack.c.l.b16 %v2679
        %v2943 = vunpack.c.l.b16 %v2680
        %v2944 = vunpack.c.l.b16 %v2681
        %v2945 = vunpack.c.l.b16 %v2682
        %v2946 = vunpack.c.l.b16 %v2683
        %v2947 = vunpack.c.l.b16 %v2684
        %v2948 = vunpack.c.l.b16 %v2685
        %v2949 = vunpack.c.l.b16 %v2686
        %v2950 = vunpack.c.l.b16 %v2687
        %v2951 = vunpack.c.l.b16 %v2688
        %v2952 = vunpack.c.l.b16 %v2689
        %v2953 = vunpack.c.l.b16 %v2690
        %v2954 = vunpack.c.l.b16 %v2691
        %v2955 = vunpack.c.l.b16 %v2692
        %v2956 = vunpack.c.l.b16 %v2693
        %v2957 = vunpack.c.l.b16 %v2694
        %v2958 = vunpack.c.l.b16 %v2695
        %v2959 = vunpack.c.l.b16 %v2696
        %v2960 = vunpack.c.l.b16 %v2697
        %v2961 = vunpack.c.l.b16 %v2698
        %v2962 = vunpack.c.l.b16 %v2699
        %v2963 = vunpack.c.l.b16 %v2700
        %v2964 = vunpack.c.l.b16 %v2701
        %v2965 = vunpack.c.l.b16 %v2702
        %v2966 = vunpack.c.l.b16 %v2703
        %v2967 = vunpack.c.l.b16 %v2704
        %v2968 = vunpack.c.l.b16 %v2705
        %v2969 = vunpack.c.l.b16 %v2706
        %v2970 = vunpack.c.l.b16 %v2707
        %v2971 = vunpack.c.l.b16 %v2708
        %v2972 = vunpack.c.l.b16 %v2709
        %v2973 = vunpack.c.l.b16 %v2710
        %v2974 = vunpack.c.l.b16 %v2711
        %v2975 = vunpack.c.l.b16 %v2712
        %v2976 = vunpack.c.l.b16 %v2713
        %v2977 = vunpack.c.l.b16 %v2714
        %v2978 = vunpack.c.l.b16 %v2715
        %v2979 = vunpack.c.l.b16 %v2716
        %v2980 = vunpack.c.l.b16 %v2717
        %v2981 = vunpack.c.l.b16 %v2718
        %v2982 = vunpack.c.l.b16 %v2719
        %v2983 = vunpack.c.l.b16 %v2720
        %v2984 = vunpack.c.l.b16 %v2721
        %v2985 = vunpack.c.l.b16 %v2722
        %v2986 = vunpack.c.l.b16 %v2723
        %v2987 = vunpack.c.l.b16 %v2724
        %v2988 = vunpack.c.l.b16 %v2725
        %v2989 = vunpack.c.l.b16 %v2726
        %v2990 = vunpack.c.l.b16 %v2727
        %v2991 = vunpack.c.l.b16 %v2728
        %v2992 = vunpack.c.l.b16 %v2729
        %v2993 = vunpack.c.l.b16 %v2730
        %v2994 = vunpack.c.l.b16 %v2731
        %v2995 = vunpack.c.l.b16 %v2732
        %v2996 = vunpack.c.l.b16 %v2733
        %v2997 = vunpack.c.l.b16 %v2734
        %v2998 = vunpack.c.l.b16 %v2735
        %v2999 = vunpack.c.l.b16 %v2736
        %v3000 = vunpack.c.l.b16 %v2737
        %v3001 = vunpack.c.l.b16 %v2738
        %v3002 = vunpack.c.l.b16 %v2739
        %v3003 = vunpack.c.l.b16 %v2740
        %v3004 = vunpack.c.l.b16 %v2741
        %v3005 = vunpack.c.l.b16 %v2742
        %v3006 = vunpack.c.l.b16 %v2743
        %v3007 = vunpack.c.l.b16 %v2744
        %v3008 = vunpack.c.l.b16 %v2745
        %v3009 = vunpack.c.l.b16 %v2746
        %v3010 = vpack.c.b16 %v2883, %v2882
        %v3011 = vpack.c.b16 %v2885, %v2884
        %v3012 = vpack.c.b16 %v2887, %v2886
        %v3013 = vpack.c.b16 %v2889, %v2888
        %v3014 = vpack.c.b16 %v2891, %v2890
        %v3015 = vpack.c.b16 %v2893, %v2892
        %v3016 = vpack.c.b16 %v2895, %v2894
        %v3017 = vpack.c.b16 %v2897, %v2896
        %v3018 = vpack.c.b16 %v2899, %v2898
        %v3019 = vpack.c.b16 %v2901, %v2900
        %v3020 = vpack.c.b16 %v2903, %v2902
        %v3021 = vpack.c.b16 %v2905, %v2904
        %v3022 = vpack.c.b16 %v2907, %v2906
        %v3023 = vpack.c.b16 %v2909, %v2908
        %v3024 = vpack.c.b16 %v2911, %v2910
        %v3025 = vpack.c.b16 %v2913, %v2912
        %v3026 = vpack.c.b16 %v2915, %v2914
        %v3027 = vpack.c.b16 %v2917, %v2916
        %v3028 = vpack.c.b16 %v2919, %v2918
        %v3029 = vpack.c.b16 %v2921, %v2920
        %v3030 = vpack.c.b16 %v2923, %v2922
        %v3031 = vpack.c.b16 %v2925, %v2924
        %v3032 = vpack.c.b16 %v2927, %v2926
        %v3033 = vpack.c.b16 %v2929, %v2928
        %v3034 = vpack.c.b16 %v2931, %v2930
        %v3035 = vpack.c.b16 %v2933, %v2932
        %v3036 = vpack.c.b16 %v2935, %v2934
        %v3037 = vpack.c.b16 %v2937, %v2936
        %v3038 = vpack.c.b16 %v2939, %v2938
        %v3039 = vpack.c.b16 %v2941, %v2940
        %v3040 = vpack.c.b16 %v2943, %v2942
        %v3041 = vpack.c.b16 %v2945, %v2944
        %v3042 = vpack.c.b16 %v2947, %v2946
        %v3043 = vpack.c.b16 %v2949, %v2948
        %v3044 = vpack.c.b16 %v2951, %v2950
        %v3045 = vpack.c.b16 %v2953, %v2952
        %v3046 = vpack.c.b16 %v2955, %v2954
        %v3047 = vpack.c.b16 %v2957, %v2956
        %v3048 = vpack.c.b16 %v2959, %v2958
        %v3049 = vpack.c.b16 %v2961, %v2960
        %v3050 = vpack.c.b16 %v2963, %v2962
        %v3051 = vpack.c.b16 %v2965, %v2964
        %v3052 = vpack.c.b16 %v2967, %v2966
        %v3053 = vpack.c.b16 %v2969, %v2968
        %v3054 = vpack.c.b16 %v2971, %v2970
        %v3055 = vpack.c.b16 %v2973, %v2972
        %v3056 = vpack.c.b16 %v2975, %v2974
        %v3057 = vpack.c.b16 %v2977, %v2976
        %v3058 = vpack.c.b16 %v2979, %v2978
        %v3059 = vpack.c.b16 %v2981, %v2980
        %v3060 = vpack.c.b16 %v2983, %v2982
        %v3061 = vpack.c.b16 %v2985, %v2984
        %v3062 = vpack.c.b16 %v2987, %v2986
        %v3063 = vpack.c.b16 %v2989, %v2988
        %v3064 = vpack.c.b16 %v2991, %v2990
        %v3065 = vpack.c.b16 %v2993, %v2992
        %v3066 = vpack.c.b16 %v2995, %v2994
        %v3067 = vpack.c.b16 %v2997, %v2996
        %v3068 = vpack.c.b16 %v2999, %v2998
        %v3069 = vpack.c.b16 %v3001, %v3000
        %v3070 = vpack.c.b16 %v3003, %v3002
        %v3071 = vpack.c.b16 %v3005, %v3004
        %v3072 = vpack.c.b16 %v3007, %v3006
        %v3073 = vpack.c.b16 %v3009, %v3008
        %3138 = vmatprep.subr.bf16.mxu0 0
        %3139 = vmatpush1.bf16.msra.mxu0 %v3017
        %3140 = vmatprep.subr.bf16.mxu0 0
        %3141 = vmatpush1.bf16.msra.mxu0 %v3016
        %3142 = vmatprep.subr.bf16.mxu0 0
        %3143 = vmatpush1.bf16.msra.mxu0 %v3015
        %3144 = vmatprep.subr.bf16.mxu0 0
        %3145 = vmatpush1.bf16.msra.mxu0 %v3014
        %3146 = vmatprep.subr.bf16.mxu0 0
        %3147 = vmatpush1.bf16.msra.mxu0 %v3013
        %3148 = vmatprep.subr.bf16.mxu0 0
        %3149 = vmatpush1.bf16.msra.mxu0 %v3012
        %3150 = vmatprep.subr.bf16.mxu0 0
        %3151 = vmatpush1.bf16.msra.mxu0 %v3011
        %3152 = vmatprep.subr.bf16.mxu0 0
        %3153 = vmatpush1.bf16.msra.mxu0 %v3010
        %3154 = vmatprep.subr.bf16.mxu0 0
        %3155 = vmatpush2.bf16.msra.mxu0 %v3025
        %3156 = vmatprep.subr.bf16.mxu0 0
        %3157 = vmatpush2.bf16.msra.mxu0 %v3024
        %3158 = vmatprep.subr.bf16.mxu0 0
        %3159 = vmatpush2.bf16.msra.mxu0 %v3023
        %3160 = vmatprep.subr.bf16.mxu0 0
        %3161 = vmatpush2.bf16.msra.mxu0 %v3022
        %3162 = vmatprep.subr.bf16.mxu0 0
        %3163 = vmatpush2.bf16.msra.mxu0 %v3021
        %3164 = vmatprep.subr.bf16.mxu0 0
        %3165 = vmatpush2.bf16.msra.mxu0 %v3020
        %3166 = vmatprep.subr.bf16.mxu0 0
        %3167 = vmatpush2.bf16.msra.mxu0 %v3019
        %3168 = vmatprep.subr.bf16.mxu0 0
        %3169 = vmatpush2.bf16.msra.mxu0 %v3018
        %3170 = vmatprep.mubr.bf16.mxu0 %v2604
        %3171 = vmatmul.mubr.bf16.gmra.mxu0 %v2603
        %v3172 = vpop.f32.mrf.mxu0
        %v3173 = vadd.f32 %v2752, %v3172
        %v3174 = vpop.f32.mrf.mxu0
        %v3175 = vpop.f32.mrf.mxu0
        %v3176 = vpop.f32.mrf.mxu0
        %3177 = vmatprep.mubr.bf16.mxu0 %v2612
        %3178 = vmatmul.mubr.bf16.gmra.mxu0 %v2611
        %v3179 = vpop.f32.mrf.mxu0
        %v3180 = vpop.f32.mrf.mxu0
        %v3181 = vpop.f32.mrf.mxu0
        %v3182 = vpop.f32.mrf.mxu0
        %3183 = vdwg.mxu0
        %3184 = vmatprep.subr.bf16.mxu0 0
        %3185 = vmatpush1.bf16.msra.mxu0 %v3033
        %3186 = vmatprep.subr.bf16.mxu0 0
        %3187 = vmatpush1.bf16.msra.mxu0 %v3032
        %3188 = vmatprep.subr.bf16.mxu0 0
        %3189 = vmatpush1.bf16.msra.mxu0 %v3031
        %3190 = vmatprep.subr.bf16.mxu0 0
        %3191 = vmatpush1.bf16.msra.mxu0 %v3030
        %3192 = vmatprep.subr.bf16.mxu0 0
        %3193 = vmatpush1.bf16.msra.mxu0 %v3029
        %3194 = vmatprep.subr.bf16.mxu0 0
        %3195 = vmatpush1.bf16.msra.mxu0 %v3028
        %3196 = vmatprep.subr.bf16.mxu0 0
        %3197 = vmatpush1.bf16.msra.mxu0 %v3027
        %3198 = vmatprep.subr.bf16.mxu0 0
        %3199 = vmatpush1.bf16.msra.mxu0 %v3026
        %3200 = vmatprep.subr.bf16.mxu0 0
        %3201 = vmatpush2.bf16.msra.mxu0 %v3041
        %3202 = vmatprep.subr.bf16.mxu0 0
        %3203 = vmatpush2.bf16.msra.mxu0 %v3040
        %3204 = vmatprep.subr.bf16.mxu0 0
        %3205 = vmatpush2.bf16.msra.mxu0 %v3039
        %3206 = vmatprep.subr.bf16.mxu0 0
        %3207 = vmatpush2.bf16.msra.mxu0 %v3038
        %3208 = vmatprep.subr.bf16.mxu0 0
        %3209 = vmatpush2.bf16.msra.mxu0 %v3037
        %3210 = vmatprep.subr.bf16.mxu0 0
        %3211 = vmatpush2.bf16.msra.mxu0 %v3036
        %3212 = vmatprep.subr.bf16.mxu0 0
        %3213 = vmatpush2.bf16.msra.mxu0 %v3035
        %3214 = vmatprep.subr.bf16.mxu0 0
        %3215 = vmatpush2.bf16.msra.mxu0 %v3034
        %3216 = vmatprep.mubr.bf16.mxu0 %v2606
        %3217 = vmatmul.mubr.bf16.gmra.mxu0 %v2605
        %v3218 = vpop.f32.mrf.mxu0
        %v3219 = vadd.f32 %v3173, %v3218
        %v3220 = vpop.f32.mrf.mxu0
        %v3221 = vpop.f32.mrf.mxu0
        %v3222 = vpop.f32.mrf.mxu0
        %3223 = vmatprep.mubr.bf16.mxu0 %v2614
        %3224 = vmatmul.mubr.bf16.gmra.mxu0 %v2613
        %v3225 = vpop.f32.mrf.mxu0
        %v3226 = vpop.f32.mrf.mxu0
        %v3227 = vpop.f32.mrf.mxu0
        %v3228 = vpop.f32.mrf.mxu0
        %3229 = vdwg.mxu0
        %3230 = vmatprep.subr.bf16.mxu0 0
        %3231 = vmatpush1.bf16.msra.mxu0 %v3049
        %3232 = vmatprep.subr.bf16.mxu0 0
        %3233 = vmatpush1.bf16.msra.mxu0 %v3048
        %3234 = vmatprep.subr.bf16.mxu0 0
        %3235 = vmatpush1.bf16.msra.mxu0 %v3047
        %3236 = vmatprep.subr.bf16.mxu0 0
        %3237 = vmatpush1.bf16.msra.mxu0 %v3046
        %3238 = vmatprep.subr.bf16.mxu0 0
        %3239 = vmatpush1.bf16.msra.mxu0 %v3045
        %3240 = vmatprep.subr.bf16.mxu0 0
        %3241 = vmatpush1.bf16.msra.mxu0 %v3044
        %3242 = vmatprep.subr.bf16.mxu0 0
        %3243 = vmatpush1.bf16.msra.mxu0 %v3043
        %3244 = vmatprep.subr.bf16.mxu0 0
        %3245 = vmatpush1.bf16.msra.mxu0 %v3042
        %3246 = vmatprep.subr.bf16.mxu0 0
        %3247 = vmatpush2.bf16.msra.mxu0 %v3057
        %3248 = vmatprep.subr.bf16.mxu0 0
        %3249 = vmatpush2.bf16.msra.mxu0 %v3056
        %3250 = vmatprep.subr.bf16.mxu0 0
        %3251 = vmatpush2.bf16.msra.mxu0 %v3055
        %3252 = vmatprep.subr.bf16.mxu0 0
        %3253 = vmatpush2.bf16.msra.mxu0 %v3054
        %3254 = vmatprep.subr.bf16.mxu0 0
        %3255 = vmatpush2.bf16.msra.mxu0 %v3053
        %3256 = vmatprep.subr.bf16.mxu0 0
        %3257 = vmatpush2.bf16.msra.mxu0 %v3052
        %3258 = vmatprep.subr.bf16.mxu0 0
        %3259 = vmatpush2.bf16.msra.mxu0 %v3051
        %3260 = vmatprep.subr.bf16.mxu0 0
        %3261 = vmatpush2.bf16.msra.mxu0 %v3050
        %3262 = vmatprep.mubr.bf16.mxu0 %v2608
        %3263 = vmatmul.mubr.bf16.gmra.mxu0 %v2607
        %v3264 = vpop.f32.mrf.mxu0
        %v3265 = vadd.f32 %v3219, %v3264
        %v3266 = vpop.f32.mrf.mxu0
        %v3267 = vpop.f32.mrf.mxu0
        %v3268 = vpop.f32.mrf.mxu0
        %3269 = vmatprep.mubr.bf16.mxu0 %v2616
        %3270 = vmatmul.mubr.bf16.gmra.mxu0 %v2615
        %v3271 = vpop.f32.mrf.mxu0
        %v3272 = vpop.f32.mrf.mxu0
        %v3273 = vpop.f32.mrf.mxu0
        %v3274 = vpop.f32.mrf.mxu0
        %3275 = vdwg.mxu0
        %3276 = vmatprep.subr.bf16.mxu0 0
        %3277 = vmatpush1.bf16.msra.mxu0 %v3065
        %3278 = vmatprep.subr.bf16.mxu0 0
        %3279 = vmatpush1.bf16.msra.mxu0 %v3064
        %3280 = vmatprep.subr.bf16.mxu0 0
        %3281 = vmatpush1.bf16.msra.mxu0 %v3063
        %3282 = vmatprep.subr.bf16.mxu0 0
        %3283 = vmatpush1.bf16.msra.mxu0 %v3062
        %3284 = vmatprep.subr.bf16.mxu0 0
        %3285 = vmatpush1.bf16.msra.mxu0 %v3061
        %3286 = vmatprep.subr.bf16.mxu0 0
        %3287 = vmatpush1.bf16.msra.mxu0 %v3060
        %3288 = vmatprep.subr.bf16.mxu0 0
        %3289 = vmatpush1.bf16.msra.mxu0 %v3059
        %3290 = vmatprep.subr.bf16.mxu0 0
        %3291 = vmatpush1.bf16.msra.mxu0 %v3058
        %3292 = vmatprep.subr.bf16.mxu0 0
        %3293 = vmatpush2.bf16.msra.mxu0 %v3073
        %3294 = vmatprep.subr.bf16.mxu0 0
        %3295 = vmatpush2.bf16.msra.mxu0 %v3072
        %3296 = vmatprep.subr.bf16.mxu0 0
        %3297 = vmatpush2.bf16.msra.mxu0 %v3071
        %3298 = vmatprep.subr.bf16.mxu0 0
        %3299 = vmatpush2.bf16.msra.mxu0 %v3070
        %3300 = vmatprep.subr.bf16.mxu0 0
        %3301 = vmatpush2.bf16.msra.mxu0 %v3069
        %3302 = vmatprep.subr.bf16.mxu0 0
        %3303 = vmatpush2.bf16.msra.mxu0 %v3068
        %3304 = vmatprep.subr.bf16.mxu0 0
        %3305 = vmatpush2.bf16.msra.mxu0 %v3067
        %3306 = vmatprep.subr.bf16.mxu0 0
        %3307 = vmatpush2.bf16.msra.mxu0 %v3066
        %3308 = vmatprep.mubr.bf16.mxu0 %v2610
        %3309 = vmatmul.mubr.bf16.gmra.mxu0 %v2609
        %v3310 = vpop.f32.mrf.mxu0
        %v3311 = vadd.f32 %v3265, %v3310
        %v3312 = vpop.f32.mrf.mxu0
        %v3313 = vpop.f32.mrf.mxu0
        %v3314 = vpop.f32.mrf.mxu0
        %3315 = vmatprep.mubr.bf16.mxu0 %v2618
        %3316 = vmatmul.mubr.bf16.gmra.mxu0 %v2617
        %v3317 = vpop.f32.mrf.mxu0
        %v3318 = vpop.f32.mrf.mxu0
        %v3319 = vpop.f32.mrf.mxu0
        %v3320 = vpop.f32.mrf.mxu0
        %3321 = vdwg.mxu0
        %v3322 = vmul.f32 %v3311, %v3311
        %vm3323 = vcmask 1041408
        %v3324 = vsel %vm3323, %v3322, 0.0
        %3325 = vadd.xlane.f32.xlu0 %v3324
        %v3326 = vpop.xlane.xlu0 %3325
        %v3327 = vrsqrt.pop %v3326
        %v3328 = vmul.f32 %v3311, %v3327
        %3329 = vst [vmem:[%s502] sm:$0x3] %v3328
        %v3330 = vld [vmem:[%s536] sm:$0xf]
        %v3331 = vld [vmem:[%s536 + $0x4] sm:$0xf]
        %v3332 = vld [vmem:[%s536 + $0x8] sm:$0xf]
        %v3333 = vld [vmem:[%s536 + $0xc] sm:$0xf]
        %v3334 = vld [vmem:[%s536 + $0x10] sm:$0xf]
        %v3335 = vld [vmem:[%s536 + $0x14] sm:$0xf]
        %v3336 = vld [vmem:[%s536 + $0x18] sm:$0xf]
        %v3337 = vld [vmem:[%s536 + $0x1c] sm:$0xf]
        %v3338 = vld [vmem:[%s536 + $0x20] sm:$0xf]
        %v3339 = vld [vmem:[%s536 + $0x24] sm:$0xf]
        %v3340 = vld [vmem:[%s536 + $0x28] sm:$0xf]
        %v3341 = vld [vmem:[%s536 + $0x2c] sm:$0xf]
        %v3342 = vld [vmem:[%s536 + $0x30] sm:$0xf]
        %v3343 = vld [vmem:[%s536 + $0x34] sm:$0xf]
        %v3344 = vld [vmem:[%s536 + $0x38] sm:$0xf]
        %v3345 = vld [vmem:[%s536 + $0x3c] sm:$0xf]
        %v3346 = vld [vmem:[%s536 + $0x40] sm:$0xf]
        %v3347 = vld [vmem:[%s536 + $0x44] sm:$0xf]
        %v3348 = vld [vmem:[%s536 + $0x48] sm:$0xf]
        %v3349 = vld [vmem:[%s536 + $0x4c] sm:$0xf]
        %v3350 = vld [vmem:[%s536 + $0x50] sm:$0xf]
        %v3351 = vld [vmem:[%s536 + $0x54] sm:$0xf]
        %v3352 = vld [vmem:[%s536 + $0x58] sm:$0xf]
        %v3353 = vld [vmem:[%s536 + $0x5c] sm:$0xf]
        %v3354 = vld [vmem:[%s536 + $0x60] sm:$0xf]
        %v3355 = vld [vmem:[%s536 + $0x64] sm:$0xf]
        %v3356 = vld [vmem:[%s536 + $0x68] sm:$0xf]
        %v3357 = vld [vmem:[%s536 + $0x6c] sm:$0xf]
        %v3358 = vld [vmem:[%s536 + $0x70] sm:$0xf]
        %v3359 = vld [vmem:[%s536 + $0x74] sm:$0xf]
        %v3360 = vld [vmem:[%s536 + $0x78] sm:$0xf]
        %v3361 = vld [vmem:[%s536 + $0x7c] sm:$0xf]
        %v3362 = vld [vmem:[%s536 + $0x80] sm:$0xf]
        %v3363 = vld [vmem:[%s536 + $0x84] sm:$0xf]
        %v3364 = vld [vmem:[%s536 + $0x88] sm:$0xf]
        %v3365 = vld [vmem:[%s536 + $0x8c] sm:$0xf]
        %v3366 = vld [vmem:[%s536 + $0x90] sm:$0xf]
        %v3367 = vld [vmem:[%s536 + $0x94] sm:$0xf]
        %v3368 = vld [vmem:[%s536 + $0x98] sm:$0xf]
        %v3369 = vld [vmem:[%s536 + $0x9c] sm:$0xf]
        %v3370 = vld [vmem:[%s536 + $0xa0] sm:$0xf]
        %v3371 = vld [vmem:[%s536 + $0xa4] sm:$0xf]
        %v3372 = vld [vmem:[%s536 + $0xa8] sm:$0xf]
        %v3373 = vld [vmem:[%s536 + $0xac] sm:$0xf]
        %v3374 = vld [vmem:[%s536 + $0xb0] sm:$0xf]
        %v3375 = vld [vmem:[%s536 + $0xb4] sm:$0xf]
        %v3376 = vld [vmem:[%s536 + $0xb8] sm:$0xf]
        %v3377 = vld [vmem:[%s536 + $0xbc] sm:$0xf]
        %v3378 = vld [vmem:[%s536 + $0xc0] sm:$0xf]
        %v3379 = vld [vmem:[%s536 + $0xc4] sm:$0xf]
        %v3380 = vld [vmem:[%s536 + $0xc8] sm:$0xf]
        %v3381 = vld [vmem:[%s536 + $0xcc] sm:$0xf]
        %v3382 = vld [vmem:[%s536 + $0xd0] sm:$0xf]
        %v3383 = vld [vmem:[%s536 + $0xd4] sm:$0xf]
        %v3384 = vld [vmem:[%s536 + $0xd8] sm:$0xf]
        %v3385 = vld [vmem:[%s536 + $0xdc] sm:$0xf]
        %v3386 = vld [vmem:[%s536 + $0xe0] sm:$0xf]
        %v3387 = vld [vmem:[%s536 + $0xe4] sm:$0xf]
        %v3388 = vld [vmem:[%s536 + $0xe8] sm:$0xf]
        %v3389 = vld [vmem:[%s536 + $0xec] sm:$0xf]
        %v3390 = vld [vmem:[%s536 + $0xf0] sm:$0xf]
        %v3391 = vld [vmem:[%s536 + $0xf4] sm:$0xf]
        %v3392 = vld [vmem:[%s536 + $0xf8] sm:$0xf]
        %v3393 = vld [vmem:[%s536 + $0xfc] sm:$0xf]
        %v3394 = vld [vmem:[%s536 + $0x100] sm:$0xf]
        %v3395 = vld [vmem:[%s536 + $0x104] sm:$0xf]
        %v3396 = vld [vmem:[%s536 + $0x108] sm:$0xf]
        %v3397 = vld [vmem:[%s536 + $0x10c] sm:$0xf]
        %v3398 = vld [vmem:[%s536 + $0x110] sm:$0xf]
        %v3399 = vld [vmem:[%s536 + $0x114] sm:$0xf]
        %v3400 = vld [vmem:[%s536 + $0x118] sm:$0xf]
        %v3401 = vld [vmem:[%s536 + $0x11c] sm:$0xf]
        %v3402 = vld [vmem:[%s536 + $0x120] sm:$0xf]
        %v3403 = vld [vmem:[%s536 + $0x124] sm:$0xf]
        %v3404 = vld [vmem:[%s536 + $0x128] sm:$0xf]
        %v3405 = vld [vmem:[%s536 + $0x12c] sm:$0xf]
        %v3406 = vld [vmem:[%s536 + $0x130] sm:$0xf]
        %v3407 = vld [vmem:[%s536 + $0x134] sm:$0xf]
        %v3408 = vld [vmem:[%s536 + $0x138] sm:$0xf]
        %v3409 = vld [vmem:[%s536 + $0x13c] sm:$0xf]
        %v3410 = vld [vmem:[%s536 + $0x140] sm:$0xf]
        %v3411 = vld [vmem:[%s536 + $0x144] sm:$0xf]
        %v3412 = vld [vmem:[%s536 + $0x148] sm:$0xf]
        %v3413 = vld [vmem:[%s536 + $0x14c] sm:$0xf]
        %v3414 = vld [vmem:[%s536 + $0x150] sm:$0xf]
        %v3415 = vld [vmem:[%s536 + $0x154] sm:$0xf]
        %v3416 = vld [vmem:[%s536 + $0x158] sm:$0xf]
        %v3417 = vld [vmem:[%s536 + $0x15c] sm:$0xf]
        %v3418 = vld [vmem:[%s536 + $0x160] sm:$0xf]
        %v3419 = vld [vmem:[%s536 + $0x164] sm:$0xf]
        %v3420 = vld [vmem:[%s536 + $0x168] sm:$0xf]
        %v3421 = vld [vmem:[%s536 + $0x16c] sm:$0xf]
        %v3422 = vld [vmem:[%s536 + $0x170] sm:$0xf]
        %v3423 = vld [vmem:[%s536 + $0x174] sm:$0xf]
        %v3424 = vld [vmem:[%s536 + $0x178] sm:$0xf]
        %v3425 = vld [vmem:[%s536 + $0x17c] sm:$0xf]
        %v3426 = vld [vmem:[%s536 + $0x180] sm:$0xf]
        %v3427 = vld [vmem:[%s536 + $0x184] sm:$0xf]
        %v3428 = vld [vmem:[%s536 + $0x188] sm:$0xf]
        %v3429 = vld [vmem:[%s536 + $0x18c] sm:$0xf]
        %v3430 = vld [vmem:[%s536 + $0x190] sm:$0xf]
        %v3431 = vld [vmem:[%s536 + $0x194] sm:$0xf]
        %v3432 = vld [vmem:[%s536 + $0x198] sm:$0xf]
        %v3433 = vld [vmem:[%s536 + $0x19c] sm:$0xf]
        %v3434 = vld [vmem:[%s536 + $0x1a0] sm:$0xf]
        %v3435 = vld [vmem:[%s536 + $0x1a4] sm:$0xf]
        %v3436 = vld [vmem:[%s536 + $0x1a8] sm:$0xf]
        %v3437 = vld [vmem:[%s536 + $0x1ac] sm:$0xf]
        %v3438 = vld [vmem:[%s536 + $0x1b0] sm:$0xf]
        %v3439 = vld [vmem:[%s536 + $0x1b4] sm:$0xf]
        %v3440 = vld [vmem:[%s536 + $0x1b8] sm:$0xf]
        %v3441 = vld [vmem:[%s536 + $0x1bc] sm:$0xf]
        %v3442 = vld [vmem:[%s536 + $0x1c0] sm:$0xf]
        %v3443 = vld [vmem:[%s536 + $0x1c4] sm:$0xf]
        %v3444 = vld [vmem:[%s536 + $0x1c8] sm:$0xf]
        %v3445 = vld [vmem:[%s536 + $0x1cc] sm:$0xf]
        %v3446 = vld [vmem:[%s536 + $0x1d0] sm:$0xf]
        %v3447 = vld [vmem:[%s536 + $0x1d4] sm:$0xf]
        %v3448 = vld [vmem:[%s536 + $0x1d8] sm:$0xf]
        %v3449 = vld [vmem:[%s536 + $0x1dc] sm:$0xf]
        %v3450 = vld [vmem:[%s536 + $0x1e0] sm:$0xf]
        %v3451 = vld [vmem:[%s536 + $0x1e4] sm:$0xf]
        %v3452 = vld [vmem:[%s536 + $0x1e8] sm:$0xf]
        %v3453 = vld [vmem:[%s536 + $0x1ec] sm:$0xf]
        %v3454 = vld [vmem:[%s536 + $0x1f0] sm:$0xf]
        %v3455 = vld [vmem:[%s536 + $0x1f4] sm:$0xf]
        %v3456 = vld [vmem:[%s536 + $0x1f8] sm:$0xf]
        %v3457 = vld [vmem:[%s536 + $0x1fc] sm:$0xf]
        %v3458 = vld [vmem:[%s539] sm:$0x1]
        %v3460 = vlaneseq
        %v3461 = vshrl.u32 %v3460, 7
        %v3462 = vsub.s32 0, %v3461
        %v3463 = vrot.slane %v3458, %v3462
        %v3593 = vunpack.c.l.b16 %v3330
        %v3594 = vunpack.c.l.b16 %v3331
        %v3595 = vunpack.c.l.b16 %v3332
        %v3596 = vunpack.c.l.b16 %v3333
        %v3597 = vunpack.c.l.b16 %v3334
        %v3598 = vunpack.c.l.b16 %v3335
        %v3599 = vunpack.c.l.b16 %v3336
        %v3600 = vunpack.c.l.b16 %v3337
        %v3601 = vunpack.c.l.b16 %v3338
        %v3602 = vunpack.c.l.b16 %v3339
        %v3603 = vunpack.c.l.b16 %v3340
        %v3604 = vunpack.c.l.b16 %v3341
        %v3605 = vunpack.c.l.b16 %v3342
        %v3606 = vunpack.c.l.b16 %v3343
        %v3607 = vunpack.c.l.b16 %v3344
        %v3608 = vunpack.c.l.b16 %v3345
        %v3609 = vunpack.c.l.b16 %v3346
        %v3610 = vunpack.c.l.b16 %v3347
        %v3611 = vunpack.c.l.b16 %v3348
        %v3612 = vunpack.c.l.b16 %v3349
        %v3613 = vunpack.c.l.b16 %v3350
        %v3614 = vunpack.c.l.b16 %v3351
        %v3615 = vunpack.c.l.b16 %v3352
        %v3616 = vunpack.c.l.b16 %v3353
        %v3617 = vunpack.c.l.b16 %v3354
        %v3618 = vunpack.c.l.b16 %v3355
        %v3619 = vunpack.c.l.b16 %v3356
        %v3620 = vunpack.c.l.b16 %v3357
        %v3621 = vunpack.c.l.b16 %v3358
        %v3622 = vunpack.c.l.b16 %v3359
        %v3623 = vunpack.c.l.b16 %v3360
        %v3624 = vunpack.c.l.b16 %v3361
        %v3625 = vunpack.c.l.b16 %v3362
        %v3626 = vunpack.c.l.b16 %v3363
        %v3627 = vunpack.c.l.b16 %v3364
        %v3628 = vunpack.c.l.b16 %v3365
        %v3629 = vunpack.c.l.b16 %v3366
        %v3630 = vunpack.c.l.b16 %v3367
        %v3631 = vunpack.c.l.b16 %v3368
        %v3632 = vunpack.c.l.b16 %v3369
        %v3633 = vunpack.c.l.b16 %v3370
        %v3634 = vunpack.c.l.b16 %v3371
        %v3635 = vunpack.c.l.b16 %v3372
        %v3636 = vunpack.c.l.b16 %v3373
        %v3637 = vunpack.c.l.b16 %v3374
        %v3638 = vunpack.c.l.b16 %v3375
        %v3639 = vunpack.c.l.b16 %v3376
        %v3640 = vunpack.c.l.b16 %v3377
        %v3641 = vunpack.c.l.b16 %v3378
        %v3642 = vunpack.c.l.b16 %v3379
        %v3643 = vunpack.c.l.b16 %v3380
        %v3644 = vunpack.c.l.b16 %v3381
        %v3645 = vunpack.c.l.b16 %v3382
        %v3646 = vunpack.c.l.b16 %v3383
        %v3647 = vunpack.c.l.b16 %v3384
        %v3648 = vunpack.c.l.b16 %v3385
        %v3649 = vunpack.c.l.b16 %v3386
        %v3650 = vunpack.c.l.b16 %v3387
        %v3651 = vunpack.c.l.b16 %v3388
        %v3652 = vunpack.c.l.b16 %v3389
        %v3653 = vunpack.c.l.b16 %v3390
        %v3654 = vunpack.c.l.b16 %v3391
        %v3655 = vunpack.c.l.b16 %v3392
        %v3656 = vunpack.c.l.b16 %v3393
        %v3657 = vunpack.c.l.b16 %v3394
        %v3658 = vunpack.c.l.b16 %v3395
        %v3659 = vunpack.c.l.b16 %v3396
        %v3660 = vunpack.c.l.b16 %v3397
        %v3661 = vunpack.c.l.b16 %v3398
        %v3662 = vunpack.c.l.b16 %v3399
        %v3663 = vunpack.c.l.b16 %v3400
        %v3664 = vunpack.c.l.b16 %v3401
        %v3665 = vunpack.c.l.b16 %v3402
        %v3666 = vunpack.c.l.b16 %v3403
        %v3667 = vunpack.c.l.b16 %v3404
        %v3668 = vunpack.c.l.b16 %v3405
        %v3669 = vunpack.c.l.b16 %v3406
        %v3670 = vunpack.c.l.b16 %v3407
        %v3671 = vunpack.c.l.b16 %v3408
        %v3672 = vunpack.c.l.b16 %v3409
        %v3673 = vunpack.c.l.b16 %v3410
        %v3674 = vunpack.c.l.b16 %v3411
        %v3675 = vunpack.c.l.b16 %v3412
        %v3676 = vunpack.c.l.b16 %v3413
        %v3677 = vunpack.c.l.b16 %v3414
        %v3678 = vunpack.c.l.b16 %v3415
        %v3679 = vunpack.c.l.b16 %v3416
        %v3680 = vunpack.c.l.b16 %v3417
        %v3681 = vunpack.c.l.b16 %v3418
        %v3682 = vunpack.c.l.b16 %v3419
        %v3683 = vunpack.c.l.b16 %v3420
        %v3684 = vunpack.c.l.b16 %v3421
        %v3685 = vunpack.c.l.b16 %v3422
        %v3686 = vunpack.c.l.b16 %v3423
        %v3687 = vunpack.c.l.b16 %v3424
        %v3688 = vunpack.c.l.b16 %v3425
        %v3689 = vunpack.c.l.b16 %v3426
        %v3690 = vunpack.c.l.b16 %v3427
        %v3691 = vunpack.c.l.b16 %v3428
        %v3692 = vunpack.c.l.b16 %v3429
        %v3693 = vunpack.c.l.b16 %v3430
        %v3694 = vunpack.c.l.b16 %v3431
        %v3695 = vunpack.c.l.b16 %v3432
        %v3696 = vunpack.c.l.b16 %v3433
        %v3697 = vunpack.c.l.b16 %v3434
        %v3698 = vunpack.c.l.b16 %v3435
        %v3699 = vunpack.c.l.b16 %v3436
        %v3700 = vunpack.c.l.b16 %v3437
        %v3701 = vunpack.c.l.b16 %v3438
        %v3702 = vunpack.c.l.b16 %v3439
        %v3703 = vunpack.c.l.b16 %v3440
        %v3704 = vunpack.c.l.b16 %v3441
        %v3705 = vunpack.c.l.b16 %v3442
        %v3706 = vunpack.c.l.b16 %v3443
        %v3707 = vunpack.c.l.b16 %v3444
        %v3708 = vunpack.c.l.b16 %v3445
        %v3709 = vunpack.c.l.b16 %v3446
        %v3710 = vunpack.c.l.b16 %v3447
        %v3711 = vunpack.c.l.b16 %v3448
        %v3712 = vunpack.c.l.b16 %v3449
        %v3713 = vunpack.c.l.b16 %v3450
        %v3714 = vunpack.c.l.b16 %v3451
        %v3715 = vunpack.c.l.b16 %v3452
        %v3716 = vunpack.c.l.b16 %v3453
        %v3717 = vunpack.c.l.b16 %v3454
        %v3718 = vunpack.c.l.b16 %v3455
        %v3719 = vunpack.c.l.b16 %v3456
        %v3720 = vunpack.c.l.b16 %v3457
        %v3721 = vpack.c.b16 %v3594, %v3593
        %v3722 = vpack.c.b16 %v3596, %v3595
        %v3723 = vpack.c.b16 %v3598, %v3597
        %v3724 = vpack.c.b16 %v3600, %v3599
        %v3725 = vpack.c.b16 %v3602, %v3601
        %v3726 = vpack.c.b16 %v3604, %v3603
        %v3727 = vpack.c.b16 %v3606, %v3605
        %v3728 = vpack.c.b16 %v3608, %v3607
        %v3729 = vpack.c.b16 %v3610, %v3609
        %v3730 = vpack.c.b16 %v3612, %v3611
        %v3731 = vpack.c.b16 %v3614, %v3613
        %v3732 = vpack.c.b16 %v3616, %v3615
        %v3733 = vpack.c.b16 %v3618, %v3617
        %v3734 = vpack.c.b16 %v3620, %v3619
        %v3735 = vpack.c.b16 %v3622, %v3621
        %v3736 = vpack.c.b16 %v3624, %v3623
        %v3737 = vpack.c.b16 %v3626, %v3625
        %v3738 = vpack.c.b16 %v3628, %v3627
        %v3739 = vpack.c.b16 %v3630, %v3629
        %v3740 = vpack.c.b16 %v3632, %v3631
        %v3741 = vpack.c.b16 %v3634, %v3633
        %v3742 = vpack.c.b16 %v3636, %v3635
        %v3743 = vpack.c.b16 %v3638, %v3637
        %v3744 = vpack.c.b16 %v3640, %v3639
        %v3745 = vpack.c.b16 %v3642, %v3641
        %v3746 = vpack.c.b16 %v3644, %v3643
        %v3747 = vpack.c.b16 %v3646, %v3645
        %v3748 = vpack.c.b16 %v3648, %v3647
        %v3749 = vpack.c.b16 %v3650, %v3649
        %v3750 = vpack.c.b16 %v3652, %v3651
        %v3751 = vpack.c.b16 %v3654, %v3653
        %v3752 = vpack.c.b16 %v3656, %v3655
        %v3753 = vpack.c.b16 %v3658, %v3657
        %v3754 = vpack.c.b16 %v3660, %v3659
        %v3755 = vpack.c.b16 %v3662, %v3661
        %v3756 = vpack.c.b16 %v3664, %v3663
        %v3757 = vpack.c.b16 %v3666, %v3665
        %v3758 = vpack.c.b16 %v3668, %v3667
        %v3759 = vpack.c.b16 %v3670, %v3669
        %v3760 = vpack.c.b16 %v3672, %v3671
        %v3761 = vpack.c.b16 %v3674, %v3673
        %v3762 = vpack.c.b16 %v3676, %v3675
        %v3763 = vpack.c.b16 %v3678, %v3677
        %v3764 = vpack.c.b16 %v3680, %v3679
        %v3765 = vpack.c.b16 %v3682, %v3681
        %v3766 = vpack.c.b16 %v3684, %v3683
        %v3767 = vpack.c.b16 %v3686, %v3685
        %v3768 = vpack.c.b16 %v3688, %v3687
        %v3769 = vpack.c.b16 %v3690, %v3689
        %v3770 = vpack.c.b16 %v3692, %v3691
        %v3771 = vpack.c.b16 %v3694, %v3693
        %v3772 = vpack.c.b16 %v3696, %v3695
        %v3773 = vpack.c.b16 %v3698, %v3697
        %v3774 = vpack.c.b16 %v3700, %v3699
        %v3775 = vpack.c.b16 %v3702, %v3701
        %v3776 = vpack.c.b16 %v3704, %v3703
        %v3777 = vpack.c.b16 %v3706, %v3705
        %v3778 = vpack.c.b16 %v3708, %v3707
        %v3779 = vpack.c.b16 %v3710, %v3709
        %v3780 = vpack.c.b16 %v3712, %v3711
        %v3781 = vpack.c.b16 %v3714, %v3713
        %v3782 = vpack.c.b16 %v3716, %v3715
        %v3783 = vpack.c.b16 %v3718, %v3717
        %v3784 = vpack.c.b16 %v3720, %v3719
        %3849 = vmatprep.subr.bf16.mxu0 0
        %3850 = vmatpush1.bf16.msra.mxu0 %v3728
        %3851 = vmatprep.subr.bf16.mxu0 0
        %3852 = vmatpush1.bf16.msra.mxu0 %v3727
        %3853 = vmatprep.subr.bf16.mxu0 0
        %3854 = vmatpush1.bf16.msra.mxu0 %v3726
        %3855 = vmatprep.subr.bf16.mxu0 0
        %3856 = vmatpush1.bf16.msra.mxu0 %v3725
        %3857 = vmatprep.subr.bf16.mxu0 0
        %3858 = vmatpush1.bf16.msra.mxu0 %v3724
        %3859 = vmatprep.subr.bf16.mxu0 0
        %3860 = vmatpush1.bf16.msra.mxu0 %v3723
        %3861 = vmatprep.subr.bf16.mxu0 0
        %3862 = vmatpush1.bf16.msra.mxu0 %v3722
        %3863 = vmatprep.subr.bf16.mxu0 0
        %3864 = vmatpush1.bf16.msra.mxu0 %v3721
        %3865 = vmatprep.subr.bf16.mxu0 0
        %3866 = vmatpush2.bf16.msra.mxu0 %v3736
        %3867 = vmatprep.subr.bf16.mxu0 0
        %3868 = vmatpush2.bf16.msra.mxu0 %v3735
        %3869 = vmatprep.subr.bf16.mxu0 0
        %3870 = vmatpush2.bf16.msra.mxu0 %v3734
        %3871 = vmatprep.subr.bf16.mxu0 0
        %3872 = vmatpush2.bf16.msra.mxu0 %v3733
        %3873 = vmatprep.subr.bf16.mxu0 0
        %3874 = vmatpush2.bf16.msra.mxu0 %v3732
        %3875 = vmatprep.subr.bf16.mxu0 0
        %3876 = vmatpush2.bf16.msra.mxu0 %v3731
        %3877 = vmatprep.subr.bf16.mxu0 0
        %3878 = vmatpush2.bf16.msra.mxu0 %v3730
        %3879 = vmatprep.subr.bf16.mxu0 0
        %3880 = vmatpush2.bf16.msra.mxu0 %v3729
        %3881 = vmatprep.mubr.bf16.mxu0 %v2604
        %3882 = vmatmul.mubr.bf16.gmra.mxu0 %v2603
        %v3883 = vpop.f32.mrf.mxu0
        %v3884 = vadd.f32 %v3463, %v3883
        %v3885 = vpop.f32.mrf.mxu0
        %v3886 = vpop.f32.mrf.mxu0
        %v3887 = vadd.f32 %v3463, %v3886
        %v3888 = vpop.f32.mrf.mxu0
        %3889 = vmatprep.mubr.bf16.mxu0 %v2612
        %3890 = vmatmul.mubr.bf16.gmra.mxu0 %v2611
        %v3891 = vpop.f32.mrf.mxu0
        %v3892 = vadd.f32 %v3463, %v3891
        %v3893 = vpop.f32.mrf.mxu0
        %v3894 = vpop.f32.mrf.mxu0
        %v3895 = vpop.f32.mrf.mxu0
        %3896 = vdwg.mxu0
        %3897 = vmatprep.subr.bf16.mxu0 0
        %3898 = vmatpush1.bf16.msra.mxu0 %v3744
        %3899 = vmatprep.subr.bf16.mxu0 0
        %3900 = vmatpush1.bf16.msra.mxu0 %v3743
        %3901 = vmatprep.subr.bf16.mxu0 0
        %3902 = vmatpush1.bf16.msra.mxu0 %v3742
        %3903 = vmatprep.subr.bf16.mxu0 0
        %3904 = vmatpush1.bf16.msra.mxu0 %v3741
        %3905 = vmatprep.subr.bf16.mxu0 0
        %3906 = vmatpush1.bf16.msra.mxu0 %v3740
        %3907 = vmatprep.subr.bf16.mxu0 0
        %3908 = vmatpush1.bf16.msra.mxu0 %v3739
        %3909 = vmatprep.subr.bf16.mxu0 0
        %3910 = vmatpush1.bf16.msra.mxu0 %v3738
        %3911 = vmatprep.subr.bf16.mxu0 0
        %3912 = vmatpush1.bf16.msra.mxu0 %v3737
        %3913 = vmatprep.subr.bf16.mxu0 0
        %3914 = vmatpush2.bf16.msra.mxu0 %v3752
        %3915 = vmatprep.subr.bf16.mxu0 0
        %3916 = vmatpush2.bf16.msra.mxu0 %v3751
        %3917 = vmatprep.subr.bf16.mxu0 0
        %3918 = vmatpush2.bf16.msra.mxu0 %v3750
        %3919 = vmatprep.subr.bf16.mxu0 0
        %3920 = vmatpush2.bf16.msra.mxu0 %v3749
        %3921 = vmatprep.subr.bf16.mxu0 0
        %3922 = vmatpush2.bf16.msra.mxu0 %v3748
        %3923 = vmatprep.subr.bf16.mxu0 0
        %3924 = vmatpush2.bf16.msra.mxu0 %v3747
        %3925 = vmatprep.subr.bf16.mxu0 0
        %3926 = vmatpush2.bf16.msra.mxu0 %v3746
        %3927 = vmatprep.subr.bf16.mxu0 0
        %3928 = vmatpush2.bf16.msra.mxu0 %v3745
        %3929 = vmatprep.mubr.bf16.mxu0 %v2606
        %3930 = vmatmul.mubr.bf16.gmra.mxu0 %v2605
        %v3931 = vpop.f32.mrf.mxu0
        %v3932 = vadd.f32 %v3884, %v3931
        %v3933 = vpop.f32.mrf.mxu0
        %v3934 = vpop.f32.mrf.mxu0
        %v3935 = vadd.f32 %v3887, %v3934
        %v3936 = vpop.f32.mrf.mxu0
        %3937 = vmatprep.mubr.bf16.mxu0 %v2614
        %3938 = vmatmul.mubr.bf16.gmra.mxu0 %v2613
        %v3939 = vpop.f32.mrf.mxu0
        %v3940 = vadd.f32 %v3892, %v3939
        %v3941 = vpop.f32.mrf.mxu0
        %v3942 = vpop.f32.mrf.mxu0
        %v3943 = vpop.f32.mrf.mxu0
        %3944 = vdwg.mxu0
        %3945 = vmatprep.subr.bf16.mxu0 0
        %3946 = vmatpush1.bf16.msra.mxu0 %v3760
        %3947 = vmatprep.subr.bf16.mxu0 0
        %3948 = vmatpush1.bf16.msra.mxu0 %v3759
        %3949 = vmatprep.subr.bf16.mxu0 0
        %3950 = vmatpush1.bf16.msra.mxu0 %v3758
        %3951 = vmatprep.subr.bf16.mxu0 0
        %3952 = vmatpush1.bf16.msra.mxu0 %v3757
        %3953 = vmatprep.subr.bf16.mxu0 0
        %3954 = vmatpush1.bf16.msra.mxu0 %v3756
        %3955 = vmatprep.subr.bf16.mxu0 0
        %3956 = vmatpush1.bf16.msra.mxu0 %v3755
        %3957 = vmatprep.subr.bf16.mxu0 0
        %3958 = vmatpush1.bf16.msra.mxu0 %v3754
        %3959 = vmatprep.subr.bf16.mxu0 0
        %3960 = vmatpush1.bf16.msra.mxu0 %v3753
        %3961 = vmatprep.subr.bf16.mxu0 0
        %3962 = vmatpush2.bf16.msra.mxu0 %v3768
        %3963 = vmatprep.subr.bf16.mxu0 0
        %3964 = vmatpush2.bf16.msra.mxu0 %v3767
        %3965 = vmatprep.subr.bf16.mxu0 0
        %3966 = vmatpush2.bf16.msra.mxu0 %v3766
        %3967 = vmatprep.subr.bf16.mxu0 0
        %3968 = vmatpush2.bf16.msra.mxu0 %v3765
        %3969 = vmatprep.subr.bf16.mxu0 0
        %3970 = vmatpush2.bf16.msra.mxu0 %v3764
        %3971 = vmatprep.subr.bf16.mxu0 0
        %3972 = vmatpush2.bf16.msra.mxu0 %v3763
        %3973 = vmatprep.subr.bf16.mxu0 0
        %3974 = vmatpush2.bf16.msra.mxu0 %v3762
        %3975 = vmatprep.subr.bf16.mxu0 0
        %3976 = vmatpush2.bf16.msra.mxu0 %v3761
        %3977 = vmatprep.mubr.bf16.mxu0 %v2608
        %3978 = vmatmul.mubr.bf16.gmra.mxu0 %v2607
        %v3979 = vpop.f32.mrf.mxu0
        %v3980 = vadd.f32 %v3932, %v3979
        %v3981 = vpop.f32.mrf.mxu0
        %v3982 = vpop.f32.mrf.mxu0
        %v3983 = vadd.f32 %v3935, %v3982
        %v3984 = vpop.f32.mrf.mxu0
        %3985 = vmatprep.mubr.bf16.mxu0 %v2616
        %3986 = vmatmul.mubr.bf16.gmra.mxu0 %v2615
        %v3987 = vpop.f32.mrf.mxu0
        %v3988 = vadd.f32 %v3940, %v3987
        %v3989 = vpop.f32.mrf.mxu0
        %v3990 = vpop.f32.mrf.mxu0
        %v3991 = vpop.f32.mrf.mxu0
        %3992 = vdwg.mxu0
        %3993 = vmatprep.subr.bf16.mxu0 0
        %3994 = vmatpush1.bf16.msra.mxu0 %v3776
        %3995 = vmatprep.subr.bf16.mxu0 0
        %3996 = vmatpush1.bf16.msra.mxu0 %v3775
        %3997 = vmatprep.subr.bf16.mxu0 0
        %3998 = vmatpush1.bf16.msra.mxu0 %v3774
        %3999 = vmatprep.subr.bf16.mxu0 0
        %4000 = vmatpush1.bf16.msra.mxu0 %v3773
        %4001 = vmatprep.subr.bf16.mxu0 0
        %4002 = vmatpush1.bf16.msra.mxu0 %v3772
        %4003 = vmatprep.subr.bf16.mxu0 0
        %4004 = vmatpush1.bf16.msra.mxu0 %v3771
        %4005 = vmatprep.subr.bf16.mxu0 0
        %4006 = vmatpush1.bf16.msra.mxu0 %v3770
        %4007 = vmatprep.subr.bf16.mxu0 0
        %4008 = vmatpush1.bf16.msra.mxu0 %v3769
        %4009 = vmatprep.subr.bf16.mxu0 0
        %4010 = vmatpush2.bf16.msra.mxu0 %v3784
        %4011 = vmatprep.subr.bf16.mxu0 0
        %4012 = vmatpush2.bf16.msra.mxu0 %v3783
        %4013 = vmatprep.subr.bf16.mxu0 0
        %4014 = vmatpush2.bf16.msra.mxu0 %v3782
        %4015 = vmatprep.subr.bf16.mxu0 0
        %4016 = vmatpush2.bf16.msra.mxu0 %v3781
        %4017 = vmatprep.subr.bf16.mxu0 0
        %4018 = vmatpush2.bf16.msra.mxu0 %v3780
        %4019 = vmatprep.subr.bf16.mxu0 0
        %4020 = vmatpush2.bf16.msra.mxu0 %v3779
        %4021 = vmatprep.subr.bf16.mxu0 0
        %4022 = vmatpush2.bf16.msra.mxu0 %v3778
        %4023 = vmatprep.subr.bf16.mxu0 0
        %4024 = vmatpush2.bf16.msra.mxu0 %v3777
        %4025 = vmatprep.mubr.bf16.mxu0 %v2610
        %4026 = vmatmul.mubr.bf16.gmra.mxu0 %v2609
        %v4027 = vpop.f32.mrf.mxu0
        %v4028 = vadd.f32 %v3980, %v4027
        %v4029 = vpop.f32.mrf.mxu0
        %v4030 = vpop.f32.mrf.mxu0
        %v4031 = vadd.f32 %v3983, %v4030
        %v4032 = vpop.f32.mrf.mxu0
        %4033 = vmatprep.mubr.bf16.mxu0 %v2618
        %4034 = vmatmul.mubr.bf16.gmra.mxu0 %v2617
        %v4035 = vpop.f32.mrf.mxu0
        %v4036 = vadd.f32 %v3988, %v4035
        %v4037 = vpop.f32.mrf.mxu0
        %v4038 = vpop.f32.mrf.mxu0
        %v4039 = vpop.f32.mrf.mxu0
        %4040 = vdwg.mxu0
        %v4041 = vpack.c.bf16 %v4031, %v4028
        %v4042 = vpack.c.bf16 %v4036, %v4036
        %v4043 = vld [vmem:[%s551] sm:$0x1]
        %vm4044 = vcmask 162816
        %v4046 = vsel %vm4044, %v4043, 0
        %v4049 = vsel %vm3323, %v4042, 0
        %4051 = vmatprep.subr.bf16.mxu0 0
        %4052 = vmatpush1.bf16.msra.mxu0 0
        %4053 = vmatprep.subr.bf16.mxu0 0
        %4054 = vmatpush1.bf16.msra.mxu0 0
        %4055 = vmatprep.subr.bf16.mxu0 0
        %4056 = vmatpush1.bf16.msra.mxu0 0
        %4057 = vmatprep.subr.bf16.mxu0 0
        %4058 = vmatpush1.bf16.msra.mxu0 0
        %4059 = vmatprep.subr.bf16.mxu0 0
        %4060 = vmatpush1.bf16.msra.mxu0 0
        %4061 = vmatprep.subr.bf16.mxu0 0
        %4062 = vmatpush1.bf16.msra.mxu0 0
        %4063 = vmatprep.subr.bf16.mxu0 0
        %4064 = vmatpush1.bf16.msra.mxu0 %v4049
        %4065 = vmatprep.subr.bf16.mxu0 0
        %4066 = vmatpush1.bf16.msra.mxu0 %v4041
        %4067 = vmatprep.subr.bf16.mxu0 0
        %4068 = vmatpush2.bf16.msra.mxu0 0
        %4069 = vmatprep.subr.bf16.mxu0 0
        %4070 = vmatpush2.bf16.msra.mxu0 0
        %4071 = vmatprep.subr.bf16.mxu0 0
        %4072 = vmatpush2.bf16.msra.mxu0 0
        %4073 = vmatprep.subr.bf16.mxu0 0
        %4074 = vmatpush2.bf16.msra.mxu0 0
        %4075 = vmatprep.subr.bf16.mxu0 0
        %4076 = vmatpush2.bf16.msra.mxu0 0
        %4077 = vmatprep.subr.bf16.mxu0 0
        %4078 = vmatpush2.bf16.msra.mxu0 0
        %4079 = vmatprep.subr.bf16.mxu0 0
        %4080 = vmatpush2.bf16.msra.mxu0 0
        %4081 = vmatprep.subr.bf16.mxu0 0
        %4082 = vmatpush2.bf16.msra.mxu0 0
        %4083 = vmatprep.mubr.bf16.mxu0 0
        %4084 = vmatmul.mubr.bf16.gmra.mxu0 %v4046
        %v4085 = vpop.f32.mrf.mxu0
        %v4086 = vadd.f32 0.0, %v4085
        %v4087 = vpop.f32.mrf.mxu0
        %v4088 = vpop.f32.mrf.mxu0
        %v4089 = vpop.f32.mrf.mxu0
        %4090 = vdwg.mxu0
        %v4091 = vpack.c.bf16 %v4086, %v4086
        %v4092 = vld [vmem:[%s544] sm:$0xf]
        %v4093 = vld [vmem:[%s544 + $0x4] sm:$0xf]
        %v4094 = vld [vmem:[%s544 + $0x8] sm:$0xf]
        %v4095 = vld [vmem:[%s544 + $0xc] sm:$0xf]
        %v4096 = vld [vmem:[%s544 + $0x10] sm:$0xf]
        %v4097 = vld [vmem:[%s544 + $0x14] sm:$0xf]
        %v4098 = vld [vmem:[%s544 + $0x18] sm:$0xf]
        %v4099 = vld [vmem:[%s544 + $0x1c] sm:$0xf]
        %v4100 = vld [vmem:[%s544 + $0x20] sm:$0xf]
        %v4101 = vld [vmem:[%s544 + $0x24] sm:$0xf]
        %v4102 = vld [vmem:[%s544 + $0x28] sm:$0xf]
        %v4103 = vld [vmem:[%s544 + $0x2c] sm:$0xf]
        %v4104 = vld [vmem:[%s544 + $0x30] sm:$0xf]
        %v4105 = vld [vmem:[%s544 + $0x34] sm:$0xf]
        %v4106 = vld [vmem:[%s544 + $0x38] sm:$0xf]
        %v4107 = vld [vmem:[%s544 + $0x3c] sm:$0xf]
        %s4108 = scalar_lea.vmem %s551, 1
        %v4109 = vld [vmem:[%s4108] sm:$0x1]
        %v4111 = vsel %vm4044, %v4109, 0
        %4113 = vmatprep.subr.bf16.mxu0 0
        %4114 = vmatpush1.bf16.msra.mxu0 0
        %4115 = vmatprep.subr.bf16.mxu0 0
        %4116 = vmatpush1.bf16.msra.mxu0 0
        %4117 = vmatprep.subr.bf16.mxu0 0
        %4118 = vmatpush1.bf16.msra.mxu0 0
        %4119 = vmatprep.subr.bf16.mxu0 0
        %4120 = vmatpush1.bf16.msra.mxu0 0
        %4121 = vmatprep.subr.bf16.mxu0 0
        %4122 = vmatpush1.bf16.msra.mxu0 0
        %4123 = vmatprep.subr.bf16.mxu0 0
        %4124 = vmatpush1.bf16.msra.mxu0 0
        %4125 = vmatprep.subr.bf16.mxu0 0
        %4126 = vmatpush1.bf16.msra.mxu0 %v4049
        %4127 = vmatprep.subr.bf16.mxu0 0
        %4128 = vmatpush1.bf16.msra.mxu0 %v4041
        %4129 = vmatprep.subr.bf16.mxu0 0
        %4130 = vmatpush2.bf16.msra.mxu0 0
        %4131 = vmatprep.subr.bf16.mxu0 0
        %4132 = vmatpush2.bf16.msra.mxu0 0
        %4133 = vmatprep.subr.bf16.mxu0 0
        %4134 = vmatpush2.bf16.msra.mxu0 0
        %4135 = vmatprep.subr.bf16.mxu0 0
        %4136 = vmatpush2.bf16.msra.mxu0 0
        %4137 = vmatprep.subr.bf16.mxu0 0
        %4138 = vmatpush2.bf16.msra.mxu0 0
        %4139 = vmatprep.subr.bf16.mxu0 0
        %4140 = vmatpush2.bf16.msra.mxu0 0
        %4141 = vmatprep.subr.bf16.mxu0 0
        %4142 = vmatpush2.bf16.msra.mxu0 0
        %4143 = vmatprep.subr.bf16.mxu0 0
        %4144 = vmatpush2.bf16.msra.mxu0 0
        %4145 = vmatprep.mubr.bf16.mxu0 0
        %4146 = vmatmul.mubr.bf16.gmra.mxu0 %v4111
        %v4147 = vpop.f32.mrf.mxu0
        %v4148 = vadd.f32 0.0, %v4147
        %v4149 = vpop.f32.mrf.mxu0
        %v4150 = vpop.f32.mrf.mxu0
        %v4151 = vpop.f32.mrf.mxu0
        %4152 = vdwg.mxu0
        %v4153 = vpack.c.bf16 %v4148, %v4148
        %s4154 = scalar_lea.vmem %s544, 64
        %v4155 = vld [vmem:[%s4154] sm:$0xf]
        %v4156 = vld [vmem:[%s4154 + $0x4] sm:$0xf]
        %v4157 = vld [vmem:[%s4154 + $0x8] sm:$0xf]
        %v4158 = vld [vmem:[%s4154 + $0xc] sm:$0xf]
        %v4159 = vld [vmem:[%s4154 + $0x10] sm:$0xf]
        %v4160 = vld [vmem:[%s4154 + $0x14] sm:$0xf]
        %v4161 = vld [vmem:[%s4154 + $0x18] sm:$0xf]
        %v4162 = vld [vmem:[%s4154 + $0x1c] sm:$0xf]
        %v4163 = vld [vmem:[%s4154 + $0x20] sm:$0xf]
        %v4164 = vld [vmem:[%s4154 + $0x24] sm:$0xf]
        %v4165 = vld [vmem:[%s4154 + $0x28] sm:$0xf]
        %v4166 = vld [vmem:[%s4154 + $0x2c] sm:$0xf]
        %v4167 = vld [vmem:[%s4154 + $0x30] sm:$0xf]
        %v4168 = vld [vmem:[%s4154 + $0x34] sm:$0xf]
        %v4169 = vld [vmem:[%s4154 + $0x38] sm:$0xf]
        %v4170 = vld [vmem:[%s4154 + $0x3c] sm:$0xf]
        %v4187 = vunpack.c.l.b16 %v4155
        %v4188 = vunpack.c.l.b16 %v4156
        %v4189 = vunpack.c.l.b16 %v4157
        %v4190 = vunpack.c.l.b16 %v4158
        %v4191 = vunpack.c.l.b16 %v4159
        %v4192 = vunpack.c.l.b16 %v4160
        %v4193 = vunpack.c.l.b16 %v4161
        %v4194 = vunpack.c.l.b16 %v4162
        %v4195 = vunpack.c.l.b16 %v4163
        %v4196 = vunpack.c.l.b16 %v4164
        %v4197 = vunpack.c.l.b16 %v4165
        %v4198 = vunpack.c.l.b16 %v4166
        %v4199 = vunpack.c.l.b16 %v4167
        %v4200 = vunpack.c.l.b16 %v4168
        %v4201 = vunpack.c.l.b16 %v4169
        %v4202 = vunpack.c.l.b16 %v4170
        %v4203 = vpack.c.b16 %v4188, %v4187
        %v4204 = vpack.c.b16 %v4190, %v4189
        %v4205 = vpack.c.b16 %v4192, %v4191
        %v4206 = vpack.c.b16 %v4194, %v4193
        %v4207 = vpack.c.b16 %v4196, %v4195
        %v4208 = vpack.c.b16 %v4198, %v4197
        %v4209 = vpack.c.b16 %v4200, %v4199
        %v4210 = vpack.c.b16 %v4202, %v4201
        %4219 = vmatprep.subr.bf16.mxu0 0
        %4220 = vmatpush1.bf16.msra.mxu0 %v4210
        %4221 = vmatprep.subr.bf16.mxu0 0
        %4222 = vmatpush1.bf16.msra.mxu0 %v4209
        %4223 = vmatprep.subr.bf16.mxu0 0
        %4224 = vmatpush1.bf16.msra.mxu0 %v4208
        %4225 = vmatprep.subr.bf16.mxu0 0
        %4226 = vmatpush1.bf16.msra.mxu0 %v4207
        %4227 = vmatprep.subr.bf16.mxu0 0
        %4228 = vmatpush1.bf16.msra.mxu0 %v4206
        %4229 = vmatprep.subr.bf16.mxu0 0
        %4230 = vmatpush1.bf16.msra.mxu0 %v4205
        %4231 = vmatprep.subr.bf16.mxu0 0
        %4232 = vmatpush1.bf16.msra.mxu0 %v4204
        %4233 = vmatprep.subr.bf16.mxu0 0
        %4234 = vmatpush1.bf16.msra.mxu0 %v4203
        %4235 = vmatprep.subr.bf16.mxu0 0
        %4236 = vmatpush2.bf16.msra.mxu0 0
        %4237 = vmatprep.subr.bf16.mxu0 0
        %4238 = vmatpush2.bf16.msra.mxu0 0
        %4239 = vmatprep.subr.bf16.mxu0 0
        %4240 = vmatpush2.bf16.msra.mxu0 0
        %4241 = vmatprep.subr.bf16.mxu0 0
        %4242 = vmatpush2.bf16.msra.mxu0 0
        %4243 = vmatprep.subr.bf16.mxu0 0
        %4244 = vmatpush2.bf16.msra.mxu0 0
        %4245 = vmatprep.subr.bf16.mxu0 0
        %4246 = vmatpush2.bf16.msra.mxu0 0
        %4247 = vmatprep.subr.bf16.mxu0 0
        %4248 = vmatpush2.bf16.msra.mxu0 0
        %4249 = vmatprep.subr.bf16.mxu0 0
        %4250 = vmatpush2.bf16.msra.mxu0 0
        %4251 = vmatprep.mubr.bf16.mxu0 0
        %4252 = vmatmul.mubr.bf16.gmra.mxu0 %v4153
        %v4253 = vpop.f32.mrf.mxu0
        %v4254 = vadd.f32 0.0, %v4253
        %v4255 = vpop.f32.mrf.mxu0
        %v4256 = vpop.f32.mrf.mxu0
        %v4257 = vpop.f32.mrf.mxu0
        %4258 = vdwg.mxu0
        %v4275 = vunpack.c.l.b16 %v4092
        %v4276 = vunpack.c.l.b16 %v4093
        %v4277 = vunpack.c.l.b16 %v4094
        %v4278 = vunpack.c.l.b16 %v4095
        %v4279 = vunpack.c.l.b16 %v4096
        %v4280 = vunpack.c.l.b16 %v4097
        %v4281 = vunpack.c.l.b16 %v4098
        %v4282 = vunpack.c.l.b16 %v4099
        %v4283 = vunpack.c.l.b16 %v4100
        %v4284 = vunpack.c.l.b16 %v4101
        %v4285 = vunpack.c.l.b16 %v4102
        %v4286 = vunpack.c.l.b16 %v4103
        %v4287 = vunpack.c.l.b16 %v4104
        %v4288 = vunpack.c.l.b16 %v4105
        %v4289 = vunpack.c.l.b16 %v4106
        %v4290 = vunpack.c.l.b16 %v4107
        %v4291 = vpack.c.b16 %v4276, %v4275
        %v4292 = vpack.c.b16 %v4278, %v4277
        %v4293 = vpack.c.b16 %v4280, %v4279
        %v4294 = vpack.c.b16 %v4282, %v4281
        %v4295 = vpack.c.b16 %v4284, %v4283
        %v4296 = vpack.c.b16 %v4286, %v4285
        %v4297 = vpack.c.b16 %v4288, %v4287
        %v4298 = vpack.c.b16 %v4290, %v4289
        %4307 = vmatprep.subr.bf16.mxu0 0
        %4308 = vmatpush1.bf16.msra.mxu0 %v4298
        %4309 = vmatprep.subr.bf16.mxu0 0
        %4310 = vmatpush1.bf16.msra.mxu0 %v4297
        %4311 = vmatprep.subr.bf16.mxu0 0
        %4312 = vmatpush1.bf16.msra.mxu0 %v4296
        %4313 = vmatprep.subr.bf16.mxu0 0
        %4314 = vmatpush1.bf16.msra.mxu0 %v4295
        %4315 = vmatprep.subr.bf16.mxu0 0
        %4316 = vmatpush1.bf16.msra.mxu0 %v4294
        %4317 = vmatprep.subr.bf16.mxu0 0
        %4318 = vmatpush1.bf16.msra.mxu0 %v4293
        %4319 = vmatprep.subr.bf16.mxu0 0
        %4320 = vmatpush1.bf16.msra.mxu0 %v4292
        %4321 = vmatprep.subr.bf16.mxu0 0
        %4322 = vmatpush1.bf16.msra.mxu0 %v4291
        %4323 = vmatprep.subr.bf16.mxu0 0
        %4324 = vmatpush2.bf16.msra.mxu0 0
        %4325 = vmatprep.subr.bf16.mxu0 0
        %4326 = vmatpush2.bf16.msra.mxu0 0
        %4327 = vmatprep.subr.bf16.mxu0 0
        %4328 = vmatpush2.bf16.msra.mxu0 0
        %4329 = vmatprep.subr.bf16.mxu0 0
        %4330 = vmatpush2.bf16.msra.mxu0 0
        %4331 = vmatprep.subr.bf16.mxu0 0
        %4332 = vmatpush2.bf16.msra.mxu0 0
        %4333 = vmatprep.subr.bf16.mxu0 0
        %4334 = vmatpush2.bf16.msra.mxu0 0
        %4335 = vmatprep.subr.bf16.mxu0 0
        %4336 = vmatpush2.bf16.msra.mxu0 0
        %4337 = vmatprep.subr.bf16.mxu0 0
        %4338 = vmatpush2.bf16.msra.mxu0 0
        %4339 = vmatprep.mubr.bf16.mxu0 0
        %4340 = vmatmul.mubr.bf16.gmra.mxu0 %v4091
        %v4341 = vpop.f32.mrf.mxu0
        %v4342 = vadd.f32 %v4254, %v4341
        %v4343 = vpop.f32.mrf.mxu0
        %v4344 = vpop.f32.mrf.mxu0
        %v4345 = vpop.f32.mrf.mxu0
        %4346 = vdwg.mxu0
        %s4347 = scalar_lea.vmem %s551, 2
        %v4348 = vld [vmem:[%s4347] sm:$0x1]
        %v4350 = vsel %vm4044, %v4348, 0
        %4352 = vmatprep.subr.bf16.mxu0 0
        %4353 = vmatpush1.bf16.msra.mxu0 0
        %4354 = vmatprep.subr.bf16.mxu0 0
        %4355 = vmatpush1.bf16.msra.mxu0 0
        %4356 = vmatprep.subr.bf16.mxu0 0
        %4357 = vmatpush1.bf16.msra.mxu0 0
        %4358 = vmatprep.subr.bf16.mxu0 0
        %4359 = vmatpush1.bf16.msra.mxu0 0
        %4360 = vmatprep.subr.bf16.mxu0 0
        %4361 = vmatpush1.bf16.msra.mxu0 0
        %4362 = vmatprep.subr.bf16.mxu0 0
        %4363 = vmatpush1.bf16.msra.mxu0 0
        %4364 = vmatprep.subr.bf16.mxu0 0
        %4365 = vmatpush1.bf16.msra.mxu0 %v4049
        %4366 = vmatprep.subr.bf16.mxu0 0
        %4367 = vmatpush1.bf16.msra.mxu0 %v4041
        %4368 = vmatprep.subr.bf16.mxu0 0
        %4369 = vmatpush2.bf16.msra.mxu0 0
        %4370 = vmatprep.subr.bf16.mxu0 0
        %4371 = vmatpush2.bf16.msra.mxu0 0
        %4372 = vmatprep.subr.bf16.mxu0 0
        %4373 = vmatpush2.bf16.msra.mxu0 0
        %4374 = vmatprep.subr.bf16.mxu0 0
        %4375 = vmatpush2.bf16.msra.mxu0 0
        %4376 = vmatprep.subr.bf16.mxu0 0
        %4377 = vmatpush2.bf16.msra.mxu0 0
        %4378 = vmatprep.subr.bf16.mxu0 0
        %4379 = vmatpush2.bf16.msra.mxu0 0
        %4380 = vmatprep.subr.bf16.mxu0 0
        %4381 = vmatpush2.bf16.msra.mxu0 0
        %4382 = vmatprep.subr.bf16.mxu0 0
        %4383 = vmatpush2.bf16.msra.mxu0 0
        %4384 = vmatprep.mubr.bf16.mxu0 0
        %4385 = vmatmul.mubr.bf16.gmra.mxu0 %v4350
        %v4386 = vpop.f32.mrf.mxu0
        %v4387 = vadd.f32 0.0, %v4386
        %v4388 = vpop.f32.mrf.mxu0
        %v4389 = vpop.f32.mrf.mxu0
        %v4390 = vpop.f32.mrf.mxu0
        %4391 = vdwg.mxu0
        %v4392 = vpack.c.bf16 %v4387, %v4387
        %s4393 = scalar_lea.vmem %s544, 128
        %v4394 = vld [vmem:[%s4393] sm:$0xf]
        %v4395 = vld [vmem:[%s4393 + $0x4] sm:$0xf]
        %v4396 = vld [vmem:[%s4393 + $0x8] sm:$0xf]
        %v4397 = vld [vmem:[%s4393 + $0xc] sm:$0xf]
        %v4398 = vld [vmem:[%s4393 + $0x10] sm:$0xf]
        %v4399 = vld [vmem:[%s4393 + $0x14] sm:$0xf]
        %v4400 = vld [vmem:[%s4393 + $0x18] sm:$0xf]
        %v4401 = vld [vmem:[%s4393 + $0x1c] sm:$0xf]
        %v4402 = vld [vmem:[%s4393 + $0x20] sm:$0xf]
        %v4403 = vld [vmem:[%s4393 + $0x24] sm:$0xf]
        %v4404 = vld [vmem:[%s4393 + $0x28] sm:$0xf]
        %v4405 = vld [vmem:[%s4393 + $0x2c] sm:$0xf]
        %v4406 = vld [vmem:[%s4393 + $0x30] sm:$0xf]
        %v4407 = vld [vmem:[%s4393 + $0x34] sm:$0xf]
        %v4408 = vld [vmem:[%s4393 + $0x38] sm:$0xf]
        %v4409 = vld [vmem:[%s4393 + $0x3c] sm:$0xf]
        %v4426 = vunpack.c.l.b16 %v4394
        %v4427 = vunpack.c.l.b16 %v4395
        %v4428 = vunpack.c.l.b16 %v4396
        %v4429 = vunpack.c.l.b16 %v4397
        %v4430 = vunpack.c.l.b16 %v4398
        %v4431 = vunpack.c.l.b16 %v4399
        %v4432 = vunpack.c.l.b16 %v4400
        %v4433 = vunpack.c.l.b16 %v4401
        %v4434 = vunpack.c.l.b16 %v4402
        %v4435 = vunpack.c.l.b16 %v4403
        %v4436 = vunpack.c.l.b16 %v4404
        %v4437 = vunpack.c.l.b16 %v4405
        %v4438 = vunpack.c.l.b16 %v4406
        %v4439 = vunpack.c.l.b16 %v4407
        %v4440 = vunpack.c.l.b16 %v4408
        %v4441 = vunpack.c.l.b16 %v4409
        %v4442 = vpack.c.b16 %v4427, %v4426
        %v4443 = vpack.c.b16 %v4429, %v4428
        %v4444 = vpack.c.b16 %v4431, %v4430
        %v4445 = vpack.c.b16 %v4433, %v4432
        %v4446 = vpack.c.b16 %v4435, %v4434
        %v4447 = vpack.c.b16 %v4437, %v4436
        %v4448 = vpack.c.b16 %v4439, %v4438
        %v4449 = vpack.c.b16 %v4441, %v4440
        %4458 = vmatprep.subr.bf16.mxu0 0
        %4459 = vmatpush1.bf16.msra.mxu0 %v4449
        %4460 = vmatprep.subr.bf16.mxu0 0
        %4461 = vmatpush1.bf16.msra.mxu0 %v4448
        %4462 = vmatprep.subr.bf16.mxu0 0
        %4463 = vmatpush1.bf16.msra.mxu0 %v4447
        %4464 = vmatprep.subr.bf16.mxu0 0
        %4465 = vmatpush1.bf16.msra.mxu0 %v4446
        %4466 = vmatprep.subr.bf16.mxu0 0
        %4467 = vmatpush1.bf16.msra.mxu0 %v4445
        %4468 = vmatprep.subr.bf16.mxu0 0
        %4469 = vmatpush1.bf16.msra.mxu0 %v4444
        %4470 = vmatprep.subr.bf16.mxu0 0
        %4471 = vmatpush1.bf16.msra.mxu0 %v4443
        %4472 = vmatprep.subr.bf16.mxu0 0
        %4473 = vmatpush1.bf16.msra.mxu0 %v4442
        %4474 = vmatprep.subr.bf16.mxu0 0
        %4475 = vmatpush2.bf16.msra.mxu0 0
        %4476 = vmatprep.subr.bf16.mxu0 0
        %4477 = vmatpush2.bf16.msra.mxu0 0
        %4478 = vmatprep.subr.bf16.mxu0 0
        %4479 = vmatpush2.bf16.msra.mxu0 0
        %4480 = vmatprep.subr.bf16.mxu0 0
        %4481 = vmatpush2.bf16.msra.mxu0 0
        %4482 = vmatprep.subr.bf16.mxu0 0
        %4483 = vmatpush2.bf16.msra.mxu0 0
        %4484 = vmatprep.subr.bf16.mxu0 0
        %4485 = vmatpush2.bf16.msra.mxu0 0
        %4486 = vmatprep.subr.bf16.mxu0 0
        %4487 = vmatpush2.bf16.msra.mxu0 0
        %4488 = vmatprep.subr.bf16.mxu0 0
        %4489 = vmatpush2.bf16.msra.mxu0 0
        %4490 = vmatprep.mubr.bf16.mxu0 0
        %4491 = vmatmul.mubr.bf16.gmra.mxu0 %v4392
        %v4492 = vpop.f32.mrf.mxu0
        %v4493 = vadd.f32 0.0, %v4492
        %v4494 = vpop.f32.mrf.mxu0
        %v4495 = vpop.f32.mrf.mxu0
        %v4496 = vpop.f32.mrf.mxu0
        %4497 = vdwg.mxu0
        %v4498 = vadd.f32 %v4342, %v4493
        %s4499 = scalar_lea.vmem %s551, 3
        %v4500 = vld [vmem:[%s4499] sm:$0x1]
        %v4502 = vsel %vm4044, %v4500, 0
        %4504 = vmatprep.subr.bf16.mxu0 0
        %4505 = vmatpush1.bf16.msra.mxu0 0
        %4506 = vmatprep.subr.bf16.mxu0 0
        %4507 = vmatpush1.bf16.msra.mxu0 0
        %4508 = vmatprep.subr.bf16.mxu0 0
        %4509 = vmatpush1.bf16.msra.mxu0 0
        %4510 = vmatprep.subr.bf16.mxu0 0
        %4511 = vmatpush1.bf16.msra.mxu0 0
        %4512 = vmatprep.subr.bf16.mxu0 0
        %4513 = vmatpush1.bf16.msra.mxu0 0
        %4514 = vmatprep.subr.bf16.mxu0 0
        %4515 = vmatpush1.bf16.msra.mxu0 0
        %4516 = vmatprep.subr.bf16.mxu0 0
        %4517 = vmatpush1.bf16.msra.mxu0 %v4049
        %4518 = vmatprep.subr.bf16.mxu0 0
        %4519 = vmatpush1.bf16.msra.mxu0 %v4041
        %4520 = vmatprep.subr.bf16.mxu0 0
        %4521 = vmatpush2.bf16.msra.mxu0 0
        %4522 = vmatprep.subr.bf16.mxu0 0
        %4523 = vmatpush2.bf16.msra.mxu0 0
        %4524 = vmatprep.subr.bf16.mxu0 0
        %4525 = vmatpush2.bf16.msra.mxu0 0
        %4526 = vmatprep.subr.bf16.mxu0 0
        %4527 = vmatpush2.bf16.msra.mxu0 0
        %4528 = vmatprep.subr.bf16.mxu0 0
        %4529 = vmatpush2.bf16.msra.mxu0 0
        %4530 = vmatprep.subr.bf16.mxu0 0
        %4531 = vmatpush2.bf16.msra.mxu0 0
        %4532 = vmatprep.subr.bf16.mxu0 0
        %4533 = vmatpush2.bf16.msra.mxu0 0
        %4534 = vmatprep.subr.bf16.mxu0 0
        %4535 = vmatpush2.bf16.msra.mxu0 0
        %4536 = vmatprep.mubr.bf16.mxu0 0
        %4537 = vmatmul.mubr.bf16.gmra.mxu0 %v4502
        %v4538 = vpop.f32.mrf.mxu0
        %v4539 = vadd.f32 0.0, %v4538
        %v4540 = vpop.f32.mrf.mxu0
        %v4541 = vpop.f32.mrf.mxu0
        %v4542 = vpop.f32.mrf.mxu0
        %4543 = vdwg.mxu0
        %v4544 = vpack.c.bf16 %v4539, %v4539
        %s4545 = scalar_lea.vmem %s544, 192
        %v4546 = vld [vmem:[%s4545] sm:$0xf]
        %v4547 = vld [vmem:[%s4545 + $0x4] sm:$0xf]
        %v4548 = vld [vmem:[%s4545 + $0x8] sm:$0xf]
        %v4549 = vld [vmem:[%s4545 + $0xc] sm:$0xf]
        %v4550 = vld [vmem:[%s4545 + $0x10] sm:$0xf]
        %v4551 = vld [vmem:[%s4545 + $0x14] sm:$0xf]
        %v4552 = vld [vmem:[%s4545 + $0x18] sm:$0xf]
        %v4553 = vld [vmem:[%s4545 + $0x1c] sm:$0xf]
        %v4554 = vld [vmem:[%s4545 + $0x20] sm:$0xf]
        %v4555 = vld [vmem:[%s4545 + $0x24] sm:$0xf]
        %v4556 = vld [vmem:[%s4545 + $0x28] sm:$0xf]
        %v4557 = vld [vmem:[%s4545 + $0x2c] sm:$0xf]
        %v4558 = vld [vmem:[%s4545 + $0x30] sm:$0xf]
        %v4559 = vld [vmem:[%s4545 + $0x34] sm:$0xf]
        %v4560 = vld [vmem:[%s4545 + $0x38] sm:$0xf]
        %v4561 = vld [vmem:[%s4545 + $0x3c] sm:$0xf]
        %v4578 = vunpack.c.l.b16 %v4546
        %v4579 = vunpack.c.l.b16 %v4547
        %v4580 = vunpack.c.l.b16 %v4548
        %v4581 = vunpack.c.l.b16 %v4549
        %v4582 = vunpack.c.l.b16 %v4550
        %v4583 = vunpack.c.l.b16 %v4551
        %v4584 = vunpack.c.l.b16 %v4552
        %v4585 = vunpack.c.l.b16 %v4553
        %v4586 = vunpack.c.l.b16 %v4554
        %v4587 = vunpack.c.l.b16 %v4555
        %v4588 = vunpack.c.l.b16 %v4556
        %v4589 = vunpack.c.l.b16 %v4557
        %v4590 = vunpack.c.l.b16 %v4558
        %v4591 = vunpack.c.l.b16 %v4559
        %v4592 = vunpack.c.l.b16 %v4560
        %v4593 = vunpack.c.l.b16 %v4561
        %v4594 = vpack.c.b16 %v4579, %v4578
        %v4595 = vpack.c.b16 %v4581, %v4580
        %v4596 = vpack.c.b16 %v4583, %v4582
        %v4597 = vpack.c.b16 %v4585, %v4584
        %v4598 = vpack.c.b16 %v4587, %v4586
        %v4599 = vpack.c.b16 %v4589, %v4588
        %v4600 = vpack.c.b16 %v4591, %v4590
        %v4601 = vpack.c.b16 %v4593, %v4592
        %4610 = vmatprep.subr.bf16.mxu0 0
        %4611 = vmatpush1.bf16.msra.mxu0 %v4601
        %4612 = vmatprep.subr.bf16.mxu0 0
        %4613 = vmatpush1.bf16.msra.mxu0 %v4600
        %4614 = vmatprep.subr.bf16.mxu0 0
        %4615 = vmatpush1.bf16.msra.mxu0 %v4599
        %4616 = vmatprep.subr.bf16.mxu0 0
        %4617 = vmatpush1.bf16.msra.mxu0 %v4598
        %4618 = vmatprep.subr.bf16.mxu0 0
        %4619 = vmatpush1.bf16.msra.mxu0 %v4597
        %4620 = vmatprep.subr.bf16.mxu0 0
        %4621 = vmatpush1.bf16.msra.mxu0 %v4596
        %4622 = vmatprep.subr.bf16.mxu0 0
        %4623 = vmatpush1.bf16.msra.mxu0 %v4595
        %4624 = vmatprep.subr.bf16.mxu0 0
        %4625 = vmatpush1.bf16.msra.mxu0 %v4594
        %4626 = vmatprep.subr.bf16.mxu0 0
        %4627 = vmatpush2.bf16.msra.mxu0 0
        %4628 = vmatprep.subr.bf16.mxu0 0
        %4629 = vmatpush2.bf16.msra.mxu0 0
        %4630 = vmatprep.subr.bf16.mxu0 0
        %4631 = vmatpush2.bf16.msra.mxu0 0
        %4632 = vmatprep.subr.bf16.mxu0 0
        %4633 = vmatpush2.bf16.msra.mxu0 0
        %4634 = vmatprep.subr.bf16.mxu0 0
        %4635 = vmatpush2.bf16.msra.mxu0 0
        %4636 = vmatprep.subr.bf16.mxu0 0
        %4637 = vmatpush2.bf16.msra.mxu0 0
        %4638 = vmatprep.subr.bf16.mxu0 0
        %4639 = vmatpush2.bf16.msra.mxu0 0
        %4640 = vmatprep.subr.bf16.mxu0 0
        %4641 = vmatpush2.bf16.msra.mxu0 0
        %4642 = vmatprep.mubr.bf16.mxu0 0
        %4643 = vmatmul.mubr.bf16.gmra.mxu0 %v4544
        %v4644 = vpop.f32.mrf.mxu0
        %v4645 = vadd.f32 0.0, %v4644
        %v4646 = vpop.f32.mrf.mxu0
        %v4647 = vpop.f32.mrf.mxu0
        %v4648 = vpop.f32.mrf.mxu0
        %4649 = vdwg.mxu0
        %v4650 = vadd.f32 %v4498, %v4645
        %s4651 = scalar_lea.vmem %s551, 4
        %v4652 = vld [vmem:[%s4651] sm:$0x1]
        %v4654 = vsel %vm4044, %v4652, 0
        %4656 = vmatprep.subr.bf16.mxu0 0
        %4657 = vmatpush1.bf16.msra.mxu0 0
        %4658 = vmatprep.subr.bf16.mxu0 0
        %4659 = vmatpush1.bf16.msra.mxu0 0
        %4660 = vmatprep.subr.bf16.mxu0 0
        %4661 = vmatpush1.bf16.msra.mxu0 0
        %4662 = vmatprep.subr.bf16.mxu0 0
        %4663 = vmatpush1.bf16.msra.mxu0 0
        %4664 = vmatprep.subr.bf16.mxu0 0
        %4665 = vmatpush1.bf16.msra.mxu0 0
        %4666 = vmatprep.subr.bf16.mxu0 0
        %4667 = vmatpush1.bf16.msra.mxu0 0
        %4668 = vmatprep.subr.bf16.mxu0 0
        %4669 = vmatpush1.bf16.msra.mxu0 %v4049
        %4670 = vmatprep.subr.bf16.mxu0 0
        %4671 = vmatpush1.bf16.msra.mxu0 %v4041
        %4672 = vmatprep.subr.bf16.mxu0 0
        %4673 = vmatpush2.bf16.msra.mxu0 0
        %4674 = vmatprep.subr.bf16.mxu0 0
        %4675 = vmatpush2.bf16.msra.mxu0 0
        %4676 = vmatprep.subr.bf16.mxu0 0
        %4677 = vmatpush2.bf16.msra.mxu0 0
        %4678 = vmatprep.subr.bf16.mxu0 0
        %4679 = vmatpush2.bf16.msra.mxu0 0
        %4680 = vmatprep.subr.bf16.mxu0 0
        %4681 = vmatpush2.bf16.msra.mxu0 0
        %4682 = vmatprep.subr.bf16.mxu0 0
        %4683 = vmatpush2.bf16.msra.mxu0 0
        %4684 = vmatprep.subr.bf16.mxu0 0
        %4685 = vmatpush2.bf16.msra.mxu0 0
        %4686 = vmatprep.subr.bf16.mxu0 0
        %4687 = vmatpush2.bf16.msra.mxu0 0
        %4688 = vmatprep.mubr.bf16.mxu0 0
        %4689 = vmatmul.mubr.bf16.gmra.mxu0 %v4654
        %v4690 = vpop.f32.mrf.mxu0
        %v4691 = vadd.f32 0.0, %v4690
        %v4692 = vpop.f32.mrf.mxu0
        %v4693 = vpop.f32.mrf.mxu0
        %v4694 = vpop.f32.mrf.mxu0
        %4695 = vdwg.mxu0
        %v4696 = vpack.c.bf16 %v4691, %v4691
        %s4697 = scalar_lea.vmem %s544, 256
        %v4698 = vld [vmem:[%s4697] sm:$0xf]
        %v4699 = vld [vmem:[%s4697 + $0x4] sm:$0xf]
        %v4700 = vld [vmem:[%s4697 + $0x8] sm:$0xf]
        %v4701 = vld [vmem:[%s4697 + $0xc] sm:$0xf]
        %v4702 = vld [vmem:[%s4697 + $0x10] sm:$0xf]
        %v4703 = vld [vmem:[%s4697 + $0x14] sm:$0xf]
        %v4704 = vld [vmem:[%s4697 + $0x18] sm:$0xf]
        %v4705 = vld [vmem:[%s4697 + $0x1c] sm:$0xf]
        %v4706 = vld [vmem:[%s4697 + $0x20] sm:$0xf]
        %v4707 = vld [vmem:[%s4697 + $0x24] sm:$0xf]
        %v4708 = vld [vmem:[%s4697 + $0x28] sm:$0xf]
        %v4709 = vld [vmem:[%s4697 + $0x2c] sm:$0xf]
        %v4710 = vld [vmem:[%s4697 + $0x30] sm:$0xf]
        %v4711 = vld [vmem:[%s4697 + $0x34] sm:$0xf]
        %v4712 = vld [vmem:[%s4697 + $0x38] sm:$0xf]
        %v4713 = vld [vmem:[%s4697 + $0x3c] sm:$0xf]
        %v4730 = vunpack.c.l.b16 %v4698
        %v4731 = vunpack.c.l.b16 %v4699
        %v4732 = vunpack.c.l.b16 %v4700
        %v4733 = vunpack.c.l.b16 %v4701
        %v4734 = vunpack.c.l.b16 %v4702
        %v4735 = vunpack.c.l.b16 %v4703
        %v4736 = vunpack.c.l.b16 %v4704
        %v4737 = vunpack.c.l.b16 %v4705
        %v4738 = vunpack.c.l.b16 %v4706
        %v4739 = vunpack.c.l.b16 %v4707
        %v4740 = vunpack.c.l.b16 %v4708
        %v4741 = vunpack.c.l.b16 %v4709
        %v4742 = vunpack.c.l.b16 %v4710
        %v4743 = vunpack.c.l.b16 %v4711
        %v4744 = vunpack.c.l.b16 %v4712
        %v4745 = vunpack.c.l.b16 %v4713
        %v4746 = vpack.c.b16 %v4731, %v4730
        %v4747 = vpack.c.b16 %v4733, %v4732
        %v4748 = vpack.c.b16 %v4735, %v4734
        %v4749 = vpack.c.b16 %v4737, %v4736
        %v4750 = vpack.c.b16 %v4739, %v4738
        %v4751 = vpack.c.b16 %v4741, %v4740
        %v4752 = vpack.c.b16 %v4743, %v4742
        %v4753 = vpack.c.b16 %v4745, %v4744
        %4762 = vmatprep.subr.bf16.mxu0 0
        %4763 = vmatpush1.bf16.msra.mxu0 %v4753
        %4764 = vmatprep.subr.bf16.mxu0 0
        %4765 = vmatpush1.bf16.msra.mxu0 %v4752
        %4766 = vmatprep.subr.bf16.mxu0 0
        %4767 = vmatpush1.bf16.msra.mxu0 %v4751
        %4768 = vmatprep.subr.bf16.mxu0 0
        %4769 = vmatpush1.bf16.msra.mxu0 %v4750
        %4770 = vmatprep.subr.bf16.mxu0 0
        %4771 = vmatpush1.bf16.msra.mxu0 %v4749
        %4772 = vmatprep.subr.bf16.mxu0 0
        %4773 = vmatpush1.bf16.msra.mxu0 %v4748
        %4774 = vmatprep.subr.bf16.mxu0 0
        %4775 = vmatpush1.bf16.msra.mxu0 %v4747
        %4776 = vmatprep.subr.bf16.mxu0 0
        %4777 = vmatpush1.bf16.msra.mxu0 %v4746
        %4778 = vmatprep.subr.bf16.mxu0 0
        %4779 = vmatpush2.bf16.msra.mxu0 0
        %4780 = vmatprep.subr.bf16.mxu0 0
        %4781 = vmatpush2.bf16.msra.mxu0 0
        %4782 = vmatprep.subr.bf16.mxu0 0
        %4783 = vmatpush2.bf16.msra.mxu0 0
        %4784 = vmatprep.subr.bf16.mxu0 0
        %4785 = vmatpush2.bf16.msra.mxu0 0
        %4786 = vmatprep.subr.bf16.mxu0 0
        %4787 = vmatpush2.bf16.msra.mxu0 0
        %4788 = vmatprep.subr.bf16.mxu0 0
        %4789 = vmatpush2.bf16.msra.mxu0 0
        %4790 = vmatprep.subr.bf16.mxu0 0
        %4791 = vmatpush2.bf16.msra.mxu0 0
        %4792 = vmatprep.subr.bf16.mxu0 0
        %4793 = vmatpush2.bf16.msra.mxu0 0
        %4794 = vmatprep.mubr.bf16.mxu0 0
        %4795 = vmatmul.mubr.bf16.gmra.mxu0 %v4696
        %v4796 = vpop.f32.mrf.mxu0
        %v4797 = vadd.f32 0.0, %v4796
        %v4798 = vpop.f32.mrf.mxu0
        %v4799 = vpop.f32.mrf.mxu0
        %v4800 = vpop.f32.mrf.mxu0
        %4801 = vdwg.mxu0
        %v4802 = vadd.f32 %v4650, %v4797
        %s4803 = scalar_lea.vmem %s551, 5
        %v4804 = vld [vmem:[%s4803] sm:$0x1]
        %v4806 = vsel %vm4044, %v4804, 0
        %4808 = vmatprep.subr.bf16.mxu0 0
        %4809 = vmatpush1.bf16.msra.mxu0 0
        %4810 = vmatprep.subr.bf16.mxu0 0
        %4811 = vmatpush1.bf16.msra.mxu0 0
        %4812 = vmatprep.subr.bf16.mxu0 0
        %4813 = vmatpush1.bf16.msra.mxu0 0
        %4814 = vmatprep.subr.bf16.mxu0 0
        %4815 = vmatpush1.bf16.msra.mxu0 0
        %4816 = vmatprep.subr.bf16.mxu0 0
        %4817 = vmatpush1.bf16.msra.mxu0 0
        %4818 = vmatprep.subr.bf16.mxu0 0
        %4819 = vmatpush1.bf16.msra.mxu0 0
        %4820 = vmatprep.subr.bf16.mxu0 0
        %4821 = vmatpush1.bf16.msra.mxu0 %v4049
        %4822 = vmatprep.subr.bf16.mxu0 0
        %4823 = vmatpush1.bf16.msra.mxu0 %v4041
        %4824 = vmatprep.subr.bf16.mxu0 0
        %4825 = vmatpush2.bf16.msra.mxu0 0
        %4826 = vmatprep.subr.bf16.mxu0 0
        %4827 = vmatpush2.bf16.msra.mxu0 0
        %4828 = vmatprep.subr.bf16.mxu0 0
        %4829 = vmatpush2.bf16.msra.mxu0 0
        %4830 = vmatprep.subr.bf16.mxu0 0
        %4831 = vmatpush2.bf16.msra.mxu0 0
        %4832 = vmatprep.subr.bf16.mxu0 0
        %4833 = vmatpush2.bf16.msra.mxu0 0
        %4834 = vmatprep.subr.bf16.mxu0 0
        %4835 = vmatpush2.bf16.msra.mxu0 0
        %4836 = vmatprep.subr.bf16.mxu0 0
        %4837 = vmatpush2.bf16.msra.mxu0 0
        %4838 = vmatprep.subr.bf16.mxu0 0
        %4839 = vmatpush2.bf16.msra.mxu0 0
        %4840 = vmatprep.mubr.bf16.mxu0 0
        %4841 = vmatmul.mubr.bf16.gmra.mxu0 %v4806
        %v4842 = vpop.f32.mrf.mxu0
        %v4843 = vadd.f32 0.0, %v4842
        %v4844 = vpop.f32.mrf.mxu0
        %v4845 = vpop.f32.mrf.mxu0
        %v4846 = vpop.f32.mrf.mxu0
        %4847 = vdwg.mxu0
        %v4848 = vpack.c.bf16 %v4843, %v4843
        %s4849 = scalar_lea.vmem %s544, 320
        %v4850 = vld [vmem:[%s4849] sm:$0xf]
        %v4851 = vld [vmem:[%s4849 + $0x4] sm:$0xf]
        %v4852 = vld [vmem:[%s4849 + $0x8] sm:$0xf]
        %v4853 = vld [vmem:[%s4849 + $0xc] sm:$0xf]
        %v4854 = vld [vmem:[%s4849 + $0x10] sm:$0xf]
        %v4855 = vld [vmem:[%s4849 + $0x14] sm:$0xf]
        %v4856 = vld [vmem:[%s4849 + $0x18] sm:$0xf]
        %v4857 = vld [vmem:[%s4849 + $0x1c] sm:$0xf]
        %v4858 = vld [vmem:[%s4849 + $0x20] sm:$0xf]
        %v4859 = vld [vmem:[%s4849 + $0x24] sm:$0xf]
        %v4860 = vld [vmem:[%s4849 + $0x28] sm:$0xf]
        %v4861 = vld [vmem:[%s4849 + $0x2c] sm:$0xf]
        %v4862 = vld [vmem:[%s4849 + $0x30] sm:$0xf]
        %v4863 = vld [vmem:[%s4849 + $0x34] sm:$0xf]
        %v4864 = vld [vmem:[%s4849 + $0x38] sm:$0xf]
        %v4865 = vld [vmem:[%s4849 + $0x3c] sm:$0xf]
        %v4882 = vunpack.c.l.b16 %v4850
        %v4883 = vunpack.c.l.b16 %v4851
        %v4884 = vunpack.c.l.b16 %v4852
        %v4885 = vunpack.c.l.b16 %v4853
        %v4886 = vunpack.c.l.b16 %v4854
        %v4887 = vunpack.c.l.b16 %v4855
        %v4888 = vunpack.c.l.b16 %v4856
        %v4889 = vunpack.c.l.b16 %v4857
        %v4890 = vunpack.c.l.b16 %v4858
        %v4891 = vunpack.c.l.b16 %v4859
        %v4892 = vunpack.c.l.b16 %v4860
        %v4893 = vunpack.c.l.b16 %v4861
        %v4894 = vunpack.c.l.b16 %v4862
        %v4895 = vunpack.c.l.b16 %v4863
        %v4896 = vunpack.c.l.b16 %v4864
        %v4897 = vunpack.c.l.b16 %v4865
        %v4898 = vpack.c.b16 %v4883, %v4882
        %v4899 = vpack.c.b16 %v4885, %v4884
        %v4900 = vpack.c.b16 %v4887, %v4886
        %v4901 = vpack.c.b16 %v4889, %v4888
        %v4902 = vpack.c.b16 %v4891, %v4890
        %v4903 = vpack.c.b16 %v4893, %v4892
        %v4904 = vpack.c.b16 %v4895, %v4894
        %v4905 = vpack.c.b16 %v4897, %v4896
        %4914 = vmatprep.subr.bf16.mxu0 0
        %4915 = vmatpush1.bf16.msra.mxu0 %v4905
        %4916 = vmatprep.subr.bf16.mxu0 0
        %4917 = vmatpush1.bf16.msra.mxu0 %v4904
        %4918 = vmatprep.subr.bf16.mxu0 0
        %4919 = vmatpush1.bf16.msra.mxu0 %v4903
        %4920 = vmatprep.subr.bf16.mxu0 0
        %4921 = vmatpush1.bf16.msra.mxu0 %v4902
        %4922 = vmatprep.subr.bf16.mxu0 0
        %4923 = vmatpush1.bf16.msra.mxu0 %v4901
        %4924 = vmatprep.subr.bf16.mxu0 0
        %4925 = vmatpush1.bf16.msra.mxu0 %v4900
        %4926 = vmatprep.subr.bf16.mxu0 0
        %4927 = vmatpush1.bf16.msra.mxu0 %v4899
        %4928 = vmatprep.subr.bf16.mxu0 0
        %4929 = vmatpush1.bf16.msra.mxu0 %v4898
        %4930 = vmatprep.subr.bf16.mxu0 0
        %4931 = vmatpush2.bf16.msra.mxu0 0
        %4932 = vmatprep.subr.bf16.mxu0 0
        %4933 = vmatpush2.bf16.msra.mxu0 0
        %4934 = vmatprep.subr.bf16.mxu0 0
        %4935 = vmatpush2.bf16.msra.mxu0 0
        %4936 = vmatprep.subr.bf16.mxu0 0
        %4937 = vmatpush2.bf16.msra.mxu0 0
        %4938 = vmatprep.subr.bf16.mxu0 0
        %4939 = vmatpush2.bf16.msra.mxu0 0
        %4940 = vmatprep.subr.bf16.mxu0 0
        %4941 = vmatpush2.bf16.msra.mxu0 0
        %4942 = vmatprep.subr.bf16.mxu0 0
        %4943 = vmatpush2.bf16.msra.mxu0 0
        %4944 = vmatprep.subr.bf16.mxu0 0
        %4945 = vmatpush2.bf16.msra.mxu0 0
        %4946 = vmatprep.mubr.bf16.mxu0 0
        %4947 = vmatmul.mubr.bf16.gmra.mxu0 %v4848
        %v4948 = vpop.f32.mrf.mxu0
        %v4949 = vadd.f32 0.0, %v4948
        %v4950 = vpop.f32.mrf.mxu0
        %v4951 = vpop.f32.mrf.mxu0
        %v4952 = vpop.f32.mrf.mxu0
        %4953 = vdwg.mxu0
        %v4954 = vadd.f32 %v4802, %v4949
        %s4955 = scalar_lea.vmem %s551, 6
        %v4956 = vld [vmem:[%s4955] sm:$0x1]
        %v4958 = vsel %vm4044, %v4956, 0
        %4960 = vmatprep.subr.bf16.mxu0 0
        %4961 = vmatpush1.bf16.msra.mxu0 0
        %4962 = vmatprep.subr.bf16.mxu0 0
        %4963 = vmatpush1.bf16.msra.mxu0 0
        %4964 = vmatprep.subr.bf16.mxu0 0
        %4965 = vmatpush1.bf16.msra.mxu0 0
        %4966 = vmatprep.subr.bf16.mxu0 0
        %4967 = vmatpush1.bf16.msra.mxu0 0
        %4968 = vmatprep.subr.bf16.mxu0 0
        %4969 = vmatpush1.bf16.msra.mxu0 0
        %4970 = vmatprep.subr.bf16.mxu0 0
        %4971 = vmatpush1.bf16.msra.mxu0 0
        %4972 = vmatprep.subr.bf16.mxu0 0
        %4973 = vmatpush1.bf16.msra.mxu0 %v4049
        %4974 = vmatprep.subr.bf16.mxu0 0
        %4975 = vmatpush1.bf16.msra.mxu0 %v4041
        %4976 = vmatprep.subr.bf16.mxu0 0
        %4977 = vmatpush2.bf16.msra.mxu0 0
        %4978 = vmatprep.subr.bf16.mxu0 0
        %4979 = vmatpush2.bf16.msra.mxu0 0
        %4980 = vmatprep.subr.bf16.mxu0 0
        %4981 = vmatpush2.bf16.msra.mxu0 0
        %4982 = vmatprep.subr.bf16.mxu0 0
        %4983 = vmatpush2.bf16.msra.mxu0 0
        %4984 = vmatprep.subr.bf16.mxu0 0
        %4985 = vmatpush2.bf16.msra.mxu0 0
        %4986 = vmatprep.subr.bf16.mxu0 0
        %4987 = vmatpush2.bf16.msra.mxu0 0
        %4988 = vmatprep.subr.bf16.mxu0 0
        %4989 = vmatpush2.bf16.msra.mxu0 0
        %4990 = vmatprep.subr.bf16.mxu0 0
        %4991 = vmatpush2.bf16.msra.mxu0 0
        %4992 = vmatprep.mubr.bf16.mxu0 0
        %4993 = vmatmul.mubr.bf16.gmra.mxu0 %v4958
        %v4994 = vpop.f32.mrf.mxu0
        %v4995 = vadd.f32 0.0, %v4994
        %v4996 = vpop.f32.mrf.mxu0
        %v4997 = vpop.f32.mrf.mxu0
        %v4998 = vpop.f32.mrf.mxu0
        %4999 = vdwg.mxu0
        %v5000 = vpack.c.bf16 %v4995, %v4995
        %s5001 = scalar_lea.vmem %s544, 384
        %v5002 = vld [vmem:[%s5001] sm:$0xf]
        %v5003 = vld [vmem:[%s5001 + $0x4] sm:$0xf]
        %v5004 = vld [vmem:[%s5001 + $0x8] sm:$0xf]
        %v5005 = vld [vmem:[%s5001 + $0xc] sm:$0xf]
        %v5006 = vld [vmem:[%s5001 + $0x10] sm:$0xf]
        %v5007 = vld [vmem:[%s5001 + $0x14] sm:$0xf]
        %v5008 = vld [vmem:[%s5001 + $0x18] sm:$0xf]
        %v5009 = vld [vmem:[%s5001 + $0x1c] sm:$0xf]
        %v5010 = vld [vmem:[%s5001 + $0x20] sm:$0xf]
        %v5011 = vld [vmem:[%s5001 + $0x24] sm:$0xf]
        %v5012 = vld [vmem:[%s5001 + $0x28] sm:$0xf]
        %v5013 = vld [vmem:[%s5001 + $0x2c] sm:$0xf]
        %v5014 = vld [vmem:[%s5001 + $0x30] sm:$0xf]
        %v5015 = vld [vmem:[%s5001 + $0x34] sm:$0xf]
        %v5016 = vld [vmem:[%s5001 + $0x38] sm:$0xf]
        %v5017 = vld [vmem:[%s5001 + $0x3c] sm:$0xf]
        %v5034 = vunpack.c.l.b16 %v5002
        %v5035 = vunpack.c.l.b16 %v5003
        %v5036 = vunpack.c.l.b16 %v5004
        %v5037 = vunpack.c.l.b16 %v5005
        %v5038 = vunpack.c.l.b16 %v5006
        %v5039 = vunpack.c.l.b16 %v5007
        %v5040 = vunpack.c.l.b16 %v5008
        %v5041 = vunpack.c.l.b16 %v5009
        %v5042 = vunpack.c.l.b16 %v5010
        %v5043 = vunpack.c.l.b16 %v5011
        %v5044 = vunpack.c.l.b16 %v5012
        %v5045 = vunpack.c.l.b16 %v5013
        %v5046 = vunpack.c.l.b16 %v5014
        %v5047 = vunpack.c.l.b16 %v5015
        %v5048 = vunpack.c.l.b16 %v5016
        %v5049 = vunpack.c.l.b16 %v5017
        %v5050 = vpack.c.b16 %v5035, %v5034
        %v5051 = vpack.c.b16 %v5037, %v5036
        %v5052 = vpack.c.b16 %v5039, %v5038
        %v5053 = vpack.c.b16 %v5041, %v5040
        %v5054 = vpack.c.b16 %v5043, %v5042
        %v5055 = vpack.c.b16 %v5045, %v5044
        %v5056 = vpack.c.b16 %v5047, %v5046
        %v5057 = vpack.c.b16 %v5049, %v5048
        %5066 = vmatprep.subr.bf16.mxu0 0
        %5067 = vmatpush1.bf16.msra.mxu0 %v5057
        %5068 = vmatprep.subr.bf16.mxu0 0
        %5069 = vmatpush1.bf16.msra.mxu0 %v5056
        %5070 = vmatprep.subr.bf16.mxu0 0
        %5071 = vmatpush1.bf16.msra.mxu0 %v5055
        %5072 = vmatprep.subr.bf16.mxu0 0
        %5073 = vmatpush1.bf16.msra.mxu0 %v5054
        %5074 = vmatprep.subr.bf16.mxu0 0
        %5075 = vmatpush1.bf16.msra.mxu0 %v5053
        %5076 = vmatprep.subr.bf16.mxu0 0
        %5077 = vmatpush1.bf16.msra.mxu0 %v5052
        %5078 = vmatprep.subr.bf16.mxu0 0
        %5079 = vmatpush1.bf16.msra.mxu0 %v5051
        %5080 = vmatprep.subr.bf16.mxu0 0
        %5081 = vmatpush1.bf16.msra.mxu0 %v5050
        %5082 = vmatprep.subr.bf16.mxu0 0
        %5083 = vmatpush2.bf16.msra.mxu0 0
        %5084 = vmatprep.subr.bf16.mxu0 0
        %5085 = vmatpush2.bf16.msra.mxu0 0
        %5086 = vmatprep.subr.bf16.mxu0 0
        %5087 = vmatpush2.bf16.msra.mxu0 0
        %5088 = vmatprep.subr.bf16.mxu0 0
        %5089 = vmatpush2.bf16.msra.mxu0 0
        %5090 = vmatprep.subr.bf16.mxu0 0
        %5091 = vmatpush2.bf16.msra.mxu0 0
        %5092 = vmatprep.subr.bf16.mxu0 0
        %5093 = vmatpush2.bf16.msra.mxu0 0
        %5094 = vmatprep.subr.bf16.mxu0 0
        %5095 = vmatpush2.bf16.msra.mxu0 0
        %5096 = vmatprep.subr.bf16.mxu0 0
        %5097 = vmatpush2.bf16.msra.mxu0 0
        %5098 = vmatprep.mubr.bf16.mxu0 0
        %5099 = vmatmul.mubr.bf16.gmra.mxu0 %v5000
        %v5100 = vpop.f32.mrf.mxu0
        %v5101 = vadd.f32 0.0, %v5100
        %v5102 = vpop.f32.mrf.mxu0
        %v5103 = vpop.f32.mrf.mxu0
        %v5104 = vpop.f32.mrf.mxu0
        %5105 = vdwg.mxu0
        %v5106 = vadd.f32 %v4954, %v5101
        %s5107 = scalar_lea.vmem %s551, 7
        %v5108 = vld [vmem:[%s5107] sm:$0x1]
        %v5110 = vsel %vm4044, %v5108, 0
        %5112 = vmatprep.subr.bf16.mxu0 0
        %5113 = vmatpush1.bf16.msra.mxu0 0
        %5114 = vmatprep.subr.bf16.mxu0 0
        %5115 = vmatpush1.bf16.msra.mxu0 0
        %5116 = vmatprep.subr.bf16.mxu0 0
        %5117 = vmatpush1.bf16.msra.mxu0 0
        %5118 = vmatprep.subr.bf16.mxu0 0
        %5119 = vmatpush1.bf16.msra.mxu0 0
        %5120 = vmatprep.subr.bf16.mxu0 0
        %5121 = vmatpush1.bf16.msra.mxu0 0
        %5122 = vmatprep.subr.bf16.mxu0 0
        %5123 = vmatpush1.bf16.msra.mxu0 0
        %5124 = vmatprep.subr.bf16.mxu0 0
        %5125 = vmatpush1.bf16.msra.mxu0 %v4049
        %5126 = vmatprep.subr.bf16.mxu0 0
        %5127 = vmatpush1.bf16.msra.mxu0 %v4041
        %5128 = vmatprep.subr.bf16.mxu0 0
        %5129 = vmatpush2.bf16.msra.mxu0 0
        %5130 = vmatprep.subr.bf16.mxu0 0
        %5131 = vmatpush2.bf16.msra.mxu0 0
        %5132 = vmatprep.subr.bf16.mxu0 0
        %5133 = vmatpush2.bf16.msra.mxu0 0
        %5134 = vmatprep.subr.bf16.mxu0 0
        %5135 = vmatpush2.bf16.msra.mxu0 0
        %5136 = vmatprep.subr.bf16.mxu0 0
        %5137 = vmatpush2.bf16.msra.mxu0 0
        %5138 = vmatprep.subr.bf16.mxu0 0
        %5139 = vmatpush2.bf16.msra.mxu0 0
        %5140 = vmatprep.subr.bf16.mxu0 0
        %5141 = vmatpush2.bf16.msra.mxu0 0
        %5142 = vmatprep.subr.bf16.mxu0 0
        %5143 = vmatpush2.bf16.msra.mxu0 0
        %5144 = vmatprep.mubr.bf16.mxu0 0
        %5145 = vmatmul.mubr.bf16.gmra.mxu0 %v5110
        %v5146 = vpop.f32.mrf.mxu0
        %v5147 = vadd.f32 0.0, %v5146
        %v5148 = vpop.f32.mrf.mxu0
        %v5149 = vpop.f32.mrf.mxu0
        %v5150 = vpop.f32.mrf.mxu0
        %5151 = vdwg.mxu0
        %v5152 = vpack.c.bf16 %v5147, %v5147
        %s5153 = scalar_lea.vmem %s544, 448
        %v5154 = vld [vmem:[%s5153] sm:$0xf]
        %v5155 = vld [vmem:[%s5153 + $0x4] sm:$0xf]
        %v5156 = vld [vmem:[%s5153 + $0x8] sm:$0xf]
        %v5157 = vld [vmem:[%s5153 + $0xc] sm:$0xf]
        %v5158 = vld [vmem:[%s5153 + $0x10] sm:$0xf]
        %v5159 = vld [vmem:[%s5153 + $0x14] sm:$0xf]
        %v5160 = vld [vmem:[%s5153 + $0x18] sm:$0xf]
        %v5161 = vld [vmem:[%s5153 + $0x1c] sm:$0xf]
        %v5162 = vld [vmem:[%s5153 + $0x20] sm:$0xf]
        %v5163 = vld [vmem:[%s5153 + $0x24] sm:$0xf]
        %v5164 = vld [vmem:[%s5153 + $0x28] sm:$0xf]
        %v5165 = vld [vmem:[%s5153 + $0x2c] sm:$0xf]
        %v5166 = vld [vmem:[%s5153 + $0x30] sm:$0xf]
        %v5167 = vld [vmem:[%s5153 + $0x34] sm:$0xf]
        %v5168 = vld [vmem:[%s5153 + $0x38] sm:$0xf]
        %v5169 = vld [vmem:[%s5153 + $0x3c] sm:$0xf]
        %v5186 = vunpack.c.l.b16 %v5154
        %v5187 = vunpack.c.l.b16 %v5155
        %v5188 = vunpack.c.l.b16 %v5156
        %v5189 = vunpack.c.l.b16 %v5157
        %v5190 = vunpack.c.l.b16 %v5158
        %v5191 = vunpack.c.l.b16 %v5159
        %v5192 = vunpack.c.l.b16 %v5160
        %v5193 = vunpack.c.l.b16 %v5161
        %v5194 = vunpack.c.l.b16 %v5162
        %v5195 = vunpack.c.l.b16 %v5163
        %v5196 = vunpack.c.l.b16 %v5164
        %v5197 = vunpack.c.l.b16 %v5165
        %v5198 = vunpack.c.l.b16 %v5166
        %v5199 = vunpack.c.l.b16 %v5167
        %v5200 = vunpack.c.l.b16 %v5168
        %v5201 = vunpack.c.l.b16 %v5169
        %v5202 = vpack.c.b16 %v5187, %v5186
        %v5203 = vpack.c.b16 %v5189, %v5188
        %v5204 = vpack.c.b16 %v5191, %v5190
        %v5205 = vpack.c.b16 %v5193, %v5192
        %v5206 = vpack.c.b16 %v5195, %v5194
        %v5207 = vpack.c.b16 %v5197, %v5196
        %v5208 = vpack.c.b16 %v5199, %v5198
        %v5209 = vpack.c.b16 %v5201, %v5200
        %5218 = vmatprep.subr.bf16.mxu0 0
        %5219 = vmatpush1.bf16.msra.mxu0 %v5209
        %5220 = vmatprep.subr.bf16.mxu0 0
        %5221 = vmatpush1.bf16.msra.mxu0 %v5208
        %5222 = vmatprep.subr.bf16.mxu0 0
        %5223 = vmatpush1.bf16.msra.mxu0 %v5207
        %5224 = vmatprep.subr.bf16.mxu0 0
        %5225 = vmatpush1.bf16.msra.mxu0 %v5206
        %5226 = vmatprep.subr.bf16.mxu0 0
        %5227 = vmatpush1.bf16.msra.mxu0 %v5205
        %5228 = vmatprep.subr.bf16.mxu0 0
        %5229 = vmatpush1.bf16.msra.mxu0 %v5204
        %5230 = vmatprep.subr.bf16.mxu0 0
        %5231 = vmatpush1.bf16.msra.mxu0 %v5203
        %5232 = vmatprep.subr.bf16.mxu0 0
        %5233 = vmatpush1.bf16.msra.mxu0 %v5202
        %5234 = vmatprep.subr.bf16.mxu0 0
        %5235 = vmatpush2.bf16.msra.mxu0 0
        %5236 = vmatprep.subr.bf16.mxu0 0
        %5237 = vmatpush2.bf16.msra.mxu0 0
        %5238 = vmatprep.subr.bf16.mxu0 0
        %5239 = vmatpush2.bf16.msra.mxu0 0
        %5240 = vmatprep.subr.bf16.mxu0 0
        %5241 = vmatpush2.bf16.msra.mxu0 0
        %5242 = vmatprep.subr.bf16.mxu0 0
        %5243 = vmatpush2.bf16.msra.mxu0 0
        %5244 = vmatprep.subr.bf16.mxu0 0
        %5245 = vmatpush2.bf16.msra.mxu0 0
        %5246 = vmatprep.subr.bf16.mxu0 0
        %5247 = vmatpush2.bf16.msra.mxu0 0
        %5248 = vmatprep.subr.bf16.mxu0 0
        %5249 = vmatpush2.bf16.msra.mxu0 0
        %5250 = vmatprep.mubr.bf16.mxu0 0
        %5251 = vmatmul.mubr.bf16.gmra.mxu0 %v5152
        %v5252 = vpop.f32.mrf.mxu0
        %v5253 = vadd.f32 0.0, %v5252
        %v5254 = vpop.f32.mrf.mxu0
        %v5255 = vpop.f32.mrf.mxu0
        %v5256 = vpop.f32.mrf.mxu0
        %5257 = vdwg.mxu0
        %v5258 = vadd.f32 %v5106, %v5253
        %s5259 = scalar_lea.vmem %s551, 8
        %v5260 = vld [vmem:[%s5259] sm:$0x1]
        %v5262 = vsel %vm4044, %v5260, 0
        %5264 = vmatprep.subr.bf16.mxu0 0
        %5265 = vmatpush1.bf16.msra.mxu0 0
        %5266 = vmatprep.subr.bf16.mxu0 0
        %5267 = vmatpush1.bf16.msra.mxu0 0
        %5268 = vmatprep.subr.bf16.mxu0 0
        %5269 = vmatpush1.bf16.msra.mxu0 0
        %5270 = vmatprep.subr.bf16.mxu0 0
        %5271 = vmatpush1.bf16.msra.mxu0 0
        %5272 = vmatprep.subr.bf16.mxu0 0
        %5273 = vmatpush1.bf16.msra.mxu0 0
        %5274 = vmatprep.subr.bf16.mxu0 0
        %5275 = vmatpush1.bf16.msra.mxu0 0
        %5276 = vmatprep.subr.bf16.mxu0 0
        %5277 = vmatpush1.bf16.msra.mxu0 %v4049
        %5278 = vmatprep.subr.bf16.mxu0 0
        %5279 = vmatpush1.bf16.msra.mxu0 %v4041
        %5280 = vmatprep.subr.bf16.mxu0 0
        %5281 = vmatpush2.bf16.msra.mxu0 0
        %5282 = vmatprep.subr.bf16.mxu0 0
        %5283 = vmatpush2.bf16.msra.mxu0 0
        %5284 = vmatprep.subr.bf16.mxu0 0
        %5285 = vmatpush2.bf16.msra.mxu0 0
        %5286 = vmatprep.subr.bf16.mxu0 0
        %5287 = vmatpush2.bf16.msra.mxu0 0
        %5288 = vmatprep.subr.bf16.mxu0 0
        %5289 = vmatpush2.bf16.msra.mxu0 0
        %5290 = vmatprep.subr.bf16.mxu0 0
        %5291 = vmatpush2.bf16.msra.mxu0 0
        %5292 = vmatprep.subr.bf16.mxu0 0
        %5293 = vmatpush2.bf16.msra.mxu0 0
        %5294 = vmatprep.subr.bf16.mxu0 0
        %5295 = vmatpush2.bf16.msra.mxu0 0
        %5296 = vmatprep.mubr.bf16.mxu0 0
        %5297 = vmatmul.mubr.bf16.gmra.mxu0 %v5262
        %v5298 = vpop.f32.mrf.mxu0
        %v5299 = vadd.f32 0.0, %v5298
        %v5300 = vpop.f32.mrf.mxu0
        %v5301 = vpop.f32.mrf.mxu0
        %v5302 = vpop.f32.mrf.mxu0
        %5303 = vdwg.mxu0
        %v5304 = vpack.c.bf16 %v5299, %v5299
        %s5305 = scalar_lea.vmem %s544, 512
        %v5306 = vld [vmem:[%s5305] sm:$0xf]
        %v5307 = vld [vmem:[%s5305 + $0x4] sm:$0xf]
        %v5308 = vld [vmem:[%s5305 + $0x8] sm:$0xf]
        %v5309 = vld [vmem:[%s5305 + $0xc] sm:$0xf]
        %v5310 = vld [vmem:[%s5305 + $0x10] sm:$0xf]
        %v5311 = vld [vmem:[%s5305 + $0x14] sm:$0xf]
        %v5312 = vld [vmem:[%s5305 + $0x18] sm:$0xf]
        %v5313 = vld [vmem:[%s5305 + $0x1c] sm:$0xf]
        %v5314 = vld [vmem:[%s5305 + $0x20] sm:$0xf]
        %v5315 = vld [vmem:[%s5305 + $0x24] sm:$0xf]
        %v5316 = vld [vmem:[%s5305 + $0x28] sm:$0xf]
        %v5317 = vld [vmem:[%s5305 + $0x2c] sm:$0xf]
        %v5318 = vld [vmem:[%s5305 + $0x30] sm:$0xf]
        %v5319 = vld [vmem:[%s5305 + $0x34] sm:$0xf]
        %v5320 = vld [vmem:[%s5305 + $0x38] sm:$0xf]
        %v5321 = vld [vmem:[%s5305 + $0x3c] sm:$0xf]
        %v5338 = vunpack.c.l.b16 %v5306
        %v5339 = vunpack.c.l.b16 %v5307
        %v5340 = vunpack.c.l.b16 %v5308
        %v5341 = vunpack.c.l.b16 %v5309
        %v5342 = vunpack.c.l.b16 %v5310
        %v5343 = vunpack.c.l.b16 %v5311
        %v5344 = vunpack.c.l.b16 %v5312
        %v5345 = vunpack.c.l.b16 %v5313
        %v5346 = vunpack.c.l.b16 %v5314
        %v5347 = vunpack.c.l.b16 %v5315
        %v5348 = vunpack.c.l.b16 %v5316
        %v5349 = vunpack.c.l.b16 %v5317
        %v5350 = vunpack.c.l.b16 %v5318
        %v5351 = vunpack.c.l.b16 %v5319
        %v5352 = vunpack.c.l.b16 %v5320
        %v5353 = vunpack.c.l.b16 %v5321
        %v5354 = vpack.c.b16 %v5339, %v5338
        %v5355 = vpack.c.b16 %v5341, %v5340
        %v5356 = vpack.c.b16 %v5343, %v5342
        %v5357 = vpack.c.b16 %v5345, %v5344
        %v5358 = vpack.c.b16 %v5347, %v5346
        %v5359 = vpack.c.b16 %v5349, %v5348
        %v5360 = vpack.c.b16 %v5351, %v5350
        %v5361 = vpack.c.b16 %v5353, %v5352
        %5370 = vmatprep.subr.bf16.mxu0 0
        %5371 = vmatpush1.bf16.msra.mxu0 %v5361
        %5372 = vmatprep.subr.bf16.mxu0 0
        %5373 = vmatpush1.bf16.msra.mxu0 %v5360
        %5374 = vmatprep.subr.bf16.mxu0 0
        %5375 = vmatpush1.bf16.msra.mxu0 %v5359
        %5376 = vmatprep.subr.bf16.mxu0 0
        %5377 = vmatpush1.bf16.msra.mxu0 %v5358
        %5378 = vmatprep.subr.bf16.mxu0 0
        %5379 = vmatpush1.bf16.msra.mxu0 %v5357
        %5380 = vmatprep.subr.bf16.mxu0 0
        %5381 = vmatpush1.bf16.msra.mxu0 %v5356
        %5382 = vmatprep.subr.bf16.mxu0 0
        %5383 = vmatpush1.bf16.msra.mxu0 %v5355
        %5384 = vmatprep.subr.bf16.mxu0 0
        %5385 = vmatpush1.bf16.msra.mxu0 %v5354
        %5386 = vmatprep.subr.bf16.mxu0 0
        %5387 = vmatpush2.bf16.msra.mxu0 0
        %5388 = vmatprep.subr.bf16.mxu0 0
        %5389 = vmatpush2.bf16.msra.mxu0 0
        %5390 = vmatprep.subr.bf16.mxu0 0
        %5391 = vmatpush2.bf16.msra.mxu0 0
        %5392 = vmatprep.subr.bf16.mxu0 0
        %5393 = vmatpush2.bf16.msra.mxu0 0
        %5394 = vmatprep.subr.bf16.mxu0 0
        %5395 = vmatpush2.bf16.msra.mxu0 0
        %5396 = vmatprep.subr.bf16.mxu0 0
        %5397 = vmatpush2.bf16.msra.mxu0 0
        %5398 = vmatprep.subr.bf16.mxu0 0
        %5399 = vmatpush2.bf16.msra.mxu0 0
        %5400 = vmatprep.subr.bf16.mxu0 0
        %5401 = vmatpush2.bf16.msra.mxu0 0
        %5402 = vmatprep.mubr.bf16.mxu0 0
        %5403 = vmatmul.mubr.bf16.gmra.mxu0 %v5304
        %v5404 = vpop.f32.mrf.mxu0
        %v5405 = vadd.f32 0.0, %v5404
        %v5406 = vpop.f32.mrf.mxu0
        %v5407 = vpop.f32.mrf.mxu0
        %v5408 = vpop.f32.mrf.mxu0
        %5409 = vdwg.mxu0
        %v5410 = vadd.f32 %v5258, %v5405
        %v5411 = vld [vmem:[%s547] sm:$0x1]
        %v5413 = vlaneseq
        %v5414 = vshrl.u32 %v5413, 7
        %v5415 = vsub.s32 0, %v5414
        %v5416 = vrot.slane %v5411, %v5415
        %v5418 = vadd.f32 %v5410, %v5416
        %v5419 = vmul.f32 %v5418, %v5418
        %v5420 = vsel %vm3323, %v5419, 0.0
        %5421 = vadd.xlane.f32.xlu0 %v5420
        %v5422 = vpop.xlane.xlu0 %5421
        %v5423 = vrsqrt.pop %v5422
        %v5424 = vmul.f32 %v5418, %v5423
        %5425 = vst [vmem:[%s509] sm:$0x3] %v5424
        %s5426 = sand.u32 %s297, 1
        %s5427 = scalar_lea.sflag [#allocation3], %s5426
        %s5428 = sand.u32 %s297, 1
        %s5429 = smul.addr %s5428, 2
        %s5430 = scalar_lea.vmem [#allocation2], %s5429
        %s5431 = sand.u32 %s323, 1
        %s5432 = scalar_lea.sflag [#allocation5], %s5431
        %s5433 = sand.u32 %s323, 1
        %s5434 = smul.addr %s5433, 2
        %s5435 = scalar_lea.vmem [#allocation4], %s5434
        // Predicated region
        $region61: #{cmc_multiheads_forward.1} parent=59 // pred_check
          %p5436 = pneg %p307
        $region62: #{cmc_multiheads_forward.1} parent=59 // pred_check_branch
          %5438 = sbr.rel (%p5436) target = $region64
        $region63: #{cmc_multiheads_forward.1} parent=59 // pred_region
          %s5440 = ssub.s32 32, 32
          %5441 = vsyncadd %s5427, %s5440
          %s5442 = smul.addr %s29, 32
          %s5443 = scalar_lea.hbm %s10, %s5442
          %s5445 = sshll.u32 %s5430, 4
          %s5446 = int_to_ptr.vmem [resolvable:$true] %s5445
          %5448 = dma.vmem_to_hbm [thread:$0]  %s5446, 32, %s5443, %s5427
        $region64: #{cmc_multiheads_forward.1} parent=59 // pred_fallthru
          _
        // Predicated region
        $region65: #{cmc_multiheads_forward.1} parent=59 // pred_check
          %p5449 = pneg %p333
        $region66: #{cmc_multiheads_forward.1} parent=59 // pred_check_branch
          %5451 = sbr.rel (%p5449) target = $region68
        $region67: #{cmc_multiheads_forward.1} parent=59 // pred_region
          %s5453 = ssub.s32 32, 32
          %5454 = vsyncadd %s5432, %s5453
          %s5455 = smul.addr %s29, 32
          %s5456 = scalar_lea.hbm %s11, %s5455
          %s5458 = sshll.u32 %s5435, 4
          %s5459 = int_to_ptr.vmem [resolvable:$true] %s5458
          %5461 = dma.vmem_to_hbm [thread:$0]  %s5459, 32, %s5456, %s5432
        $region68: #{cmc_multiheads_forward.1} parent=59 // pred_fallthru
          _
      $region60: #{cmc_multiheads_forward.1} parent=5 // pred_fallthru
        _
      %p5462 = scmp.le.s32.totalorder 2, %s24
      // Predicated region
      $region69: #{cmc_multiheads_forward.1} parent=5 // pred_check
        %p5463 = pneg %p5462
      $region70: #{cmc_multiheads_forward.1} parent=5 // pred_check_branch
        %5465 = sbr.rel (%p5463) target = $region72
      $region71: #{cmc_multiheads_forward.1} parent=5 // pred_region
        %s5466 = ssub.s32 %s24, 2
        // Predicated region
        $region73: #{cmc_multiheads_forward.1} parent=71 // pred_check
          %p5467 = pneg %p313
        $region74: #{cmc_multiheads_forward.1} parent=71 // pred_check_branch
          %5469 = sbr.rel (%p5467) target = $region76
        $region75: #{cmc_multiheads_forward.1} parent=71 // pred_region
          %s5470 = sand.u32 %s298, 1
          %s5471 = scalar_lea.sflag [#allocation3], %s5470
          %s5472 = sand.u32 %s298, 1
          %s5473 = smul.addr %s5472, 2
          %s5474 = scalar_lea.vmem [#allocation2], %s5473
          %5475 = dma.done %s5471, 32
        $region76: #{cmc_multiheads_forward.1} parent=71 // pred_fallthru
          _
        // Predicated region
        $region77: #{cmc_multiheads_forward.1} parent=71 // pred_check
          %p5476 = pneg %p339
        $region78: #{cmc_multiheads_forward.1} parent=71 // pred_check_branch
          %5478 = sbr.rel (%p5476) target = $region80
        $region79: #{cmc_multiheads_forward.1} parent=71 // pred_region
          %s5479 = sand.u32 %s324, 1
          %s5480 = scalar_lea.sflag [#allocation5], %s5479
          %s5481 = sand.u32 %s324, 1
          %s5482 = smul.addr %s5481, 2
          %s5483 = scalar_lea.vmem [#allocation4], %s5482
          %5484 = dma.done %s5480, 32
        $region80: #{cmc_multiheads_forward.1} parent=71 // pred_fallthru
          _
      $region72: #{cmc_multiheads_forward.1} parent=5 // pred_fallthru
        _
    $region6: #{cmc_multiheads_forward.1} parent=1 // loop_footer
      %s28 = sadd.s32 1, %s24
    $region7: #{cmc_multiheads_forward.1} parent=1 // loop_footer_branch
      %23 = sbr.rel target = $region3
    $region8: #{cmc_multiheads_forward.1} parent=1 // loop_exit
      _
    %5485 = vsyncpa [#allocation3], 1
    %s5486 = scalar_lea.sflag [#allocation3], 1
    %5487 = vsyncpa %s5486, 1
    %5488 = vsyncpa [#allocation5], 1
    %s5489 = scalar_lea.sflag [#allocation5], 1
    %5490 = vsyncpa %s5489, 1

</llo_original>
